<compile_context>
chip_gen: v5e
topology: v5e:2x2
jax: 0.10.0
libtpu: 0.0.40
codegen_flags: <defaults>
</compile_context>

<pallas_src>
import math
import functools

import jax
import jax.numpy as jnp
from jax import lax
from jax.experimental import pallas as pl
from jax.experimental.pallas import tpu as pltpu

# ---- scaled-down ModelArgs (same structure as the PyTorch dataclass) ----
DIM = 256
FFN_DIM = DIM * 4
NUM_HEADS = 8
NUM_KV_HEADS = NUM_HEADS // 2            # 4
N_REP = NUM_HEADS // NUM_KV_HEADS        # 2
HEAD_DIM = DIM // NUM_HEADS              # 32
NORM_EPS = 1e-5
ROPE_THETA = 10000.0

DQ = NUM_HEADS * HEAD_DIM                # 256
DK = NUM_KV_HEADS * HEAD_DIM             # 128


def _transformer_block_kernel(
    x_ref, cos_ref, sin_ref,
    wqkv_ref, wo_ref, w13_ref, w2_ref,
    o_ref,
    *, H, KVH, hd, n_rep, F, eps):
  dq = H * hd
  dk = KVH * hd
  Lb = x_ref.shape[0]                                  # rows in this grid step (one batch)
  x = x_ref[...]                                       # (L, D) f32

  def rmsnorm(v):                                      # scale vectors folded into weights
    return v * lax.rsqrt(jnp.mean(v * v, axis=-1, keepdims=True) + eps)

  # ---- attention branch ----
  xn = rmsnorm(x).astype(jnp.bfloat16)
  # fused projection columns: [ Q*scale | K | V | (Q*scale)@swap | K@swap ]  -> (L, 2*dq + 3*dk)
  # (1/sqrt(hd) is folded into the Q columns; no per-head score scaling below.)
  qkv = jnp.dot(xn, wqkv_ref[...], preferred_element_type=jnp.float32)
  q = qkv[:, :dq]
  k = qkv[:, dq:dq + dk]
  v = qkv[:, dq + dk:dq + 2 * dk]
  qs = qkv[:, dq + 2 * dk:2 * dq + 2 * dk]             # q with (even<->odd) pairs swapped
  ks = qkv[:, 2 * dq + 2 * dk:]                        # k with (even<->odd) pairs swapped

  # thin RoPE tables (L, hd): cos = (c,c,...), sin = (-s,+s,...) interleaved
  cos = cos_ref[...]
  sin = sin_ref[...]

  # pack head-batched operands (H, L, hd); RoPE applied per head with the thin tables.
  q3 = jnp.stack([q[:, h * hd:(h + 1) * hd] * cos + qs[:, h * hd:(h + 1) * hd] * sin
                  for h in range(H)])                  # (H, L, hd)
  k3 = jnp.stack([k[:, g * hd:(g + 1) * hd] * cos + ks[:, g * hd:(g + 1) * hd] * sin
                  for g in range(KVH)])                # (KVH, L, hd)
  v3 = jnp.stack([v[:, g * hd:(g + 1) * hd] for g in range(KVH)])     # (KVH, L, hd)
  # GQA: share each kv head across n_rep query heads (leading-dim broadcast, no HBM copy).
  k3 = jnp.broadcast_to(k3[:, None], (KVH, n_rep, Lb, hd)).reshape(H, Lb, hd)
  v3 = jnp.broadcast_to(v3[:, None], (KVH, n_rep, Lb, hd)).reshape(H, Lb, hd)
  q3 = q3.astype(jnp.bfloat16)
  k3 = k3.astype(jnp.bfloat16)
  v3 = v3.astype(jnp.bfloat16)

  # causal mask generated in-kernel (no O(M^2) HBM traffic); attention is per-batch so
  # no cross-batch masking is needed.
  # TODO(synk): arbitrary user attn_mask / start_pos>0 (KV-cache decode) not threaded through.
  row = lax.broadcasted_iota(jnp.int32, (Lb, Lb), 0)
  col = lax.broadcasted_iota(jnp.int32, (Lb, Lb), 1)
  bias = jnp.where(col <= row, 0.0, -1e9).astype(jnp.float32)          # (L, L)

  # batched scores over all heads (scale already folded into wq)
  s = jnp.einsum('hmd,hnd->hmn', q3, k3,
                 preferred_element_type=jnp.float32) + bias[None]      # (H, L, L)
  s = s - jnp.max(s, axis=-1, keepdims=True)
  p = jnp.exp(s)
  p = p * pl.reciprocal(jnp.sum(p, axis=-1, keepdims=True), approx=True)
  o3 = jnp.einsum('hmn,hnd->hmd', p.astype(jnp.bfloat16), v3,
                  preferred_element_type=jnp.float32)                  # (H, L, hd)

  # re-pack lane-dense (L, dq) for the single wo matmul (register-level concat; no scratch)
  attn_in = jnp.concatenate([o3[h] for h in range(H)], axis=-1).astype(jnp.bfloat16)
  attn = jnp.dot(attn_in, wo_ref[...], preferred_element_type=jnp.float32)

  # TODO(synk): dropout (attn/res/ffn) and KV-cache write omitted — eval-mode, stateless fwd.
  h_res = x + attn

  # ---- feed-forward branch (SwiGLU), fused w1|w3 ----
  hn = rmsnorm(h_res).astype(jnp.bfloat16)
  ab = jnp.dot(hn, w13_ref[...], preferred_element_type=jnp.float32)   # (L, 2F)
  a = ab[:, :F]
  b = ab[:, F:]
  g = a * jax.nn.sigmoid(a)                             # silu(w1 x)
  f = jnp.dot((g * b).astype(jnp.bfloat16), w2_ref[...],
              preferred_element_type=jnp.float32)

  o_ref[...] = (h_res + f).astype(o_ref.dtype)


def transformer_block(x, cos, sin, params):
  """x: (B, L, D) f32; cos/sin: (L, hd//2) RoPE halves; params: f32 dict.

  Causal masking (prefill, start_pos=0) is generated inside the kernel.
  """
  B, L, D = x.shape
  H, KVH, hd, n_rep, F = NUM_HEADS, NUM_KV_HEADS, HEAD_DIM, N_REP, FFN_DIM

  # ---- host-side weight preparation (done once offline in a real deployment) ----
  anorm = params['anorm'].reshape(D, 1)
  fnorm = params['fnorm'].reshape(D, 1)
  scale = 1.0 / math.sqrt(hd)
  wq = (anorm * params['wq']) * scale           # fold RMSNorm scale AND 1/sqrt(hd) into wq
  wk = anorm * params['wk']
  wv = anorm * params['wv']
  perm_q = jnp.arange(DQ) ^ 1                   # pairwise even<->odd column swap
  perm_k = jnp.arange(DK) ^ 1
  wqkv = jnp.concatenate(
      [wq, wk, wv, wq[:, perm_q], wk[:, perm_k]], axis=1).astype(jnp.bfloat16)
  w13 = jnp.concatenate(
      [fnorm * params['w1'], fnorm * params['w3']], axis=1).astype(jnp.bfloat16)
  wo = params['wo'].astype(jnp.bfloat16)
  w2 = params['w2'].astype(jnp.bfloat16)

  # thin (L, hd) interleaved RoPE tables (broadcast across heads inside the kernel)
  cos_i = jnp.stack([cos, cos], -1).reshape(L, hd).astype(jnp.float32)
  sin_i = jnp.stack([-sin, sin], -1).reshape(L, hd).astype(jnp.float32)

  x_flat = x.reshape(B * L, D)

  kernel = functools.partial(_transformer_block_kernel,
                             H=H, KVH=KVH, hd=hd, n_rep=n_rep, F=F, eps=NORM_EPS)

  def resident(arr):   # whole array, constant index_map -> stays VMEM-resident across steps
    return pl.BlockSpec(arr.shape, lambda b: (0,) * arr.ndim)

  out = pl.pallas_call(
      kernel,
      out_shape=jax.ShapeDtypeStruct((B * L, D), x.dtype),
      grid=(B,),                                 # one batch per step; independent -> parallel
      in_specs=[pl.BlockSpec((L, D), lambda b: (b, 0)),     # x rows for this batch
                resident(cos_i), resident(sin_i),
                resident(wqkv), resident(wo), resident(w13), resident(w2)],
      out_specs=pl.BlockSpec((L, D), lambda b: (b, 0)),     # lane-dense (last dim = 256)
      compiler_params=pltpu.CompilerParams(
          # parallel batch axis: megacore sharding on v7x, pipelined loop on v5e/v6e.
          dimension_semantics=("parallel",),
          # 48 MiB: below v7x's 64 MiB physical VMEM, well below v5e/v6e's 128 MiB,
          # and roomy enough that tile growth is not artificially capped.
          vmem_limit_bytes=48 << 20),
  )(x_flat, cos_i, sin_i, wqkv, wo, w13, w2)
  return out.reshape(B, L, D)


def _reference(x, mask, cos, sin, params):
  """Pure-JAX f32 reference mirroring the PyTorch forward (eval mode)."""
  eps = NORM_EPS
  H, KVH, hd, n_rep = NUM_HEADS, NUM_KV_HEADS, HEAD_DIM, N_REP

  def rms(v, w):
    return v * lax.rsqrt(jnp.mean(v * v, -1, keepdims=True) + eps) * w

  B, L, D = x.shape
  xn = rms(x, params['anorm'])
  q = (xn @ params['wq']).reshape(B, L, H, hd)
  k = (xn @ params['wk']).reshape(B, L, KVH, hd)
  v = (xn @ params['wv']).reshape(B, L, KVH, hd)

  def rope(t):
    tr = t.reshape(*t.shape[:-1], hd // 2, 2)
    a, b = tr[..., 0], tr[..., 1]
    c = cos[None, :, None, :]
    s = sin[None, :, None, :]
    return jnp.stack([a * c - b * s, a * s + b * c], -1).reshape(t.shape)

  q, k = rope(q), rope(k)
  k = jnp.repeat(k, n_rep, axis=2)
  v = jnp.repeat(v, n_rep, axis=2)
  q, k, v = (t.transpose(0, 2, 1, 3) for t in (q, k, v))
  s = jnp.einsum('bhqd,bhkd->bhqk', q, k) / math.sqrt(hd) + mask
  p = jax.nn.softmax(s, -1)
  o = jnp.einsum('bhqk,bhkd->bhqd', p, v).transpose(0, 2, 1, 3).reshape(B, L, H * hd)
  h = x + o @ params['wo']
  hn = rms(h, params['fnorm'])
  f = (jax.nn.silu(hn @ params['w1']) * (hn @ params['w3'])) @ params['w2']
  return h + f


if __name__ == "__main__":
  key = jax.random.PRNGKey(0)
  B, L = 2, 16
  start_pos = 0

  ks = jax.random.split(key, 10)

  def init(k, shape, fan_in):
    return jax.random.normal(k, shape, jnp.float32) * (1.0 / math.sqrt(fan_in))

  params = {
      'wq': init(ks[0], (DIM, NUM_HEADS * HEAD_DIM), DIM),
      'wk': init(ks[1], (DIM, NUM_KV_HEADS * HEAD_DIM), DIM),
      'wv': init(ks[2], (DIM, NUM_KV_HEADS * HEAD_DIM), DIM),
      'wo': init(ks[3], (NUM_HEADS * HEAD_DIM, DIM), DIM),
      'w1': init(ks[4], (DIM, FFN_DIM), DIM),
      'w2': init(ks[5], (FFN_DIM, DIM), FFN_DIM),
      'w3': init(ks[6], (DIM, FFN_DIM), DIM),
      # non-trivial RMSNorm scales so the weight-folding path is actually exercised
      'anorm': 1.0 + 0.1 * jax.random.normal(ks[8], (1, DIM), jnp.float32),
      'fnorm': 1.0 + 0.1 * jax.random.normal(ks[9], (1, DIM), jnp.float32),
  }
  x = jax.random.normal(ks[7], (B, L, DIM), jnp.float32)

  # freqs_cis (cos/sin halves) for positions [start_pos, start_pos + L)
  inv = 1.0 / (ROPE_THETA ** (jnp.arange(0, HEAD_DIM, 2, dtype=jnp.float32) / HEAD_DIM))
  t = jnp.arange(start_pos, start_pos + L, dtype=jnp.float32)
  ang = jnp.outer(t, inv)                            # (L, hd//2)
  cos, sin = jnp.cos(ang), jnp.sin(ang)

  out = transformer_block(x, cos, sin, params)
  out = jax.block_until_ready(out)

  # additive float causal mask for the reference (kernel generates the same mask in-kernel)
  mask_ll = jnp.where(jnp.tril(jnp.ones((L, L), dtype=bool)), 0.0, -1e9).astype(jnp.float32)
  ref = _reference(x, mask_ll, cos, sin, params)
  # bf16 weights/operands (f32 accumulation) + approximate reciprocal vs pure-f32 reference.
  assert jnp.allclose(out, ref, atol=5e-2, rtol=5e-2), float(jnp.max(jnp.abs(out - ref)))
  print("KERNEL_OK")
</pallas_src>

<mosaic_0001>
module attributes {stable_mosaic.version = 11 : i64} {
  func.func @_transformer_block_kernel(%arg0: i32, %arg1: memref<16x256xf32, #tpu.memory_space<vmem>>, %arg2: memref<16x32xf32, #tpu.memory_space<vmem>>, %arg3: memref<16x32xf32, #tpu.memory_space<vmem>>, %arg4: memref<256x896xbf16, #tpu.memory_space<vmem>>, %arg5: memref<256x256xbf16, #tpu.memory_space<vmem>>, %arg6: memref<256x2048xbf16, #tpu.memory_space<vmem>>, %arg7: memref<1024x256xbf16, #tpu.memory_space<vmem>>, %arg8: memref<16x256xf32, #tpu.memory_space<vmem>>) attributes {dimension_semantics = [#tpu.dimension_semantics<parallel>], iteration_bounds = array<i64: 2>, scalar_prefetch = 0 : i64, scratch_operands = 0 : i64, tpu.core_type = #tpu.core_type<tc>, window_params = [{transform_indices = @transform_0, window_bounds = array<i64: 16, 256>}, {pipeline_mode = #tpu.pipeline_mode<synchronous>, transform_indices = @transform_1, window_bounds = array<i64: 16, 32>}, {pipeline_mode = #tpu.pipeline_mode<synchronous>, transform_indices = @transform_2, window_bounds = array<i64: 16, 32>}, {pipeline_mode = #tpu.pipeline_mode<synchronous>, transform_indices = @transform_3, window_bounds = array<i64: 256, 896>}, {pipeline_mode = #tpu.pipeline_mode<synchronous>, transform_indices = @transform_4, window_bounds = array<i64: 256, 256>}, {pipeline_mode = #tpu.pipeline_mode<synchronous>, transform_indices = @transform_5, window_bounds = array<i64: 256, 2048>}, {pipeline_mode = #tpu.pipeline_mode<synchronous>, transform_indices = @transform_6, window_bounds = array<i64: 1024, 256>}, {transform_indices = @transform_7, window_bounds = array<i64: 16, 256>}]} {
    %c0 = arith.constant 0 : index
    %c0_0 = arith.constant 0 : index
    %0 = vector.load %arg1[%c0, %c0_0] : memref<16x256xf32, #tpu.memory_space<vmem>>, vector<16x256xf32>
    %1 = arith.mulf %0, %0 : vector<16x256xf32>
    %cst = arith.constant dense<0.000000e+00> : vector<16xf32>
    %2 = vector.multi_reduction <add>, %1, %cst [1] : vector<16x256xf32> to vector<16xf32>
    %3 = vector.shape_cast %2 : vector<16xf32> to vector<16x1xf32>
    %cst_1 = arith.constant 2.560000e+02 : f32
    %4 = vector.broadcast %cst_1 : f32 to vector<16x1xf32>
    %5 = arith.divf %3, %4 : vector<16x1xf32>
    %cst_2 = arith.constant 9.99999974E-6 : f32
    %6 = vector.broadcast %cst_2 : f32 to vector<16x1xf32>
    %7 = arith.addf %5, %6 : vector<16x1xf32>
    %8 = math.rsqrt %7 : vector<16x1xf32>
    %9 = vector.broadcast %8 : vector<16x1xf32> to vector<16x256xf32>
    %10 = arith.mulf %0, %9 : vector<16x256xf32>
    %11 = arith.truncf %10 : vector<16x256xf32> to vector<16x256xbf16>
    %c0_3 = arith.constant 0 : index
    %c0_4 = arith.constant 0 : index
    %12 = vector.load %arg4[%c0_3, %c0_4] : memref<256x896xbf16, #tpu.memory_space<vmem>>, vector<256x896xbf16>
    %cst_5 = arith.constant dense<0.000000e+00> : vector<16x896xf32>
    %13 = tpu.matmul %11, %12, %cst_5 {dimension_numbers = #tpu.dot_dimension_numbers<[1], [0], [0], [1], [0, 0, 1, 1], [], []>} : vector<16x256xbf16>, vector<256x896xbf16>, vector<16x896xf32> -> vector<16x896xf32>
    %14 = vector.extract_strided_slice %13 {offsets = [0, 0], sizes = [16, 256], strides = [1, 1]} : vector<16x896xf32> to vector<16x256xf32>
    %15 = vector.extract_strided_slice %13 {offsets = [0, 256], sizes = [16, 128], strides = [1, 1]} : vector<16x896xf32> to vector<16x128xf32>
    %16 = vector.extract_strided_slice %13 {offsets = [0, 384], sizes = [16, 128], strides = [1, 1]} : vector<16x896xf32> to vector<16x128xf32>
    %17 = vector.extract_strided_slice %13 {offsets = [0, 512], sizes = [16, 256], strides = [1, 1]} : vector<16x896xf32> to vector<16x256xf32>
    %18 = vector.extract_strided_slice %13 {offsets = [0, 768], sizes = [16, 128], strides = [1, 1]} : vector<16x896xf32> to vector<16x128xf32>
    %c0_6 = arith.constant 0 : index
    %c0_7 = arith.constant 0 : index
    %19 = vector.load %arg2[%c0_6, %c0_7] : memref<16x32xf32, #tpu.memory_space<vmem>>, vector<16x32xf32>
    %c0_8 = arith.constant 0 : index
    %c0_9 = arith.constant 0 : index
    %20 = vector.load %arg3[%c0_8, %c0_9] : memref<16x32xf32, #tpu.memory_space<vmem>>, vector<16x32xf32>
    %21 = vector.extract_strided_slice %14 {offsets = [0, 0], sizes = [16, 32], strides = [1, 1]} : vector<16x256xf32> to vector<16x32xf32>
    %22 = arith.mulf %21, %19 : vector<16x32xf32>
    %23 = vector.extract_strided_slice %17 {offsets = [0, 0], sizes = [16, 32], strides = [1, 1]} : vector<16x256xf32> to vector<16x32xf32>
    %24 = arith.mulf %23, %20 : vector<16x32xf32>
    %25 = arith.addf %22, %24 : vector<16x32xf32>
    %26 = vector.extract_strided_slice %14 {offsets = [0, 32], sizes = [16, 32], strides = [1, 1]} : vector<16x256xf32> to vector<16x32xf32>
    %27 = arith.mulf %26, %19 : vector<16x32xf32>
    %28 = vector.extract_strided_slice %17 {offsets = [0, 32], sizes = [16, 32], strides = [1, 1]} : vector<16x256xf32> to vector<16x32xf32>
    %29 = arith.mulf %28, %20 : vector<16x32xf32>
    %30 = arith.addf %27, %29 : vector<16x32xf32>
    %31 = vector.extract_strided_slice %14 {offsets = [0, 64], sizes = [16, 32], strides = [1, 1]} : vector<16x256xf32> to vector<16x32xf32>
    %32 = arith.mulf %31, %19 : vector<16x32xf32>
    %33 = vector.extract_strided_slice %17 {offsets = [0, 64], sizes = [16, 32], strides = [1, 1]} : vector<16x256xf32> to vector<16x32xf32>
    %34 = arith.mulf %33, %20 : vector<16x32xf32>
    %35 = arith.addf %32, %34 : vector<16x32xf32>
    %36 = vector.extract_strided_slice %14 {offsets = [0, 96], sizes = [16, 32], strides = [1, 1]} : vector<16x256xf32> to vector<16x32xf32>
    %37 = arith.mulf %36, %19 : vector<16x32xf32>
    %38 = vector.extract_strided_slice %17 {offsets = [0, 96], sizes = [16, 32], strides = [1, 1]} : vector<16x256xf32> to vector<16x32xf32>
    %39 = arith.mulf %38, %20 : vector<16x32xf32>
    %40 = arith.addf %37, %39 : vector<16x32xf32>
    %41 = vector.extract_strided_slice %14 {offsets = [0, 128], sizes = [16, 32], strides = [1, 1]} : vector<16x256xf32> to vector<16x32xf32>
    %42 = arith.mulf %41, %19 : vector<16x32xf32>
    %43 = vector.extract_strided_slice %17 {offsets = [0, 128], sizes = [16, 32], strides = [1, 1]} : vector<16x256xf32> to vector<16x32xf32>
    %44 = arith.mulf %43, %20 : vector<16x32xf32>
    %45 = arith.addf %42, %44 : vector<16x32xf32>
    %46 = vector.extract_strided_slice %14 {offsets = [0, 160], sizes = [16, 32], strides = [1, 1]} : vector<16x256xf32> to vector<16x32xf32>
    %47 = arith.mulf %46, %19 : vector<16x32xf32>
    %48 = vector.extract_strided_slice %17 {offsets = [0, 160], sizes = [16, 32], strides = [1, 1]} : vector<16x256xf32> to vector<16x32xf32>
    %49 = arith.mulf %48, %20 : vector<16x32xf32>
    %50 = arith.addf %47, %49 : vector<16x32xf32>
    %51 = vector.extract_strided_slice %14 {offsets = [0, 192], sizes = [16, 32], strides = [1, 1]} : vector<16x256xf32> to vector<16x32xf32>
    %52 = arith.mulf %51, %19 : vector<16x32xf32>
    %53 = vector.extract_strided_slice %17 {offsets = [0, 192], sizes = [16, 32], strides = [1, 1]} : vector<16x256xf32> to vector<16x32xf32>
    %54 = arith.mulf %53, %20 : vector<16x32xf32>
    %55 = arith.addf %52, %54 : vector<16x32xf32>
    %56 = vector.extract_strided_slice %14 {offsets = [0, 224], sizes = [16, 32], strides = [1, 1]} : vector<16x256xf32> to vector<16x32xf32>
    %57 = arith.mulf %56, %19 : vector<16x32xf32>
    %58 = vector.extract_strided_slice %17 {offsets = [0, 224], sizes = [16, 32], strides = [1, 1]} : vector<16x256xf32> to vector<16x32xf32>
    %59 = arith.mulf %58, %20 : vector<16x32xf32>
    %60 = arith.addf %57, %59 : vector<16x32xf32>
    %61 = vector.shape_cast %25 : vector<16x32xf32> to vector<1x16x32xf32>
    %62 = vector.shape_cast %30 : vector<16x32xf32> to vector<1x16x32xf32>
    %63 = vector.shape_cast %35 : vector<16x32xf32> to vector<1x16x32xf32>
    %64 = vector.shape_cast %40 : vector<16x32xf32> to vector<1x16x32xf32>
    %65 = vector.shape_cast %45 : vector<16x32xf32> to vector<1x16x32xf32>
    %66 = vector.shape_cast %50 : vector<16x32xf32> to vector<1x16x32xf32>
    %67 = vector.shape_cast %55 : vector<16x32xf32> to vector<1x16x32xf32>
    %68 = vector.shape_cast %60 : vector<16x32xf32> to vector<1x16x32xf32>
    %69 = tpu.concatenate %61, %62, %63, %64, %65, %66, %67, %68 in 0 : vector<1x16x32xf32>, vector<1x16x32xf32>, vector<1x16x32xf32>, vector<1x16x32xf32>, vector<1x16x32xf32>, vector<1x16x32xf32>, vector<1x16x32xf32>, vector<1x16x32xf32> -> vector<8x16x32xf32>
    %70 = vector.extract_strided_slice %15 {offsets = [0, 0], sizes = [16, 32], strides = [1, 1]} : vector<16x128xf32> to vector<16x32xf32>
    %71 = arith.mulf %70, %19 : vector<16x32xf32>
    %72 = vector.extract_strided_slice %18 {offsets = [0, 0], sizes = [16, 32], strides = [1, 1]} : vector<16x128xf32> to vector<16x32xf32>
    %73 = arith.mulf %72, %20 : vector<16x32xf32>
    %74 = arith.addf %71, %73 : vector<16x32xf32>
    %75 = vector.extract_strided_slice %15 {offsets = [0, 32], sizes = [16, 32], strides = [1, 1]} : vector<16x128xf32> to vector<16x32xf32>
    %76 = arith.mulf %75, %19 : vector<16x32xf32>
    %77 = vector.extract_strided_slice %18 {offsets = [0, 32], sizes = [16, 32], strides = [1, 1]} : vector<16x128xf32> to vector<16x32xf32>
    %78 = arith.mulf %77, %20 : vector<16x32xf32>
    %79 = arith.addf %76, %78 : vector<16x32xf32>
    %80 = vector.extract_strided_slice %15 {offsets = [0, 64], sizes = [16, 32], strides = [1, 1]} : vector<16x128xf32> to vector<16x32xf32>
    %81 = arith.mulf %80, %19 : vector<16x32xf32>
    %82 = vector.extract_strided_slice %18 {offsets = [0, 64], sizes = [16, 32], strides = [1, 1]} : vector<16x128xf32> to vector<16x32xf32>
    %83 = arith.mulf %82, %20 : vector<16x32xf32>
    %84 = arith.addf %81, %83 : vector<16x32xf32>
    %85 = vector.extract_strided_slice %15 {offsets = [0, 96], sizes = [16, 32], strides = [1, 1]} : vector<16x128xf32> to vector<16x32xf32>
    %86 = arith.mulf %85, %19 : vector<16x32xf32>
    %87 = vector.extract_strided_slice %18 {offsets = [0, 96], sizes = [16, 32], strides = [1, 1]} : vector<16x128xf32> to vector<16x32xf32>
    %88 = arith.mulf %87, %20 : vector<16x32xf32>
    %89 = arith.addf %86, %88 : vector<16x32xf32>
    %90 = vector.shape_cast %74 : vector<16x32xf32> to vector<1x16x32xf32>
    %91 = vector.shape_cast %79 : vector<16x32xf32> to vector<1x16x32xf32>
    %92 = vector.shape_cast %84 : vector<16x32xf32> to vector<1x16x32xf32>
    %93 = vector.shape_cast %89 : vector<16x32xf32> to vector<1x16x32xf32>
    %94 = tpu.concatenate %90, %91, %92, %93 in 0 : vector<1x16x32xf32>, vector<1x16x32xf32>, vector<1x16x32xf32>, vector<1x16x32xf32> -> vector<4x16x32xf32>
    %95 = vector.extract_strided_slice %16 {offsets = [0, 0], sizes = [16, 32], strides = [1, 1]} : vector<16x128xf32> to vector<16x32xf32>
    %96 = vector.extract_strided_slice %16 {offsets = [0, 32], sizes = [16, 32], strides = [1, 1]} : vector<16x128xf32> to vector<16x32xf32>
    %97 = vector.extract_strided_slice %16 {offsets = [0, 64], sizes = [16, 32], strides = [1, 1]} : vector<16x128xf32> to vector<16x32xf32>
    %98 = vector.extract_strided_slice %16 {offsets = [0, 96], sizes = [16, 32], strides = [1, 1]} : vector<16x128xf32> to vector<16x32xf32>
    %99 = vector.shape_cast %95 : vector<16x32xf32> to vector<1x16x32xf32>
    %100 = vector.shape_cast %96 : vector<16x32xf32> to vector<1x16x32xf32>
    %101 = vector.shape_cast %97 : vector<16x32xf32> to vector<1x16x32xf32>
    %102 = vector.shape_cast %98 : vector<16x32xf32> to vector<1x16x32xf32>
    %103 = tpu.concatenate %99, %100, %101, %102 in 0 : vector<1x16x32xf32>, vector<1x16x32xf32>, vector<1x16x32xf32>, vector<1x16x32xf32> -> vector<4x16x32xf32>
    %104 = vector.shape_cast %94 : vector<4x16x32xf32> to vector<4x1x16x32xf32>
    %105 = vector.shape_cast %104 : vector<4x1x16x32xf32> to vector<4x1x16x32xf32>
    %106 = vector.broadcast %105 : vector<4x1x16x32xf32> to vector<4x2x16x32xf32>
    %107 = vector.shape_cast %106 : vector<4x2x16x32xf32> to vector<8x16x32xf32>
    %108 = vector.shape_cast %103 : vector<4x16x32xf32> to vector<4x1x16x32xf32>
    %109 = vector.shape_cast %108 : vector<4x1x16x32xf32> to vector<4x1x16x32xf32>
    %110 = vector.broadcast %109 : vector<4x1x16x32xf32> to vector<4x2x16x32xf32>
    %111 = vector.shape_cast %110 : vector<4x2x16x32xf32> to vector<8x16x32xf32>
    %112 = arith.truncf %69 : vector<8x16x32xf32> to vector<8x16x32xbf16>
    %113 = arith.truncf %107 : vector<8x16x32xf32> to vector<8x16x32xbf16>
    %114 = arith.truncf %111 : vector<8x16x32xf32> to vector<8x16x32xbf16>
    %115 = tpu.iota {dimensions = array<i32: 0>} : vector<16x16xi32>
    %116 = tpu.iota {dimensions = array<i32: 1>} : vector<16x16xi32>
    %117 = arith.cmpi sle, %116, %115 : vector<16x16xi32>
    %cst_10 = arith.constant 0.000000e+00 : f32
    %cst_11 = arith.constant -1.000000e+09 : f32
    %118 = vector.broadcast %cst_10 : f32 to vector<16x16xf32>
    %119 = vector.broadcast %cst_11 : f32 to vector<16x16xf32>
    %120 = arith.select %117, %118, %119 : vector<16x16xi1>, vector<16x16xf32>
    "tpu.trace_start"() <{level = 10 : i32, message = "hmd,hnd->hmn"}> : () -> ()
    %cst_12 = arith.constant dense<0.000000e+00> : vector<8x16x16xf32>
    %121 = tpu.matmul %112, %113, %cst_12 {dimension_numbers = #tpu.dot_dimension_numbers<[2], [2], [1], [1], [0, 0, 0, 1, 1, 1], [0], [0]>} : vector<8x16x32xbf16>, vector<8x16x32xbf16>, vector<8x16x16xf32> -> vector<8x16x16xf32>
    "tpu.trace_stop"() : () -> ()
    %122 = vector.shape_cast %120 : vector<16x16xf32> to vector<1x16x16xf32>
    %123 = vector.broadcast %122 : vector<1x16x16xf32> to vector<8x16x16xf32>
    %124 = arith.addf %121, %123 : vector<8x16x16xf32>
    %cst_13 = arith.constant dense<0xFF800000> : vector<8x16xf32>
    %125 = vector.multi_reduction <maximumf>, %124, %cst_13 [2] : vector<8x16x16xf32> to vector<8x16xf32>
    %126 = vector.shape_cast %125 : vector<8x16xf32> to vector<8x16x1xf32>
    %127 = vector.broadcast %126 : vector<8x16x1xf32> to vector<8x16x16xf32>
    %128 = arith.subf %124, %127 : vector<8x16x16xf32>
    %129 = math.exp %128 : vector<8x16x16xf32>
    %cst_14 = arith.constant dense<0.000000e+00> : vector<8x16xf32>
    %130 = vector.multi_reduction <add>, %129, %cst_14 [2] : vector<8x16x16xf32> to vector<8x16xf32>
    %131 = vector.shape_cast %130 : vector<8x16xf32> to vector<8x16x1xf32>
    %132 = tpu.reciprocal %131 {approx = true} : vector<8x16x1xf32> -> vector<8x16x1xf32>
    %133 = vector.broadcast %132 : vector<8x16x1xf32> to vector<8x16x16xf32>
    %134 = arith.mulf %129, %133 : vector<8x16x16xf32>
    %135 = arith.truncf %134 : vector<8x16x16xf32> to vector<8x16x16xbf16>
    "tpu.trace_start"() <{level = 10 : i32, message = "hmn,hnd->hmd"}> : () -> ()
    %cst_15 = arith.constant dense<0.000000e+00> : vector<8x16x32xf32>
    %136 = tpu.matmul %135, %114, %cst_15 {dimension_numbers = #tpu.dot_dimension_numbers<[2], [1], [1], [2], [0, 0, 0, 1, 1, 2], [0], [0]>} : vector<8x16x16xbf16>, vector<8x16x32xbf16>, vector<8x16x32xf32> -> vector<8x16x32xf32>
    "tpu.trace_stop"() : () -> ()
    %137 = vector.extract_strided_slice %136 {offsets = [0, 0, 0], sizes = [1, 16, 32], strides = [1, 1, 1]} : vector<8x16x32xf32> to vector<1x16x32xf32>
    %138 = vector.shape_cast %137 : vector<1x16x32xf32> to vector<16x32xf32>
    %139 = vector.extract_strided_slice %136 {offsets = [1, 0, 0], sizes = [1, 16, 32], strides = [1, 1, 1]} : vector<8x16x32xf32> to vector<1x16x32xf32>
    %140 = vector.shape_cast %139 : vector<1x16x32xf32> to vector<16x32xf32>
    %141 = vector.extract_strided_slice %136 {offsets = [2, 0, 0], sizes = [1, 16, 32], strides = [1, 1, 1]} : vector<8x16x32xf32> to vector<1x16x32xf32>
    %142 = vector.shape_cast %141 : vector<1x16x32xf32> to vector<16x32xf32>
    %143 = vector.extract_strided_slice %136 {offsets = [3, 0, 0], sizes = [1, 16, 32], strides = [1, 1, 1]} : vector<8x16x32xf32> to vector<1x16x32xf32>
    %144 = vector.shape_cast %143 : vector<1x16x32xf32> to vector<16x32xf32>
    %145 = vector.extract_strided_slice %136 {offsets = [4, 0, 0], sizes = [1, 16, 32], strides = [1, 1, 1]} : vector<8x16x32xf32> to vector<1x16x32xf32>
    %146 = vector.shape_cast %145 : vector<1x16x32xf32> to vector<16x32xf32>
    %147 = vector.extract_strided_slice %136 {offsets = [5, 0, 0], sizes = [1, 16, 32], strides = [1, 1, 1]} : vector<8x16x32xf32> to vector<1x16x32xf32>
    %148 = vector.shape_cast %147 : vector<1x16x32xf32> to vector<16x32xf32>
    %149 = vector.extract_strided_slice %136 {offsets = [6, 0, 0], sizes = [1, 16, 32], strides = [1, 1, 1]} : vector<8x16x32xf32> to vector<1x16x32xf32>
    %150 = vector.shape_cast %149 : vector<1x16x32xf32> to vector<16x32xf32>
    %151 = vector.extract_strided_slice %136 {offsets = [7, 0, 0], sizes = [1, 16, 32], strides = [1, 1, 1]} : vector<8x16x32xf32> to vector<1x16x32xf32>
    %152 = vector.shape_cast %151 : vector<1x16x32xf32> to vector<16x32xf32>
    %153 = tpu.concatenate %138, %140, %142, %144, %146, %148, %150, %152 in 1 : vector<16x32xf32>, vector<16x32xf32>, vector<16x32xf32>, vector<16x32xf32>, vector<16x32xf32>, vector<16x32xf32>, vector<16x32xf32>, vector<16x32xf32> -> vector<16x256xf32>
    %154 = arith.truncf %153 : vector<16x256xf32> to vector<16x256xbf16>
    %c0_16 = arith.constant 0 : index
    %c0_17 = arith.constant 0 : index
    %155 = vector.load %arg5[%c0_16, %c0_17] : memref<256x256xbf16, #tpu.memory_space<vmem>>, vector<256x256xbf16>
    %cst_18 = arith.constant dense<0.000000e+00> : vector<16x256xf32>
    %156 = tpu.matmul %154, %155, %cst_18 {dimension_numbers = #tpu.dot_dimension_numbers<[1], [0], [0], [1], [0, 0, 1, 1], [], []>} : vector<16x256xbf16>, vector<256x256xbf16>, vector<16x256xf32> -> vector<16x256xf32>
    %157 = arith.addf %0, %156 : vector<16x256xf32>
    %158 = arith.mulf %157, %157 : vector<16x256xf32>
    %cst_19 = arith.constant dense<0.000000e+00> : vector<16xf32>
    %159 = vector.multi_reduction <add>, %158, %cst_19 [1] : vector<16x256xf32> to vector<16xf32>
    %160 = vector.shape_cast %159 : vector<16xf32> to vector<16x1xf32>
    %cst_20 = arith.constant 2.560000e+02 : f32
    %161 = vector.broadcast %cst_20 : f32 to vector<16x1xf32>
    %162 = arith.divf %160, %161 : vector<16x1xf32>
    %cst_21 = arith.constant 9.99999974E-6 : f32
    %163 = vector.broadcast %cst_21 : f32 to vector<16x1xf32>
    %164 = arith.addf %162, %163 : vector<16x1xf32>
    %165 = math.rsqrt %164 : vector<16x1xf32>
    %166 = vector.broadcast %165 : vector<16x1xf32> to vector<16x256xf32>
    %167 = arith.mulf %157, %166 : vector<16x256xf32>
    %168 = arith.truncf %167 : vector<16x256xf32> to vector<16x256xbf16>
    %c0_22 = arith.constant 0 : index
    %c0_23 = arith.constant 0 : index
    %169 = vector.load %arg6[%c0_22, %c0_23] : memref<256x2048xbf16, #tpu.memory_space<vmem>>, vector<256x2048xbf16>
    %cst_24 = arith.constant dense<0.000000e+00> : vector<16x2048xf32>
    %170 = tpu.matmul %168, %169, %cst_24 {dimension_numbers = #tpu.dot_dimension_numbers<[1], [0], [0], [1], [0, 0, 1, 1], [], []>} : vector<16x256xbf16>, vector<256x2048xbf16>, vector<16x2048xf32> -> vector<16x2048xf32>
    %171 = vector.extract_strided_slice %170 {offsets = [0, 0], sizes = [16, 1024], strides = [1, 1]} : vector<16x2048xf32> to vector<16x1024xf32>
    %172 = vector.extract_strided_slice %170 {offsets = [0, 1024], sizes = [16, 1024], strides = [1, 1]} : vector<16x2048xf32> to vector<16x1024xf32>
    %173 = arith.negf %171 : vector<16x1024xf32>
    %174 = math.exp %173 : vector<16x1024xf32>
    %cst_25 = arith.constant 1.000000e+00 : f32
    %175 = vector.broadcast %cst_25 : f32 to vector<16x1024xf32>
    %176 = arith.addf %175, %174 : vector<16x1024xf32>
    %177 = arith.divf %175, %176 : vector<16x1024xf32>
    %178 = arith.mulf %171, %177 : vector<16x1024xf32>
    %179 = arith.mulf %178, %172 : vector<16x1024xf32>
    %180 = arith.truncf %179 : vector<16x1024xf32> to vector<16x1024xbf16>
    %c0_26 = arith.constant 0 : index
    %c0_27 = arith.constant 0 : index
    %181 = vector.load %arg7[%c0_26, %c0_27] : memref<1024x256xbf16, #tpu.memory_space<vmem>>, vector<1024x256xbf16>
    %cst_28 = arith.constant dense<0.000000e+00> : vector<16x256xf32>
    %182 = tpu.matmul %180, %181, %cst_28 {dimension_numbers = #tpu.dot_dimension_numbers<[1], [0], [0], [1], [0, 0, 1, 1], [], []>} : vector<16x1024xbf16>, vector<1024x256xbf16>, vector<16x256xf32> -> vector<16x256xf32>
    %183 = arith.addf %157, %182 : vector<16x256xf32>
    %c0_29 = arith.constant 0 : index
    %c0_30 = arith.constant 0 : index
    %184 = vector.load %arg8[%c0_29, %c0_30] : memref<16x256xf32, #tpu.memory_space<vmem>>, vector<16x256xf32>
    tpu.vector_store %arg8[%c0_29, %c0_30], %183 {strides = array<i32>} : memref<16x256xf32, #tpu.memory_space<vmem>>, vector<16x256xf32>,
    return
  }
  func.func @transform_0(%arg0: i32) -> (i32, i32) {
    %c0_i32 = arith.constant 0 : i32
    %c0_i32_0 = arith.constant 0 : i32
    return %arg0, %c0_i32 : i32, i32
  }
  func.func @transform_1(%arg0: i32) -> (i32, i32) {
    %c0_i32 = arith.constant 0 : i32
    %c0_i32_0 = arith.constant 0 : i32
    %c0_i32_1 = arith.constant 0 : i32
    return %c0_i32, %c0_i32_0 : i32, i32
  }
  func.func @transform_2(%arg0: i32) -> (i32, i32) {
    %c0_i32 = arith.constant 0 : i32
    %c0_i32_0 = arith.constant 0 : i32
    %c0_i32_1 = arith.constant 0 : i32
    return %c0_i32, %c0_i32_0 : i32, i32
  }
  func.func @transform_3(%arg0: i32) -> (i32, i32) {
    %c0_i32 = arith.constant 0 : i32
    %c0_i32_0 = arith.constant 0 : i32
    %c0_i32_1 = arith.constant 0 : i32
    return %c0_i32, %c0_i32_0 : i32, i32
  }
  func.func @transform_4(%arg0: i32) -> (i32, i32) {
    %c0_i32 = arith.constant 0 : i32
    %c0_i32_0 = arith.constant 0 : i32
    %c0_i32_1 = arith.constant 0 : i32
    return %c0_i32, %c0_i32_0 : i32, i32
  }
  func.func @transform_5(%arg0: i32) -> (i32, i32) {
    %c0_i32 = arith.constant 0 : i32
    %c0_i32_0 = arith.constant 0 : i32
    %c0_i32_1 = arith.constant 0 : i32
    return %c0_i32, %c0_i32_0 : i32, i32
  }
  func.func @transform_6(%arg0: i32) -> (i32, i32) {
    %c0_i32 = arith.constant 0 : i32
    %c0_i32_0 = arith.constant 0 : i32
    %c0_i32_1 = arith.constant 0 : i32
    return %c0_i32, %c0_i32_0 : i32, i32
  }
  func.func @transform_7(%arg0: i32) -> (i32, i32) {
    %c0_i32 = arith.constant 0 : i32
    %c0_i32_0 = arith.constant 0 : i32
    return %arg0, %c0_i32 : i32, i32
  }
}

</mosaic_0001>

<llo_original>
// kernel: tpu_custom_call.1
$region0: #{tpu_custom_call.1}
  #allocation0 [shape = 'u32[]', space=smem, size = 0x4, offset = 0x4, fixed_abs, tag = 'smem constant byte address 0x4 - core index']
  #allocation1 [shape = 'u32[72,128]{1,0:T(1,128)}', space=vmem, size = 0x9000, scoped, tag = 'internal scratch']
  %s0 = inlined_call_operand.hbm [shape: f32[32,256], index: 0, kind: input, shape index: {}]
  %s1 = inlined_call_operand.hbm [shape: f32[16,32], index: 1, kind: input, shape index: {}]
  %s2 = inlined_call_operand.hbm [shape: f32[16,32], index: 2, kind: input, shape index: {}]
  %s3 = inlined_call_operand.hbm [shape: bf16[256,896], index: 3, kind: input, shape index: {}]
  %s4 = inlined_call_operand.hbm [shape: bf16[256,256], index: 4, kind: input, shape index: {}]
  %s5 = inlined_call_operand.hbm [shape: bf16[256,2048], index: 5, kind: input, shape index: {}]
  %s6 = inlined_call_operand.hbm [shape: bf16[1024,256], index: 6, kind: input, shape index: {}]
  %s7 = inlined_call_operand.hbm [shape: f32[32,256], index: 7, kind: output, shape index: {}]
  %s8 = sld [smem:[#allocation0]]
  $region89: #{tpu_custom_call.1} parent=0
    _
  %s10 = ssub.s32 1, %s8
  %s11 = scalar_select 0, %s10, %s8
  $region1: #{tpu_custom_call.1} parent=0
    #allocation2 [shape = 'u8[32768]{0}', space=vmem, size = 0x8000, scoped, tag = 'input window, operand 0']
    #allocation3 [shape = 's32[2]{0}', space=sflag, size = 0x8, scoped, tag = 'scoped memory for tpu_custom_call.1']
    #allocation4 [shape = 's32[2]{0}', space=sflag, size = 0x8, scoped, tag = 'scoped memory for tpu_custom_call.1']
    #allocation5 [shape = 'u8[8192]{0}', space=vmem, size = 0x2000, scoped, tag = 'input window, operand 1, single buffered']
    #allocation6 [shape = 's32[1]{0}', space=sflag, size = 0x4, scoped, tag = 'scoped memory for tpu_custom_call.1']
    #allocation7 [shape = 'u8[8192]{0}', space=vmem, size = 0x2000, scoped, tag = 'input window, operand 2, single buffered']
    #allocation8 [shape = 'u8[458752]{0}', space=vmem, size = 0x70000, scoped, tag = 'input window, operand 3, single buffered']
    #allocation9 [shape = 's32[1]{0}', space=sflag, size = 0x4, scoped, tag = 'scoped memory for tpu_custom_call.1']
    #allocation10 [shape = 'u8[131072]{0}', space=vmem, size = 0x20000, scoped, tag = 'input window, operand 4, single buffered']
    #allocation11 [shape = 'u8[1048576]{0}', space=vmem, size = 0x100000, scoped, tag = 'input window, operand 5, single buffered']
    #allocation12 [shape = 's32[1]{0}', space=sflag, size = 0x4, scoped, tag = 'scoped memory for tpu_custom_call.1']
    #allocation13 [shape = 'u8[524288]{0}', space=vmem, size = 0x80000, scoped, tag = 'input window, operand 6, single buffered']
    #allocation14 [shape = 'u8[32768]{0}', space=vmem, size = 0x8000, scoped, tag = 'output window, operand 0']
    %12 = vsyncpa [#allocation3], 0
    %s13 = scalar_lea.sflag [#allocation3], 1
    %14 = vsyncpa %s13, 0
    %15 = vsyncpa [#allocation6], 0
    %16 = vsyncpa [#allocation9], 0
    %17 = vsyncpa [#allocation12], 0
    %18 = vsyncpa [#allocation4], 0
    %s19 = scalar_lea.sflag [#allocation4], 1
    %20 = vsyncpa %s19, 0
    loop: start=0, step=1, limit=4
    $region2: #{tpu_custom_call.1} parent=1 // loop_pre_header
      _
    $region3: #{tpu_custom_call.1} parent=1 // loop_header
      %s22 = sphi 0, %s26
      %p23 = scmp.ge.s32.totalorder %s22, 4
      %s32 = sphi 0, %s34
      %s35 = sphi 0, %s32
      %s36 = sphi 0, %s35
      %s52 = sphi 0, %s36
      %s56 = sphi 0, %s56
      %s58 = sphi 0, %s56
      %s59 = sphi 0, %s58
      %s73 = sphi 0, %s59
      %s77 = sphi 0, %s77
      %s79 = sphi 0, %s77
      %s80 = sphi 0, %s79
      %s94 = sphi 0, %s80
      %s98 = sphi 0, %s98
      %s100 = sphi 0, %s98
      %s101 = sphi 0, %s100
      %s115 = sphi 0, %s101
      %s119 = sphi 0, %s119
      %s121 = sphi 0, %s119
      %s122 = sphi 0, %s121
      %s136 = sphi 0, %s122
      %s140 = sphi 0, %s140
      %s142 = sphi 0, %s140
      %s143 = sphi 0, %s142
      %s157 = sphi 0, %s143
      %s161 = sphi 0, %s161
      %s163 = sphi 0, %s161
      %s164 = sphi 0, %s163
      %s178 = sphi 0, %s164
      %s184 = sphi 0, %s186
      %s187 = sphi 0, %s184
      %s188 = sphi 0, %s187
      %s204 = sphi 0, %s188
    $region4: #{tpu_custom_call.1} parent=1 // loop_header_branch
      %25 = sbr.rel (%p23) target = $region8
    $region5: #{tpu_custom_call.1} parent=1 // loop_body
      %s27 = ssub.s32 %s22, 1
      %s28 = ssub.s32 %s22, 2
      %s29 = sadd.s32 %s22, 1
      %s30 = ssub.s32 %s22, %s29
      %p31 = scmp.eq.s32.totalorder %s30, 0
      %s33 = sadd.s32 %s32, 1
      %s34 = scalar_select %p31, %s32, %s33
      %p37 = pneg %p31
      %p38 = scmp.eq.s32.totalorder %s22, 1
      %p39 = por %p37, %p38
      %p40 = scmp.ne.s32.totalorder %s32, %s35
      %p41 = scmp.eq.s32.totalorder %s22, 0
      %p42 = por %p40, %p41
      %p43 = scmp.ne.s32.totalorder %s32, %s35
      %p44 = scmp.eq.s32.totalorder %s27, 1
      %p45 = por %p43, %p44
      %p46 = scmp.ne.s32.totalorder %s35, %s36
      %p47 = scmp.eq.s32.totalorder %s27, 0
      %p48 = por %p46, %p47
      %p49 = scmp.ne.s32.totalorder %s35, %s36
      %p50 = scmp.eq.s32.totalorder %s28, 1
      %p51 = por %p49, %p50
      %p53 = scmp.ne.s32.totalorder %s36, %s52
      %p54 = scmp.eq.s32.totalorder %s28, 0
      %p55 = por %p53, %p54
      %s57 = sadd.s32 %s56, 1
      %p60 = scmp.eq.s32.totalorder %s22, 1
      %p61 = scmp.ne.s32.totalorder %s56, %s58
      %p62 = scmp.eq.s32.totalorder %s22, 0
      %p63 = por %p61, %p62
      %p64 = scmp.ne.s32.totalorder %s56, %s58
      %p65 = scmp.eq.s32.totalorder %s27, 1
      %p66 = por %p64, %p65
      %p67 = scmp.ne.s32.totalorder %s58, %s59
      %p68 = scmp.eq.s32.totalorder %s27, 0
      %p69 = por %p67, %p68
      %p70 = scmp.ne.s32.totalorder %s58, %s59
      %p71 = scmp.eq.s32.totalorder %s28, 1
      %p72 = por %p70, %p71
      %p74 = scmp.ne.s32.totalorder %s59, %s73
      %p75 = scmp.eq.s32.totalorder %s28, 0
      %p76 = por %p74, %p75
      %s78 = sadd.s32 %s77, 1
      %p81 = scmp.eq.s32.totalorder %s22, 1
      %p82 = scmp.ne.s32.totalorder %s77, %s79
      %p83 = scmp.eq.s32.totalorder %s22, 0
      %p84 = por %p82, %p83
      %p85 = scmp.ne.s32.totalorder %s77, %s79
      %p86 = scmp.eq.s32.totalorder %s27, 1
      %p87 = por %p85, %p86
      %p88 = scmp.ne.s32.totalorder %s79, %s80
      %p89 = scmp.eq.s32.totalorder %s27, 0
      %p90 = por %p88, %p89
      %p91 = scmp.ne.s32.totalorder %s79, %s80
      %p92 = scmp.eq.s32.totalorder %s28, 1
      %p93 = por %p91, %p92
      %p95 = scmp.ne.s32.totalorder %s80, %s94
      %p96 = scmp.eq.s32.totalorder %s28, 0
      %p97 = por %p95, %p96
      %s99 = sadd.s32 %s98, 1
      %p102 = scmp.eq.s32.totalorder %s22, 1
      %p103 = scmp.ne.s32.totalorder %s98, %s100
      %p104 = scmp.eq.s32.totalorder %s22, 0
      %p105 = por %p103, %p104
      %p106 = scmp.ne.s32.totalorder %s98, %s100
      %p107 = scmp.eq.s32.totalorder %s27, 1
      %p108 = por %p106, %p107
      %p109 = scmp.ne.s32.totalorder %s100, %s101
      %p110 = scmp.eq.s32.totalorder %s27, 0
      %p111 = por %p109, %p110
      %p112 = scmp.ne.s32.totalorder %s100, %s101
      %p113 = scmp.eq.s32.totalorder %s28, 1
      %p114 = por %p112, %p113
      %p116 = scmp.ne.s32.totalorder %s101, %s115
      %p117 = scmp.eq.s32.totalorder %s28, 0
      %p118 = por %p116, %p117
      %s120 = sadd.s32 %s119, 1
      %p123 = scmp.eq.s32.totalorder %s22, 1
      %p124 = scmp.ne.s32.totalorder %s119, %s121
      %p125 = scmp.eq.s32.totalorder %s22, 0
      %p126 = por %p124, %p125
      %p127 = scmp.ne.s32.totalorder %s119, %s121
      %p128 = scmp.eq.s32.totalorder %s27, 1
      %p129 = por %p127, %p128
      %p130 = scmp.ne.s32.totalorder %s121, %s122
      %p131 = scmp.eq.s32.totalorder %s27, 0
      %p132 = por %p130, %p131
      %p133 = scmp.ne.s32.totalorder %s121, %s122
      %p134 = scmp.eq.s32.totalorder %s28, 1
      %p135 = por %p133, %p134
      %p137 = scmp.ne.s32.totalorder %s122, %s136
      %p138 = scmp.eq.s32.totalorder %s28, 0
      %p139 = por %p137, %p138
      %s141 = sadd.s32 %s140, 1
      %p144 = scmp.eq.s32.totalorder %s22, 1
      %p145 = scmp.ne.s32.totalorder %s140, %s142
      %p146 = scmp.eq.s32.totalorder %s22, 0
      %p147 = por %p145, %p146
      %p148 = scmp.ne.s32.totalorder %s140, %s142
      %p149 = scmp.eq.s32.totalorder %s27, 1
      %p150 = por %p148, %p149
      %p151 = scmp.ne.s32.totalorder %s142, %s143
      %p152 = scmp.eq.s32.totalorder %s27, 0
      %p153 = por %p151, %p152
      %p154 = scmp.ne.s32.totalorder %s142, %s143
      %p155 = scmp.eq.s32.totalorder %s28, 1
      %p156 = por %p154, %p155
      %p158 = scmp.ne.s32.totalorder %s143, %s157
      %p159 = scmp.eq.s32.totalorder %s28, 0
      %p160 = por %p158, %p159
      %s162 = sadd.s32 %s161, 1
      %p165 = scmp.eq.s32.totalorder %s22, 1
      %p166 = scmp.ne.s32.totalorder %s161, %s163
      %p167 = scmp.eq.s32.totalorder %s22, 0
      %p168 = por %p166, %p167
      %p169 = scmp.ne.s32.totalorder %s161, %s163
      %p170 = scmp.eq.s32.totalorder %s27, 1
      %p171 = por %p169, %p170
      %p172 = scmp.ne.s32.totalorder %s163, %s164
      %p173 = scmp.eq.s32.totalorder %s27, 0
      %p174 = por %p172, %p173
      %p175 = scmp.ne.s32.totalorder %s163, %s164
      %p176 = scmp.eq.s32.totalorder %s28, 1
      %p177 = por %p175, %p176
      %p179 = scmp.ne.s32.totalorder %s164, %s178
      %p180 = scmp.eq.s32.totalorder %s28, 0
      %p181 = por %p179, %p180
      %s182 = ssub.s32 %s22, %s29
      %p183 = scmp.eq.s32.totalorder %s182, 0
      %s185 = sadd.s32 %s184, 1
      %s186 = scalar_select %p183, %s184, %s185
      %p189 = pneg %p183
      %p190 = scmp.eq.s32.totalorder %s22, 1
      %p191 = por %p189, %p190
      %p192 = scmp.ne.s32.totalorder %s184, %s187
      %p193 = scmp.eq.s32.totalorder %s22, 0
      %p194 = por %p192, %p193
      %p195 = scmp.ne.s32.totalorder %s184, %s187
      %p196 = scmp.eq.s32.totalorder %s27, 1
      %p197 = por %p195, %p196
      %p198 = scmp.ne.s32.totalorder %s187, %s188
      %p199 = scmp.eq.s32.totalorder %s27, 0
      %p200 = por %p198, %p199
      %p201 = scmp.ne.s32.totalorder %s187, %s188
      %p202 = scmp.eq.s32.totalorder %s28, 1
      %p203 = por %p201, %p202
      %p205 = scmp.ne.s32.totalorder %s188, %s204
      %p206 = scmp.eq.s32.totalorder %s28, 0
      %p207 = por %p205, %p206
      %p208 = scmp.le.s32.totalorder 1, %s22
      %p209 = scmp.lt.s32.totalorder %s22, 3
      %p210 = pnand %p208, %p209
      %p211 = pneg %p210
      // Predicated region
      $region9: #{tpu_custom_call.1} parent=5 // pred_check
        _
      $region10: #{tpu_custom_call.1} parent=5 // pred_check_branch
        %213 = sbr.rel (%p210) target = $region12
      $region11: #{tpu_custom_call.1} parent=5 // pred_region
        %s214 = ssub.s32 %s22, 1
        // Predicated region
        $region13: #{tpu_custom_call.1} parent=11 // pred_check
          %p215 = pneg %p69
        $region14: #{tpu_custom_call.1} parent=11 // pred_check_branch
          %217 = sbr.rel (%p215) target = $region16
        $region15: #{tpu_custom_call.1} parent=11 // pred_region
          %219 = vsyncadd [#allocation6], 0
          %s220 = sshll.u32 %s1, 4
          %s221 = int_to_ptr.hbm [resolvable:$true] %s220
          %s222 = sshll.u32 [#allocation5], 4
          %s223 = int_to_ptr.vmem [resolvable:$true] %s222
          %228 = dma.hbm_to_vmem [thread:$0]  %s221, 256, %s223, [#allocation6], 128, 128, 8
        $region16: #{tpu_custom_call.1} parent=11 // pred_fallthru
          _
        // Predicated region
        $region17: #{tpu_custom_call.1} parent=11 // pred_check
          %p229 = pneg %p90
        $region18: #{tpu_custom_call.1} parent=11 // pred_check_branch
          %231 = sbr.rel (%p229) target = $region20
        $region19: #{tpu_custom_call.1} parent=11 // pred_region
          %233 = vsyncadd [#allocation6], 0
          %s234 = sshll.u32 %s2, 4
          %s235 = int_to_ptr.hbm [resolvable:$true] %s234
          %s236 = sshll.u32 [#allocation7], 4
          %s237 = int_to_ptr.vmem [resolvable:$true] %s236
          %242 = dma.hbm_to_vmem [thread:$0]  %s235, 256, %s237, [#allocation6], 128, 128, 8
        $region20: #{tpu_custom_call.1} parent=11 // pred_fallthru
          _
        // Predicated region
        $region21: #{tpu_custom_call.1} parent=11 // pred_check
          %p243 = pneg %p111
        $region22: #{tpu_custom_call.1} parent=11 // pred_check_branch
          %245 = sbr.rel (%p243) target = $region24
        $region23: #{tpu_custom_call.1} parent=11 // pred_region
          %247 = vsyncadd [#allocation9], 0
          %s248 = sshll.u32 %s3, 4
          %s249 = int_to_ptr.hbm [resolvable:$true] %s248
          %s250 = sshll.u32 [#allocation8], 4
          %s251 = int_to_ptr.vmem [resolvable:$true] %s250
          %256 = dma.hbm_to_vmem [thread:$0]  %s249, 14336, %s251, [#allocation9], 448, 448, 28
        $region24: #{tpu_custom_call.1} parent=11 // pred_fallthru
          _
        // Predicated region
        $region25: #{tpu_custom_call.1} parent=11 // pred_check
          %p257 = pneg %p132
        $region26: #{tpu_custom_call.1} parent=11 // pred_check_branch
          %259 = sbr.rel (%p257) target = $region28
        $region27: #{tpu_custom_call.1} parent=11 // pred_region
          %261 = vsyncadd [#allocation9], 0
          %s262 = sshll.u32 %s4, 4
          %s263 = int_to_ptr.hbm [resolvable:$true] %s262
          %s264 = sshll.u32 [#allocation10], 4
          %s265 = int_to_ptr.vmem [resolvable:$true] %s264
          %270 = dma.hbm_to_vmem [thread:$0]  %s263, 4096, %s265, [#allocation9], 128, 128, 8
        $region28: #{tpu_custom_call.1} parent=11 // pred_fallthru
          _
        // Predicated region
        $region29: #{tpu_custom_call.1} parent=11 // pred_check
          %p271 = pneg %p153
        $region30: #{tpu_custom_call.1} parent=11 // pred_check_branch
          %273 = sbr.rel (%p271) target = $region32
        $region31: #{tpu_custom_call.1} parent=11 // pred_region
          %275 = vsyncadd [#allocation12], 0
          %s276 = sshll.u32 %s5, 4
          %s277 = int_to_ptr.hbm [resolvable:$true] %s276
          %s278 = sshll.u32 [#allocation11], 4
          %s279 = int_to_ptr.vmem [resolvable:$true] %s278
          %284 = dma.hbm_to_vmem [thread:$0]  %s277, 32768, %s279, [#allocation12], 1024, 1024, 64
        $region32: #{tpu_custom_call.1} parent=11 // pred_fallthru
          _
        // Predicated region
        $region33: #{tpu_custom_call.1} parent=11 // pred_check
          %p285 = pneg %p174
        $region34: #{tpu_custom_call.1} parent=11 // pred_check_branch
          %287 = sbr.rel (%p285) target = $region36
        $region35: #{tpu_custom_call.1} parent=11 // pred_region
          %289 = vsyncadd [#allocation12], 0
          %s290 = sshll.u32 %s6, 4
          %s291 = int_to_ptr.hbm [resolvable:$true] %s290
          %s292 = sshll.u32 [#allocation13], 4
          %s293 = int_to_ptr.vmem [resolvable:$true] %s292
          %298 = dma.hbm_to_vmem [thread:$0]  %s291, 16384, %s293, [#allocation12], 128, 128, 8
        $region36: #{tpu_custom_call.1} parent=11 // pred_fallthru
          _
      $region12: #{tpu_custom_call.1} parent=5 // pred_fallthru
        _
      %p299 = scmp.lt.s32.totalorder %s22, 2
      // Predicated region
      $region37: #{tpu_custom_call.1} parent=5 // pred_check
        %p300 = pneg %p299
      $region38: #{tpu_custom_call.1} parent=5 // pred_check_branch
        %302 = sbr.rel (%p300) target = $region40
      $region39: #{tpu_custom_call.1} parent=5 // pred_region
        // Predicated region
        $region41: #{tpu_custom_call.1} parent=39 // pred_check
          %p303 = pneg %p42
        $region42: #{tpu_custom_call.1} parent=39 // pred_check_branch
          %305 = sbr.rel (%p303) target = $region44
        $region43: #{tpu_custom_call.1} parent=39 // pred_region
          %s306 = sand.u32 %s32, 1
          %s307 = scalar_lea.sflag [#allocation3], %s306
          %s308 = sand.u32 %s32, 1
          %s309 = smul.addr %s308, 32
          %s310 = scalar_lea.vmem [#allocation2], %s309
          %s311 = smul.u32 2, %s22
          %313 = vsyncadd %s307, 0
          %s314 = smul.addr %s311, 2
          %s315 = smul.addr %s314, 8
          %s316 = scalar_lea.hbm %s0, %s315
          %s317 = sshll.u32 %s316, 4
          %s318 = int_to_ptr.hbm [resolvable:$true] %s317
          %s319 = sshll.u32 %s310, 4
          %s320 = int_to_ptr.vmem [resolvable:$true] %s319
          %325 = dma.hbm_to_vmem [thread:$0]  %s318, 512, %s320, %s307, 256, 256, 16
        $region44: #{tpu_custom_call.1} parent=39 // pred_fallthru
          _
      $region40: #{tpu_custom_call.1} parent=5 // pred_fallthru
        _
      %p326 = scmp.le.s32.totalorder 1, %s22
      %p327 = scmp.lt.s32.totalorder %s22, 3
      %p328 = pnand %p326, %p327
      %p329 = pneg %p328
      // Predicated region
      $region45: #{tpu_custom_call.1} parent=5 // pred_check
        _
      $region46: #{tpu_custom_call.1} parent=5 // pred_check_branch
        %331 = sbr.rel (%p328) target = $region48
      $region47: #{tpu_custom_call.1} parent=5 // pred_region
        %s332 = ssub.s32 %s22, 1
        %s333 = sand.u32 %s35, 1
        %s334 = scalar_lea.sflag [#allocation3], %s333
        %s335 = sand.u32 %s35, 1
        %s336 = smul.addr %s335, 32
        %s337 = scalar_lea.vmem [#allocation2], %s336
        // Predicated region
        $region49: #{tpu_custom_call.1} parent=47 // pred_check
          %p338 = pneg %p48
        $region50: #{tpu_custom_call.1} parent=47 // pred_check_branch
          %340 = sbr.rel (%p338) target = $region52
        $region51: #{tpu_custom_call.1} parent=47 // pred_region
          %342 = dma.done %s334, 512
        $region52: #{tpu_custom_call.1} parent=47 // pred_fallthru
          _
        // Predicated region
        $region53: #{tpu_custom_call.1} parent=47 // pred_check
          %p343 = pneg %p69
        $region54: #{tpu_custom_call.1} parent=47 // pred_check_branch
          %345 = sbr.rel (%p343) target = $region56
        $region55: #{tpu_custom_call.1} parent=47 // pred_region
          %347 = dma.done [#allocation6], 256
        $region56: #{tpu_custom_call.1} parent=47 // pred_fallthru
          _
        // Predicated region
        $region57: #{tpu_custom_call.1} parent=47 // pred_check
          %p348 = pneg %p90
        $region58: #{tpu_custom_call.1} parent=47 // pred_check_branch
          %350 = sbr.rel (%p348) target = $region60
        $region59: #{tpu_custom_call.1} parent=47 // pred_region
          %352 = dma.done [#allocation6], 256
        $region60: #{tpu_custom_call.1} parent=47 // pred_fallthru
          _
        // Predicated region
        $region61: #{tpu_custom_call.1} parent=47 // pred_check
          %p353 = pneg %p111
        $region62: #{tpu_custom_call.1} parent=47 // pred_check_branch
          %355 = sbr.rel (%p353) target = $region64
        $region63: #{tpu_custom_call.1} parent=47 // pred_region
          %357 = dma.done [#allocation9], 14336
        $region64: #{tpu_custom_call.1} parent=47 // pred_fallthru
          _
        // Predicated region
        $region65: #{tpu_custom_call.1} parent=47 // pred_check
          %p358 = pneg %p132
        $region66: #{tpu_custom_call.1} parent=47 // pred_check_branch
          %360 = sbr.rel (%p358) target = $region68
        $region67: #{tpu_custom_call.1} parent=47 // pred_region
          %362 = dma.done [#allocation9], 4096
        $region68: #{tpu_custom_call.1} parent=47 // pred_fallthru
          _
        // Predicated region
        $region69: #{tpu_custom_call.1} parent=47 // pred_check
          %p363 = pneg %p153
        $region70: #{tpu_custom_call.1} parent=47 // pred_check_branch
          %365 = sbr.rel (%p363) target = $region72
        $region71: #{tpu_custom_call.1} parent=47 // pred_region
          %367 = dma.done [#allocation12], 32768
        $region72: #{tpu_custom_call.1} parent=47 // pred_fallthru
          _
        // Predicated region
        $region73: #{tpu_custom_call.1} parent=47 // pred_check
          %p368 = pneg %p174
        $region74: #{tpu_custom_call.1} parent=47 // pred_check_branch
          %370 = sbr.rel (%p368) target = $region76
        $region75: #{tpu_custom_call.1} parent=47 // pred_region
          %372 = dma.done [#allocation12], 16384
        $region76: #{tpu_custom_call.1} parent=47 // pred_fallthru
          _
        %s373 = sand.u32 %s35, 1
        %s374 = scalar_lea.sflag [#allocation3], %s373
        %s375 = sand.u32 %s35, 1
        %s376 = smul.addr %s375, 32
        %s377 = scalar_lea.vmem [#allocation2], %s376
        %p378 = pneg %p48
        %p379 = pneg %p45
        %p380 = pneg %p69
        %p381 = pneg %p66
        %p382 = pneg %p90
        %p383 = pneg %p87
        %p384 = pneg %p111
        %p385 = pneg %p108
        %p386 = pneg %p132
        %p387 = pneg %p129
        %p388 = pneg %p153
        %p389 = pneg %p150
        %p390 = pneg %p174
        %p391 = pneg %p171
        %p392 = pneg %p200
        %p393 = pneg %p197
        %s394 = sand.u32 %s187, 1
        %s395 = scalar_lea.sflag [#allocation4], %s394
        %s396 = sand.u32 %s187, 1
        %s397 = smul.addr %s396, 32
        %s398 = scalar_lea.vmem [#allocation14], %s397
        %s399 = smul.u32 2, %s27
        %s400 = smul.u32 2, %s27
        %v402 = vld [vmem:[%s337] sm:$0xff]
        %v403 = vld [vmem:[%s337 + $0x8] sm:$0xff]
        %v404 = vld [vmem:[%s337 + $0x10] sm:$0xff]
        %v405 = vld [vmem:[%s337 + $0x18] sm:$0xff]
        %v406 = vmul.f32 %v402, %v402
        %v407 = vmul.f32 %v403, %v403
        %v408 = vmul.f32 %v404, %v404
        %v409 = vmul.f32 %v405, %v405
        %v410 = vadd.f32 %v406, %v407
        %411 = vadd.xlane.f32.xlu0 %v410
        %v412 = vpop.xlane.xlu0 %411
        %v413 = vadd.f32 %v408, %v409
        %414 = vadd.xlane.f32.xlu0 %v413
        %v415 = vpop.xlane.xlu0 %414
        %v416 = vrcp.pop 256.0
        %v417 = vmul.f32 256.0, %v416
        %v418 = vsub.f32 1.0, %v417
        %v419 = vmul.f32 %v416, %v418
        %v420 = vadd.f32 %v416, %v419
        %vm421 = vweird.f32 %v416
        %v422 = vsel %vm421, %v416, %v420
        %v423 = vmul.f32 %v412, %v422
        %v424 = vmul.f32 %v415, %v422
        %v425 = vadd.f32 %v423, 1e-05
        %v426 = vadd.f32 %v424, 1e-05
        %v427 = vrsqrt.pop %v425
        %v428 = vmul.f32 %v427, %v425
        %v429 = vmul.f32 %v428, %v427
        %v430 = vmul.f32 0.5, %v429
        %v431 = vsub.f32 1.5, %v430
        %v432 = vmul.f32 %v427, %v431
        %vm433 = vweird.f32 %v425
        %vm434 = vweird.f32 %v427
        %vm435 = vmor %vm433, %vm434
        %v436 = vsel %vm435, %v427, %v432
        %v437 = vrsqrt.pop %v426
        %v438 = vmul.f32 %v437, %v426
        %v439 = vmul.f32 %v438, %v437
        %v440 = vmul.f32 0.5, %v439
        %v441 = vsub.f32 1.5, %v440
        %v442 = vmul.f32 %v437, %v441
        %vm443 = vweird.f32 %v426
        %vm444 = vweird.f32 %v437
        %vm445 = vmor %vm443, %vm444
        %v446 = vsel %vm445, %v437, %v442
        %v447 = vmul.f32 %v402, %v436
        %v448 = vmul.f32 %v403, %v436
        %v449 = vmul.f32 %v404, %v446
        %v450 = vmul.f32 %v405, %v446
        %v451 = vpack.c.bf16 %v449, %v447
        %v452 = vpack.c.bf16 %v450, %v448
        %v453 = vld [vmem:[#allocation8] sm:$0xff]
        %v454 = vld [vmem:[#allocation8 + $0x8] sm:$0xff]
        %v455 = vld [vmem:[#allocation8 + $0x10] sm:$0xff]
        %v456 = vld [vmem:[#allocation8 + $0x18] sm:$0xf]
        %v457 = vld [vmem:[#allocation8 + $0x1c] sm:$0xff]
        %v458 = vld [vmem:[#allocation8 + $0x24] sm:$0xff]
        %v459 = vld [vmem:[#allocation8 + $0x2c] sm:$0xff]
        %v460 = vld [vmem:[#allocation8 + $0x34] sm:$0xf]
        %v461 = vld [vmem:[#allocation8 + $0x38] sm:$0xff]
        %v462 = vld [vmem:[#allocation8 + $0x40] sm:$0xff]
        %v463 = vld [vmem:[#allocation8 + $0x48] sm:$0xff]
        %v464 = vld [vmem:[#allocation8 + $0x50] sm:$0xf]
        %v465 = vld [vmem:[#allocation8 + $0x54] sm:$0xff]
        %v466 = vld [vmem:[#allocation8 + $0x5c] sm:$0xff]
        %v467 = vld [vmem:[#allocation8 + $0x64] sm:$0xff]
        %v468 = vld [vmem:[#allocation8 + $0x6c] sm:$0xf]
        %v469 = vld [vmem:[#allocation8 + $0x70] sm:$0xff]
        %v470 = vld [vmem:[#allocation8 + $0x78] sm:$0xff]
        %v471 = vld [vmem:[#allocation8 + $0x80] sm:$0xff]
        %v472 = vld [vmem:[#allocation8 + $0x88] sm:$0xf]
        %v473 = vld [vmem:[#allocation8 + $0x8c] sm:$0xff]
        %v474 = vld [vmem:[#allocation8 + $0x94] sm:$0xff]
        %v475 = vld [vmem:[#allocation8 + $0x9c] sm:$0xff]
        %v476 = vld [vmem:[#allocation8 + $0xa4] sm:$0xf]
        %v477 = vld [vmem:[#allocation8 + $0xa8] sm:$0xff]
        %v478 = vld [vmem:[#allocation8 + $0xb0] sm:$0xff]
        %v479 = vld [vmem:[#allocation8 + $0xb8] sm:$0xff]
        %v480 = vld [vmem:[#allocation8 + $0xc0] sm:$0xf]
        %v481 = vld [vmem:[#allocation8 + $0xc4] sm:$0xff]
        %v482 = vld [vmem:[#allocation8 + $0xcc] sm:$0xff]
        %v483 = vld [vmem:[#allocation8 + $0xd4] sm:$0xff]
        %v484 = vld [vmem:[#allocation8 + $0xdc] sm:$0xf]
        %v485 = vld [vmem:[#allocation8 + $0xe0] sm:$0xff]
        %v486 = vld [vmem:[#allocation8 + $0xe8] sm:$0xff]
        %v487 = vld [vmem:[#allocation8 + $0xf0] sm:$0xff]
        %v488 = vld [vmem:[#allocation8 + $0xf8] sm:$0xf]
        %v489 = vld [vmem:[#allocation8 + $0xfc] sm:$0xff]
        %v490 = vld [vmem:[#allocation8 + $0x104] sm:$0xff]
        %v491 = vld [vmem:[#allocation8 + $0x10c] sm:$0xff]
        %v492 = vld [vmem:[#allocation8 + $0x114] sm:$0xf]
        %v493 = vld [vmem:[#allocation8 + $0x118] sm:$0xff]
        %v494 = vld [vmem:[#allocation8 + $0x120] sm:$0xff]
        %v495 = vld [vmem:[#allocation8 + $0x128] sm:$0xff]
        %v496 = vld [vmem:[#allocation8 + $0x130] sm:$0xf]
        %v497 = vld [vmem:[#allocation8 + $0x134] sm:$0xff]
        %v498 = vld [vmem:[#allocation8 + $0x13c] sm:$0xff]
        %v499 = vld [vmem:[#allocation8 + $0x144] sm:$0xff]
        %v500 = vld [vmem:[#allocation8 + $0x14c] sm:$0xf]
        %v501 = vld [vmem:[#allocation8 + $0x150] sm:$0xff]
        %v502 = vld [vmem:[#allocation8 + $0x158] sm:$0xff]
        %v503 = vld [vmem:[#allocation8 + $0x160] sm:$0xff]
        %v504 = vld [vmem:[#allocation8 + $0x168] sm:$0xf]
        %v505 = vld [vmem:[#allocation8 + $0x16c] sm:$0xff]
        %v506 = vld [vmem:[#allocation8 + $0x174] sm:$0xff]
        %v507 = vld [vmem:[#allocation8 + $0x17c] sm:$0xff]
        %v508 = vld [vmem:[#allocation8 + $0x184] sm:$0xf]
        %v509 = vld [vmem:[#allocation8 + $0x188] sm:$0xff]
        %v510 = vld [vmem:[#allocation8 + $0x190] sm:$0xff]
        %v511 = vld [vmem:[#allocation8 + $0x198] sm:$0xff]
        %v512 = vld [vmem:[#allocation8 + $0x1a0] sm:$0xf]
        %v513 = vld [vmem:[#allocation8 + $0x1a4] sm:$0xff]
        %v514 = vld [vmem:[#allocation8 + $0x1ac] sm:$0xff]
        %v515 = vld [vmem:[#allocation8 + $0x1b4] sm:$0xff]
        %v516 = vld [vmem:[#allocation8 + $0x1bc] sm:$0xf]
        %v517 = vld [vmem:[#allocation8 + $0x1c0] sm:$0xff]
        %v518 = vld [vmem:[#allocation8 + $0x1c8] sm:$0xff]
        %v519 = vld [vmem:[#allocation8 + $0x1d0] sm:$0xff]
        %v520 = vld [vmem:[#allocation8 + $0x1d8] sm:$0xf]
        %v521 = vld [vmem:[#allocation8 + $0x1dc] sm:$0xff]
        %v522 = vld [vmem:[#allocation8 + $0x1e4] sm:$0xff]
        %v523 = vld [vmem:[#allocation8 + $0x1ec] sm:$0xff]
        %v524 = vld [vmem:[#allocation8 + $0x1f4] sm:$0xf]
        %v525 = vld [vmem:[#allocation8 + $0x1f8] sm:$0xff]
        %v526 = vld [vmem:[#allocation8 + $0x200] sm:$0xff]
        %v527 = vld [vmem:[#allocation8 + $0x208] sm:$0xff]
        %v528 = vld [vmem:[#allocation8 + $0x210] sm:$0xf]
        %v529 = vld [vmem:[#allocation8 + $0x214] sm:$0xff]
        %v530 = vld [vmem:[#allocation8 + $0x21c] sm:$0xff]
        %v531 = vld [vmem:[#allocation8 + $0x224] sm:$0xff]
        %v532 = vld [vmem:[#allocation8 + $0x22c] sm:$0xf]
        %v533 = vld [vmem:[#allocation8 + $0x230] sm:$0xff]
        %v534 = vld [vmem:[#allocation8 + $0x238] sm:$0xff]
        %v535 = vld [vmem:[#allocation8 + $0x240] sm:$0xff]
        %v536 = vld [vmem:[#allocation8 + $0x248] sm:$0xf]
        %v537 = vld [vmem:[#allocation8 + $0x24c] sm:$0xff]
        %v538 = vld [vmem:[#allocation8 + $0x254] sm:$0xff]
        %v539 = vld [vmem:[#allocation8 + $0x25c] sm:$0xff]
        %v540 = vld [vmem:[#allocation8 + $0x264] sm:$0xf]
        %v541 = vld [vmem:[#allocation8 + $0x268] sm:$0xff]
        %v542 = vld [vmem:[#allocation8 + $0x270] sm:$0xff]
        %v543 = vld [vmem:[#allocation8 + $0x278] sm:$0xff]
        %v544 = vld [vmem:[#allocation8 + $0x280] sm:$0xf]
        %v545 = vld [vmem:[#allocation8 + $0x284] sm:$0xff]
        %v546 = vld [vmem:[#allocation8 + $0x28c] sm:$0xff]
        %v547 = vld [vmem:[#allocation8 + $0x294] sm:$0xff]
        %v548 = vld [vmem:[#allocation8 + $0x29c] sm:$0xf]
        %v549 = vld [vmem:[#allocation8 + $0x2a0] sm:$0xff]
        %v550 = vld [vmem:[#allocation8 + $0x2a8] sm:$0xff]
        %v551 = vld [vmem:[#allocation8 + $0x2b0] sm:$0xff]
        %v552 = vld [vmem:[#allocation8 + $0x2b8] sm:$0xf]
        %v553 = vld [vmem:[#allocation8 + $0x2bc] sm:$0xff]
        %v554 = vld [vmem:[#allocation8 + $0x2c4] sm:$0xff]
        %v555 = vld [vmem:[#allocation8 + $0x2cc] sm:$0xff]
        %v556 = vld [vmem:[#allocation8 + $0x2d4] sm:$0xf]
        %v557 = vld [vmem:[#allocation8 + $0x2d8] sm:$0xff]
        %v558 = vld [vmem:[#allocation8 + $0x2e0] sm:$0xff]
        %v559 = vld [vmem:[#allocation8 + $0x2e8] sm:$0xff]
        %v560 = vld [vmem:[#allocation8 + $0x2f0] sm:$0xf]
        %v561 = vld [vmem:[#allocation8 + $0x2f4] sm:$0xff]
        %v562 = vld [vmem:[#allocation8 + $0x2fc] sm:$0xff]
        %v563 = vld [vmem:[#allocation8 + $0x304] sm:$0xff]
        %v564 = vld [vmem:[#allocation8 + $0x30c] sm:$0xf]
        %v565 = vld [vmem:[#allocation8 + $0x310] sm:$0xff]
        %v566 = vld [vmem:[#allocation8 + $0x318] sm:$0xff]
        %v567 = vld [vmem:[#allocation8 + $0x320] sm:$0xff]
        %v568 = vld [vmem:[#allocation8 + $0x328] sm:$0xf]
        %v569 = vld [vmem:[#allocation8 + $0x32c] sm:$0xff]
        %v570 = vld [vmem:[#allocation8 + $0x334] sm:$0xff]
        %v571 = vld [vmem:[#allocation8 + $0x33c] sm:$0xff]
        %v572 = vld [vmem:[#allocation8 + $0x344] sm:$0xf]
        %v573 = vld [vmem:[#allocation8 + $0x348] sm:$0xff]
        %v574 = vld [vmem:[#allocation8 + $0x350] sm:$0xff]
        %v575 = vld [vmem:[#allocation8 + $0x358] sm:$0xff]
        %v576 = vld [vmem:[#allocation8 + $0x360] sm:$0xf]
        %v577 = vld [vmem:[#allocation8 + $0x364] sm:$0xff]
        %v578 = vld [vmem:[#allocation8 + $0x36c] sm:$0xff]
        %v579 = vld [vmem:[#allocation8 + $0x374] sm:$0xff]
        %v580 = vld [vmem:[#allocation8 + $0x37c] sm:$0xf]
        %v709 = vunpack.c.l.b16 %v453
        %v710 = vunpack.c.h.b16 %v453
        %v711 = vunpack.c.l.b16 %v454
        %v712 = vunpack.c.h.b16 %v454
        %v713 = vunpack.c.l.b16 %v455
        %v714 = vunpack.c.h.b16 %v455
        %v715 = vunpack.c.l.b16 %v456
        %v716 = vunpack.c.l.b16 %v457
        %v717 = vunpack.c.h.b16 %v457
        %v718 = vunpack.c.l.b16 %v458
        %v719 = vunpack.c.h.b16 %v458
        %v720 = vunpack.c.l.b16 %v459
        %v721 = vunpack.c.h.b16 %v459
        %v722 = vunpack.c.l.b16 %v460
        %v723 = vunpack.c.l.b16 %v461
        %v724 = vunpack.c.h.b16 %v461
        %v725 = vunpack.c.l.b16 %v462
        %v726 = vunpack.c.h.b16 %v462
        %v727 = vunpack.c.l.b16 %v463
        %v728 = vunpack.c.h.b16 %v463
        %v729 = vunpack.c.l.b16 %v464
        %v730 = vunpack.c.l.b16 %v465
        %v731 = vunpack.c.h.b16 %v465
        %v732 = vunpack.c.l.b16 %v466
        %v733 = vunpack.c.h.b16 %v466
        %v734 = vunpack.c.l.b16 %v467
        %v735 = vunpack.c.h.b16 %v467
        %v736 = vunpack.c.l.b16 %v468
        %v737 = vunpack.c.l.b16 %v469
        %v738 = vunpack.c.h.b16 %v469
        %v739 = vunpack.c.l.b16 %v470
        %v740 = vunpack.c.h.b16 %v470
        %v741 = vunpack.c.l.b16 %v471
        %v742 = vunpack.c.h.b16 %v471
        %v743 = vunpack.c.l.b16 %v472
        %v744 = vunpack.c.l.b16 %v473
        %v745 = vunpack.c.h.b16 %v473
        %v746 = vunpack.c.l.b16 %v474
        %v747 = vunpack.c.h.b16 %v474
        %v748 = vunpack.c.l.b16 %v475
        %v749 = vunpack.c.h.b16 %v475
        %v750 = vunpack.c.l.b16 %v476
        %v751 = vunpack.c.l.b16 %v477
        %v752 = vunpack.c.h.b16 %v477
        %v753 = vunpack.c.l.b16 %v478
        %v754 = vunpack.c.h.b16 %v478
        %v755 = vunpack.c.l.b16 %v479
        %v756 = vunpack.c.h.b16 %v479
        %v757 = vunpack.c.l.b16 %v480
        %v758 = vunpack.c.l.b16 %v481
        %v759 = vunpack.c.h.b16 %v481
        %v760 = vunpack.c.l.b16 %v482
        %v761 = vunpack.c.h.b16 %v482
        %v762 = vunpack.c.l.b16 %v483
        %v763 = vunpack.c.h.b16 %v483
        %v764 = vunpack.c.l.b16 %v484
        %v765 = vunpack.c.l.b16 %v485
        %v766 = vunpack.c.h.b16 %v485
        %v767 = vunpack.c.l.b16 %v486
        %v768 = vunpack.c.h.b16 %v486
        %v769 = vunpack.c.l.b16 %v487
        %v770 = vunpack.c.h.b16 %v487
        %v771 = vunpack.c.l.b16 %v488
        %v772 = vunpack.c.l.b16 %v489
        %v773 = vunpack.c.h.b16 %v489
        %v774 = vunpack.c.l.b16 %v490
        %v775 = vunpack.c.h.b16 %v490
        %v776 = vunpack.c.l.b16 %v491
        %v777 = vunpack.c.h.b16 %v491
        %v778 = vunpack.c.l.b16 %v492
        %v779 = vunpack.c.l.b16 %v493
        %v780 = vunpack.c.h.b16 %v493
        %v781 = vunpack.c.l.b16 %v494
        %v782 = vunpack.c.h.b16 %v494
        %v783 = vunpack.c.l.b16 %v495
        %v784 = vunpack.c.h.b16 %v495
        %v785 = vunpack.c.l.b16 %v496
        %v786 = vunpack.c.l.b16 %v497
        %v787 = vunpack.c.h.b16 %v497
        %v788 = vunpack.c.l.b16 %v498
        %v789 = vunpack.c.h.b16 %v498
        %v790 = vunpack.c.l.b16 %v499
        %v791 = vunpack.c.h.b16 %v499
        %v792 = vunpack.c.l.b16 %v500
        %v793 = vunpack.c.l.b16 %v501
        %v794 = vunpack.c.h.b16 %v501
        %v795 = vunpack.c.l.b16 %v502
        %v796 = vunpack.c.h.b16 %v502
        %v797 = vunpack.c.l.b16 %v503
        %v798 = vunpack.c.h.b16 %v503
        %v799 = vunpack.c.l.b16 %v504
        %v800 = vunpack.c.l.b16 %v505
        %v801 = vunpack.c.h.b16 %v505
        %v802 = vunpack.c.l.b16 %v506
        %v803 = vunpack.c.h.b16 %v506
        %v804 = vunpack.c.l.b16 %v507
        %v805 = vunpack.c.h.b16 %v507
        %v806 = vunpack.c.l.b16 %v508
        %v807 = vunpack.c.l.b16 %v509
        %v808 = vunpack.c.h.b16 %v509
        %v809 = vunpack.c.l.b16 %v510
        %v810 = vunpack.c.h.b16 %v510
        %v811 = vunpack.c.l.b16 %v511
        %v812 = vunpack.c.h.b16 %v511
        %v813 = vunpack.c.l.b16 %v512
        %v814 = vunpack.c.l.b16 %v513
        %v815 = vunpack.c.h.b16 %v513
        %v816 = vunpack.c.l.b16 %v514
        %v817 = vunpack.c.h.b16 %v514
        %v818 = vunpack.c.l.b16 %v515
        %v819 = vunpack.c.h.b16 %v515
        %v820 = vunpack.c.l.b16 %v516
        %v821 = vunpack.c.l.b16 %v517
        %v822 = vunpack.c.h.b16 %v517
        %v823 = vunpack.c.l.b16 %v518
        %v824 = vunpack.c.h.b16 %v518
        %v825 = vunpack.c.l.b16 %v519
        %v826 = vunpack.c.h.b16 %v519
        %v827 = vunpack.c.l.b16 %v520
        %v828 = vunpack.c.l.b16 %v521
        %v829 = vunpack.c.h.b16 %v521
        %v830 = vunpack.c.l.b16 %v522
        %v831 = vunpack.c.h.b16 %v522
        %v832 = vunpack.c.l.b16 %v523
        %v833 = vunpack.c.h.b16 %v523
        %v834 = vunpack.c.l.b16 %v524
        %v835 = vunpack.c.l.b16 %v525
        %v836 = vunpack.c.h.b16 %v525
        %v837 = vunpack.c.l.b16 %v526
        %v838 = vunpack.c.h.b16 %v526
        %v839 = vunpack.c.l.b16 %v527
        %v840 = vunpack.c.h.b16 %v527
        %v841 = vunpack.c.l.b16 %v528
        %v842 = vunpack.c.l.b16 %v529
        %v843 = vunpack.c.h.b16 %v529
        %v844 = vunpack.c.l.b16 %v530
        %v845 = vunpack.c.h.b16 %v530
        %v846 = vunpack.c.l.b16 %v531
        %v847 = vunpack.c.h.b16 %v531
        %v848 = vunpack.c.l.b16 %v532
        %v849 = vunpack.c.l.b16 %v533
        %v850 = vunpack.c.h.b16 %v533
        %v851 = vunpack.c.l.b16 %v534
        %v852 = vunpack.c.h.b16 %v534
        %v853 = vunpack.c.l.b16 %v535
        %v854 = vunpack.c.h.b16 %v535
        %v855 = vunpack.c.l.b16 %v536
        %v856 = vunpack.c.l.b16 %v537
        %v857 = vunpack.c.h.b16 %v537
        %v858 = vunpack.c.l.b16 %v538
        %v859 = vunpack.c.h.b16 %v538
        %v860 = vunpack.c.l.b16 %v539
        %v861 = vunpack.c.h.b16 %v539
        %v862 = vunpack.c.l.b16 %v540
        %v863 = vunpack.c.l.b16 %v541
        %v864 = vunpack.c.h.b16 %v541
        %v865 = vunpack.c.l.b16 %v542
        %v866 = vunpack.c.h.b16 %v542
        %v867 = vunpack.c.l.b16 %v543
        %v868 = vunpack.c.h.b16 %v543
        %v869 = vunpack.c.l.b16 %v544
        %v870 = vunpack.c.l.b16 %v545
        %v871 = vunpack.c.h.b16 %v545
        %v872 = vunpack.c.l.b16 %v546
        %v873 = vunpack.c.h.b16 %v546
        %v874 = vunpack.c.l.b16 %v547
        %v875 = vunpack.c.h.b16 %v547
        %v876 = vunpack.c.l.b16 %v548
        %v877 = vunpack.c.l.b16 %v549
        %v878 = vunpack.c.h.b16 %v549
        %v879 = vunpack.c.l.b16 %v550
        %v880 = vunpack.c.h.b16 %v550
        %v881 = vunpack.c.l.b16 %v551
        %v882 = vunpack.c.h.b16 %v551
        %v883 = vunpack.c.l.b16 %v552
        %v884 = vunpack.c.l.b16 %v553
        %v885 = vunpack.c.h.b16 %v553
        %v886 = vunpack.c.l.b16 %v554
        %v887 = vunpack.c.h.b16 %v554
        %v888 = vunpack.c.l.b16 %v555
        %v889 = vunpack.c.h.b16 %v555
        %v890 = vunpack.c.l.b16 %v556
        %v891 = vunpack.c.l.b16 %v557
        %v892 = vunpack.c.h.b16 %v557
        %v893 = vunpack.c.l.b16 %v558
        %v894 = vunpack.c.h.b16 %v558
        %v895 = vunpack.c.l.b16 %v559
        %v896 = vunpack.c.h.b16 %v559
        %v897 = vunpack.c.l.b16 %v560
        %v898 = vunpack.c.l.b16 %v561
        %v899 = vunpack.c.h.b16 %v561
        %v900 = vunpack.c.l.b16 %v562
        %v901 = vunpack.c.h.b16 %v562
        %v902 = vunpack.c.l.b16 %v563
        %v903 = vunpack.c.h.b16 %v563
        %v904 = vunpack.c.l.b16 %v564
        %v905 = vunpack.c.l.b16 %v565
        %v906 = vunpack.c.h.b16 %v565
        %v907 = vunpack.c.l.b16 %v566
        %v908 = vunpack.c.h.b16 %v566
        %v909 = vunpack.c.l.b16 %v567
        %v910 = vunpack.c.h.b16 %v567
        %v911 = vunpack.c.l.b16 %v568
        %v912 = vunpack.c.l.b16 %v569
        %v913 = vunpack.c.h.b16 %v569
        %v914 = vunpack.c.l.b16 %v570
        %v915 = vunpack.c.h.b16 %v570
        %v916 = vunpack.c.l.b16 %v571
        %v917 = vunpack.c.h.b16 %v571
        %v918 = vunpack.c.l.b16 %v572
        %v919 = vunpack.c.l.b16 %v573
        %v920 = vunpack.c.h.b16 %v573
        %v921 = vunpack.c.l.b16 %v574
        %v922 = vunpack.c.h.b16 %v574
        %v923 = vunpack.c.l.b16 %v575
        %v924 = vunpack.c.h.b16 %v575
        %v925 = vunpack.c.l.b16 %v576
        %v926 = vunpack.c.l.b16 %v577
        %v927 = vunpack.c.h.b16 %v577
        %v928 = vunpack.c.l.b16 %v578
        %v929 = vunpack.c.h.b16 %v578
        %v930 = vunpack.c.l.b16 %v579
        %v931 = vunpack.c.h.b16 %v579
        %v932 = vunpack.c.l.b16 %v580
        %v933 = vpack.c.b16 %v716, %v709
        %v934 = vpack.c.b16 %v717, %v710
        %v935 = vpack.c.b16 %v718, %v711
        %v936 = vpack.c.b16 %v719, %v712
        %v937 = vpack.c.b16 %v720, %v713
        %v938 = vpack.c.b16 %v721, %v714
        %v939 = vpack.c.b16 %v722, %v715
        %v940 = vpack.c.b16 %v730, %v723
        %v941 = vpack.c.b16 %v731, %v724
        %v942 = vpack.c.b16 %v732, %v725
        %v943 = vpack.c.b16 %v733, %v726
        %v944 = vpack.c.b16 %v734, %v727
        %v945 = vpack.c.b16 %v735, %v728
        %v946 = vpack.c.b16 %v736, %v729
        %v947 = vpack.c.b16 %v744, %v737
        %v948 = vpack.c.b16 %v745, %v738
        %v949 = vpack.c.b16 %v746, %v739
        %v950 = vpack.c.b16 %v747, %v740
        %v951 = vpack.c.b16 %v748, %v741
        %v952 = vpack.c.b16 %v749, %v742
        %v953 = vpack.c.b16 %v750, %v743
        %v954 = vpack.c.b16 %v758, %v751
        %v955 = vpack.c.b16 %v759, %v752
        %v956 = vpack.c.b16 %v760, %v753
        %v957 = vpack.c.b16 %v761, %v754
        %v958 = vpack.c.b16 %v762, %v755
        %v959 = vpack.c.b16 %v763, %v756
        %v960 = vpack.c.b16 %v764, %v757
        %v961 = vpack.c.b16 %v772, %v765
        %v962 = vpack.c.b16 %v773, %v766
        %v963 = vpack.c.b16 %v774, %v767
        %v964 = vpack.c.b16 %v775, %v768
        %v965 = vpack.c.b16 %v776, %v769
        %v966 = vpack.c.b16 %v777, %v770
        %v967 = vpack.c.b16 %v778, %v771
        %v968 = vpack.c.b16 %v786, %v779
        %v969 = vpack.c.b16 %v787, %v780
        %v970 = vpack.c.b16 %v788, %v781
        %v971 = vpack.c.b16 %v789, %v782
        %v972 = vpack.c.b16 %v790, %v783
        %v973 = vpack.c.b16 %v791, %v784
        %v974 = vpack.c.b16 %v792, %v785
        %v975 = vpack.c.b16 %v800, %v793
        %v976 = vpack.c.b16 %v801, %v794
        %v977 = vpack.c.b16 %v802, %v795
        %v978 = vpack.c.b16 %v803, %v796
        %v979 = vpack.c.b16 %v804, %v797
        %v980 = vpack.c.b16 %v805, %v798
        %v981 = vpack.c.b16 %v806, %v799
        %v982 = vpack.c.b16 %v814, %v807
        %v983 = vpack.c.b16 %v815, %v808
        %v984 = vpack.c.b16 %v816, %v809
        %v985 = vpack.c.b16 %v817, %v810
        %v986 = vpack.c.b16 %v818, %v811
        %v987 = vpack.c.b16 %v819, %v812
        %v988 = vpack.c.b16 %v820, %v813
        %v989 = vpack.c.b16 %v828, %v821
        %v990 = vpack.c.b16 %v829, %v822
        %v991 = vpack.c.b16 %v830, %v823
        %v992 = vpack.c.b16 %v831, %v824
        %v993 = vpack.c.b16 %v832, %v825
        %v994 = vpack.c.b16 %v833, %v826
        %v995 = vpack.c.b16 %v834, %v827
        %v996 = vpack.c.b16 %v842, %v835
        %v997 = vpack.c.b16 %v843, %v836
        %v998 = vpack.c.b16 %v844, %v837
        %v999 = vpack.c.b16 %v845, %v838
        %v1000 = vpack.c.b16 %v846, %v839
        %v1001 = vpack.c.b16 %v847, %v840
        %v1002 = vpack.c.b16 %v848, %v841
        %v1003 = vpack.c.b16 %v856, %v849
        %v1004 = vpack.c.b16 %v857, %v850
        %v1005 = vpack.c.b16 %v858, %v851
        %v1006 = vpack.c.b16 %v859, %v852
        %v1007 = vpack.c.b16 %v860, %v853
        %v1008 = vpack.c.b16 %v861, %v854
        %v1009 = vpack.c.b16 %v862, %v855
        %v1010 = vpack.c.b16 %v870, %v863
        %v1011 = vpack.c.b16 %v871, %v864
        %v1012 = vpack.c.b16 %v872, %v865
        %v1013 = vpack.c.b16 %v873, %v866
        %v1014 = vpack.c.b16 %v874, %v867
        %v1015 = vpack.c.b16 %v875, %v868
        %v1016 = vpack.c.b16 %v876, %v869
        %v1017 = vpack.c.b16 %v884, %v877
        %v1018 = vpack.c.b16 %v885, %v878
        %v1019 = vpack.c.b16 %v886, %v879
        %v1020 = vpack.c.b16 %v887, %v880
        %v1021 = vpack.c.b16 %v888, %v881
        %v1022 = vpack.c.b16 %v889, %v882
        %v1023 = vpack.c.b16 %v890, %v883
        %v1024 = vpack.c.b16 %v898, %v891
        %v1025 = vpack.c.b16 %v899, %v892
        %v1026 = vpack.c.b16 %v900, %v893
        %v1027 = vpack.c.b16 %v901, %v894
        %v1028 = vpack.c.b16 %v902, %v895
        %v1029 = vpack.c.b16 %v903, %v896
        %v1030 = vpack.c.b16 %v904, %v897
        %v1031 = vpack.c.b16 %v912, %v905
        %v1032 = vpack.c.b16 %v913, %v906
        %v1033 = vpack.c.b16 %v914, %v907
        %v1034 = vpack.c.b16 %v915, %v908
        %v1035 = vpack.c.b16 %v916, %v909
        %v1036 = vpack.c.b16 %v917, %v910
        %v1037 = vpack.c.b16 %v918, %v911
        %v1038 = vpack.c.b16 %v926, %v919
        %v1039 = vpack.c.b16 %v927, %v920
        %v1040 = vpack.c.b16 %v928, %v921
        %v1041 = vpack.c.b16 %v929, %v922
        %v1042 = vpack.c.b16 %v930, %v923
        %v1043 = vpack.c.b16 %v931, %v924
        %v1044 = vpack.c.b16 %v932, %v925
        %1157 = vmatpush.bf16.msra.mxu0 %v982
        %1158 = vmatpush.bf16.msra.mxu0 %v975
        %1159 = vmatpush.bf16.msra.mxu0 %v968
        %1160 = vmatpush.bf16.msra.mxu0 %v961
        %1161 = vmatpush.bf16.msra.mxu0 %v954
        %1162 = vmatpush.bf16.msra.mxu0 %v947
        %1163 = vmatpush.bf16.msra.mxu0 %v940
        %1164 = vmatpush.bf16.msra.mxu0 %v933
        %1165 = vmatmul.bf16.gmra.mxu0 %v451
        %v1166 = vpop.f32.mrf.mxu0
        %v1167 = vadd.f32 0.0, %v1166
        %v1168 = vpop.f32.mrf.mxu0
        %v1169 = vadd.f32 0.0, %v1168
        %1170 = vdwg.mxu0
        %1171 = vmatpush.bf16.msra.mxu0 %v1038
        %1172 = vmatpush.bf16.msra.mxu0 %v1031
        %1173 = vmatpush.bf16.msra.mxu0 %v1024
        %1174 = vmatpush.bf16.msra.mxu0 %v1017
        %1175 = vmatpush.bf16.msra.mxu0 %v1010
        %1176 = vmatpush.bf16.msra.mxu0 %v1003
        %1177 = vmatpush.bf16.msra.mxu0 %v996
        %1178 = vmatpush.bf16.msra.mxu0 %v989
        %1179 = vmatmul.bf16.gmra.mxu0 %v452
        %v1180 = vpop.f32.mrf.mxu0
        %v1181 = vadd.f32 %v1167, %v1180
        %v1182 = vpop.f32.mrf.mxu0
        %v1183 = vadd.f32 %v1169, %v1182
        %1184 = vdwg.mxu0
        %1185 = vmatpush.bf16.msra.mxu0 %v983
        %1186 = vmatpush.bf16.msra.mxu0 %v976
        %1187 = vmatpush.bf16.msra.mxu0 %v969
        %1188 = vmatpush.bf16.msra.mxu0 %v962
        %1189 = vmatpush.bf16.msra.mxu0 %v955
        %1190 = vmatpush.bf16.msra.mxu0 %v948
        %1191 = vmatpush.bf16.msra.mxu0 %v941
        %1192 = vmatpush.bf16.msra.mxu0 %v934
        %1193 = vmatmul.bf16.gmra.mxu0 %v451
        %v1194 = vpop.f32.mrf.mxu0
        %v1195 = vadd.f32 0.0, %v1194
        %v1196 = vpop.f32.mrf.mxu0
        %v1197 = vadd.f32 0.0, %v1196
        %1198 = vdwg.mxu0
        %1199 = vmatpush.bf16.msra.mxu0 %v1039
        %1200 = vmatpush.bf16.msra.mxu0 %v1032
        %1201 = vmatpush.bf16.msra.mxu0 %v1025
        %1202 = vmatpush.bf16.msra.mxu0 %v1018
        %1203 = vmatpush.bf16.msra.mxu0 %v1011
        %1204 = vmatpush.bf16.msra.mxu0 %v1004
        %1205 = vmatpush.bf16.msra.mxu0 %v997
        %1206 = vmatpush.bf16.msra.mxu0 %v990
        %1207 = vmatmul.bf16.gmra.mxu0 %v452
        %v1208 = vpop.f32.mrf.mxu0
        %v1209 = vadd.f32 %v1195, %v1208
        %v1210 = vpop.f32.mrf.mxu0
        %v1211 = vadd.f32 %v1197, %v1210
        %1212 = vdwg.mxu0
        %1213 = vmatpush.bf16.msra.mxu0 %v984
        %1214 = vmatpush.bf16.msra.mxu0 %v977
        %1215 = vmatpush.bf16.msra.mxu0 %v970
        %1216 = vmatpush.bf16.msra.mxu0 %v963
        %1217 = vmatpush.bf16.msra.mxu0 %v956
        %1218 = vmatpush.bf16.msra.mxu0 %v949
        %1219 = vmatpush.bf16.msra.mxu0 %v942
        %1220 = vmatpush.bf16.msra.mxu0 %v935
        %1221 = vmatmul.bf16.gmra.mxu0 %v451
        %v1222 = vpop.f32.mrf.mxu0
        %v1223 = vadd.f32 0.0, %v1222
        %v1224 = vpop.f32.mrf.mxu0
        %v1225 = vadd.f32 0.0, %v1224
        %1226 = vdwg.mxu0
        %1227 = vmatpush.bf16.msra.mxu0 %v1040
        %1228 = vmatpush.bf16.msra.mxu0 %v1033
        %1229 = vmatpush.bf16.msra.mxu0 %v1026
        %1230 = vmatpush.bf16.msra.mxu0 %v1019
        %1231 = vmatpush.bf16.msra.mxu0 %v1012
        %1232 = vmatpush.bf16.msra.mxu0 %v1005
        %1233 = vmatpush.bf16.msra.mxu0 %v998
        %1234 = vmatpush.bf16.msra.mxu0 %v991
        %1235 = vmatmul.bf16.gmra.mxu0 %v452
        %v1236 = vpop.f32.mrf.mxu0
        %v1237 = vadd.f32 %v1223, %v1236
        %v1238 = vpop.f32.mrf.mxu0
        %v1239 = vadd.f32 %v1225, %v1238
        %1240 = vdwg.mxu0
        %1241 = vmatpush.bf16.msra.mxu0 %v985
        %1242 = vmatpush.bf16.msra.mxu0 %v978
        %1243 = vmatpush.bf16.msra.mxu0 %v971
        %1244 = vmatpush.bf16.msra.mxu0 %v964
        %1245 = vmatpush.bf16.msra.mxu0 %v957
        %1246 = vmatpush.bf16.msra.mxu0 %v950
        %1247 = vmatpush.bf16.msra.mxu0 %v943
        %1248 = vmatpush.bf16.msra.mxu0 %v936
        %1249 = vmatmul.bf16.gmra.mxu0 %v451
        %v1250 = vpop.f32.mrf.mxu0
        %v1251 = vadd.f32 0.0, %v1250
        %v1252 = vpop.f32.mrf.mxu0
        %v1253 = vadd.f32 0.0, %v1252
        %1254 = vdwg.mxu0
        %1255 = vmatpush.bf16.msra.mxu0 %v1041
        %1256 = vmatpush.bf16.msra.mxu0 %v1034
        %1257 = vmatpush.bf16.msra.mxu0 %v1027
        %1258 = vmatpush.bf16.msra.mxu0 %v1020
        %1259 = vmatpush.bf16.msra.mxu0 %v1013
        %1260 = vmatpush.bf16.msra.mxu0 %v1006
        %1261 = vmatpush.bf16.msra.mxu0 %v999
        %1262 = vmatpush.bf16.msra.mxu0 %v992
        %1263 = vmatmul.bf16.gmra.mxu0 %v452
        %v1264 = vpop.f32.mrf.mxu0
        %v1265 = vadd.f32 %v1251, %v1264
        %v1266 = vpop.f32.mrf.mxu0
        %v1267 = vadd.f32 %v1253, %v1266
        %1268 = vdwg.mxu0
        %1269 = vmatpush.bf16.msra.mxu0 %v986
        %1270 = vmatpush.bf16.msra.mxu0 %v979
        %1271 = vmatpush.bf16.msra.mxu0 %v972
        %1272 = vmatpush.bf16.msra.mxu0 %v965
        %1273 = vmatpush.bf16.msra.mxu0 %v958
        %1274 = vmatpush.bf16.msra.mxu0 %v951
        %1275 = vmatpush.bf16.msra.mxu0 %v944
        %1276 = vmatpush.bf16.msra.mxu0 %v937
        %1277 = vmatmul.bf16.gmra.mxu0 %v451
        %v1278 = vpop.f32.mrf.mxu0
        %v1279 = vadd.f32 0.0, %v1278
        %v1280 = vpop.f32.mrf.mxu0
        %v1281 = vadd.f32 0.0, %v1280
        %1282 = vdwg.mxu0
        %1283 = vmatpush.bf16.msra.mxu0 %v1042
        %1284 = vmatpush.bf16.msra.mxu0 %v1035
        %1285 = vmatpush.bf16.msra.mxu0 %v1028
        %1286 = vmatpush.bf16.msra.mxu0 %v1021
        %1287 = vmatpush.bf16.msra.mxu0 %v1014
        %1288 = vmatpush.bf16.msra.mxu0 %v1007
        %1289 = vmatpush.bf16.msra.mxu0 %v1000
        %1290 = vmatpush.bf16.msra.mxu0 %v993
        %1291 = vmatmul.bf16.gmra.mxu0 %v452
        %v1292 = vpop.f32.mrf.mxu0
        %v1293 = vadd.f32 %v1279, %v1292
        %v1294 = vpop.f32.mrf.mxu0
        %v1295 = vadd.f32 %v1281, %v1294
        %1296 = vdwg.mxu0
        %1297 = vmatpush.bf16.msra.mxu0 %v987
        %1298 = vmatpush.bf16.msra.mxu0 %v980
        %1299 = vmatpush.bf16.msra.mxu0 %v973
        %1300 = vmatpush.bf16.msra.mxu0 %v966
        %1301 = vmatpush.bf16.msra.mxu0 %v959
        %1302 = vmatpush.bf16.msra.mxu0 %v952
        %1303 = vmatpush.bf16.msra.mxu0 %v945
        %1304 = vmatpush.bf16.msra.mxu0 %v938
        %1305 = vmatmul.bf16.gmra.mxu0 %v451
        %v1306 = vpop.f32.mrf.mxu0
        %v1307 = vadd.f32 0.0, %v1306
        %v1308 = vpop.f32.mrf.mxu0
        %v1309 = vadd.f32 0.0, %v1308
        %1310 = vdwg.mxu0
        %1311 = vmatpush.bf16.msra.mxu0 %v1043
        %1312 = vmatpush.bf16.msra.mxu0 %v1036
        %1313 = vmatpush.bf16.msra.mxu0 %v1029
        %1314 = vmatpush.bf16.msra.mxu0 %v1022
        %1315 = vmatpush.bf16.msra.mxu0 %v1015
        %1316 = vmatpush.bf16.msra.mxu0 %v1008
        %1317 = vmatpush.bf16.msra.mxu0 %v1001
        %1318 = vmatpush.bf16.msra.mxu0 %v994
        %1319 = vmatmul.bf16.gmra.mxu0 %v452
        %v1320 = vpop.f32.mrf.mxu0
        %v1321 = vadd.f32 %v1307, %v1320
        %v1322 = vpop.f32.mrf.mxu0
        %v1323 = vadd.f32 %v1309, %v1322
        %1324 = vdwg.mxu0
        %1325 = vmatpush.bf16.msra.mxu0 %v988
        %1326 = vmatpush.bf16.msra.mxu0 %v981
        %1327 = vmatpush.bf16.msra.mxu0 %v974
        %1328 = vmatpush.bf16.msra.mxu0 %v967
        %1329 = vmatpush.bf16.msra.mxu0 %v960
        %1330 = vmatpush.bf16.msra.mxu0 %v953
        %1331 = vmatpush.bf16.msra.mxu0 %v946
        %1332 = vmatpush.bf16.msra.mxu0 %v939
        %1333 = vmatmul.bf16.gmra.mxu0 %v451
        %v1334 = vpop.f32.mrf.mxu0
        %v1335 = vadd.f32 0.0, %v1334
        %v1336 = vpop.f32.mrf.mxu0
        %v1337 = vadd.f32 0.0, %v1336
        %1338 = vdwg.mxu0
        %1339 = vmatpush.bf16.msra.mxu0 %v1044
        %1340 = vmatpush.bf16.msra.mxu0 %v1037
        %1341 = vmatpush.bf16.msra.mxu0 %v1030
        %1342 = vmatpush.bf16.msra.mxu0 %v1023
        %1343 = vmatpush.bf16.msra.mxu0 %v1016
        %1344 = vmatpush.bf16.msra.mxu0 %v1009
        %1345 = vmatpush.bf16.msra.mxu0 %v1002
        %1346 = vmatpush.bf16.msra.mxu0 %v995
        %1347 = vmatmul.bf16.gmra.mxu0 %v452
        %v1348 = vpop.f32.mrf.mxu0
        %v1349 = vadd.f32 %v1335, %v1348
        %v1350 = vpop.f32.mrf.mxu0
        %v1351 = vadd.f32 %v1337, %v1350
        %1352 = vdwg.mxu0
        %v1353 = vld [vmem:[#allocation5] sm:$0xff]
        %v1354 = vld [vmem:[#allocation5 + $0x8] sm:$0xff]
        %v1355 = vld [vmem:[#allocation7] sm:$0xff]
        %v1356 = vld [vmem:[#allocation7 + $0x8] sm:$0xff]
        %v1357 = vmul.f32 %v1181, %v1353
        %v1358 = vmul.f32 %v1183, %v1354
        %v1359 = vmul.f32 %v1293, %v1355
        %v1360 = vmul.f32 %v1295, %v1356
        %v1361 = vadd.f32 %v1357, %v1359
        %v1362 = vadd.f32 %v1358, %v1360
        %1365 = vrot.lane.b32.xlu0 %v1353, 32
        %v1366 = vpop.permute.xlu0 %1365
        %1367 = vrot.lane.b32.xlu0 %v1354, 32
        %v1368 = vpop.permute.xlu0 %1367
        %v1371 = vmul.f32 %v1181, %v1366
        %v1372 = vmul.f32 %v1183, %v1368
        %1375 = vrot.lane.b32.xlu0 %v1355, 32
        %v1376 = vpop.permute.xlu0 %1375
        %1377 = vrot.lane.b32.xlu0 %v1356, 32
        %v1378 = vpop.permute.xlu0 %1377
        %v1381 = vmul.f32 %v1293, %v1376
        %v1382 = vmul.f32 %v1295, %v1378
        %v1383 = vadd.f32 %v1371, %v1381
        %v1384 = vadd.f32 %v1372, %v1382
        %1385 = vrot.lane.b32.xlu0 %v1353, 64
        %v1386 = vpop.permute.xlu0 %1385
        %1387 = vrot.lane.b32.xlu0 %v1354, 64
        %v1388 = vpop.permute.xlu0 %1387
        %v1391 = vmul.f32 %v1181, %v1386
        %v1392 = vmul.f32 %v1183, %v1388
        %1393 = vrot.lane.b32.xlu0 %v1355, 64
        %v1394 = vpop.permute.xlu0 %1393
        %1395 = vrot.lane.b32.xlu0 %v1356, 64
        %v1396 = vpop.permute.xlu0 %1395
        %v1399 = vmul.f32 %v1293, %v1394
        %v1400 = vmul.f32 %v1295, %v1396
        %v1401 = vadd.f32 %v1391, %v1399
        %v1402 = vadd.f32 %v1392, %v1400
        %1403 = vrot.lane.b32.xlu0 %v1353, 96
        %v1404 = vpop.permute.xlu0 %1403
        %1405 = vrot.lane.b32.xlu0 %v1354, 96
        %v1406 = vpop.permute.xlu0 %1405
        %v1409 = vmul.f32 %v1181, %v1404
        %v1410 = vmul.f32 %v1183, %v1406
        %1411 = vrot.lane.b32.xlu0 %v1355, 96
        %v1412 = vpop.permute.xlu0 %1411
        %1413 = vrot.lane.b32.xlu0 %v1356, 96
        %v1414 = vpop.permute.xlu0 %1413
        %v1417 = vmul.f32 %v1293, %v1412
        %v1418 = vmul.f32 %v1295, %v1414
        %v1419 = vadd.f32 %v1409, %v1417
        %v1420 = vadd.f32 %v1410, %v1418
        %v1421 = vmul.f32 %v1209, %v1353
        %v1422 = vmul.f32 %v1211, %v1354
        %v1423 = vmul.f32 %v1321, %v1355
        %v1424 = vmul.f32 %v1323, %v1356
        %v1425 = vadd.f32 %v1421, %v1423
        %v1426 = vadd.f32 %v1422, %v1424
        %v1427 = vmul.f32 %v1209, %v1366
        %v1428 = vmul.f32 %v1211, %v1368
        %v1429 = vmul.f32 %v1321, %v1376
        %v1430 = vmul.f32 %v1323, %v1378
        %v1431 = vadd.f32 %v1427, %v1429
        %v1432 = vadd.f32 %v1428, %v1430
        %v1433 = vmul.f32 %v1209, %v1386
        %v1434 = vmul.f32 %v1211, %v1388
        %v1435 = vmul.f32 %v1321, %v1394
        %v1436 = vmul.f32 %v1323, %v1396
        %v1437 = vadd.f32 %v1433, %v1435
        %v1438 = vadd.f32 %v1434, %v1436
        %v1439 = vmul.f32 %v1209, %v1404
        %v1440 = vmul.f32 %v1211, %v1406
        %v1441 = vmul.f32 %v1321, %v1412
        %v1442 = vmul.f32 %v1323, %v1414
        %v1443 = vadd.f32 %v1439, %v1441
        %v1444 = vadd.f32 %v1440, %v1442
        %1447 = vrot.lane.b32.xlu0 %v1383, 96
        %v1448 = vpop.permute.xlu0 %1447
        %1449 = vrot.lane.b32.xlu0 %v1384, 96
        %v1450 = vpop.permute.xlu0 %1449
        %1455 = vrot.lane.b32.xlu0 %v1401, 64
        %v1456 = vpop.permute.xlu0 %1455
        %1457 = vrot.lane.b32.xlu0 %v1402, 64
        %v1458 = vpop.permute.xlu0 %1457
        %1463 = vrot.lane.b32.xlu0 %v1419, 32
        %v1464 = vpop.permute.xlu0 %1463
        %1465 = vrot.lane.b32.xlu0 %v1420, 32
        %v1466 = vpop.permute.xlu0 %1465
        %1471 = vrot.lane.b32.xlu0 %v1431, 96
        %v1472 = vpop.permute.xlu0 %1471
        %1473 = vrot.lane.b32.xlu0 %v1432, 96
        %v1474 = vpop.permute.xlu0 %1473
        %1479 = vrot.lane.b32.xlu0 %v1437, 64
        %v1480 = vpop.permute.xlu0 %1479
        %1481 = vrot.lane.b32.xlu0 %v1438, 64
        %v1482 = vpop.permute.xlu0 %1481
        %1487 = vrot.lane.b32.xlu0 %v1443, 32
        %v1488 = vpop.permute.xlu0 %1487
        %1489 = vrot.lane.b32.xlu0 %v1444, 32
        %v1490 = vpop.permute.xlu0 %1489
        %v1493 = vmul.f32 %v1237, %v1353
        %v1494 = vmul.f32 %v1239, %v1354
        %v1495 = vmul.f32 %v1349, %v1355
        %v1496 = vmul.f32 %v1351, %v1356
        %v1497 = vadd.f32 %v1493, %v1495
        %v1498 = vadd.f32 %v1494, %v1496
        %v1499 = vmul.f32 %v1237, %v1366
        %v1500 = vmul.f32 %v1239, %v1368
        %v1501 = vmul.f32 %v1349, %v1376
        %v1502 = vmul.f32 %v1351, %v1378
        %v1503 = vadd.f32 %v1499, %v1501
        %v1504 = vadd.f32 %v1500, %v1502
        %v1505 = vmul.f32 %v1237, %v1386
        %v1506 = vmul.f32 %v1239, %v1388
        %v1507 = vmul.f32 %v1349, %v1394
        %v1508 = vmul.f32 %v1351, %v1396
        %v1509 = vadd.f32 %v1505, %v1507
        %v1510 = vadd.f32 %v1506, %v1508
        %v1511 = vmul.f32 %v1237, %v1404
        %v1512 = vmul.f32 %v1239, %v1406
        %v1513 = vmul.f32 %v1349, %v1412
        %v1514 = vmul.f32 %v1351, %v1414
        %v1515 = vadd.f32 %v1511, %v1513
        %v1516 = vadd.f32 %v1512, %v1514
        %1519 = vrot.lane.b32.xlu0 %v1503, 96
        %v1520 = vpop.permute.xlu0 %1519
        %1521 = vrot.lane.b32.xlu0 %v1504, 96
        %v1522 = vpop.permute.xlu0 %1521
        %1527 = vrot.lane.b32.xlu0 %v1509, 64
        %v1528 = vpop.permute.xlu0 %1527
        %1529 = vrot.lane.b32.xlu0 %v1510, 64
        %v1530 = vpop.permute.xlu0 %1529
        %1535 = vrot.lane.b32.xlu0 %v1515, 32
        %v1536 = vpop.permute.xlu0 %1535
        %1537 = vrot.lane.b32.xlu0 %v1516, 32
        %v1538 = vpop.permute.xlu0 %1537
        %1543 = vrot.lane.b32.xlu0 %v1265, 96
        %v1544 = vpop.permute.xlu0 %1543
        %1545 = vrot.lane.b32.xlu0 %v1267, 96
        %v1546 = vpop.permute.xlu0 %1545
        %1549 = vrot.lane.b32.xlu0 %v1265, 64
        %v1550 = vpop.permute.xlu0 %1549
        %1551 = vrot.lane.b32.xlu0 %v1267, 64
        %v1552 = vpop.permute.xlu0 %1551
        %1555 = vrot.lane.b32.xlu0 %v1265, 32
        %v1556 = vpop.permute.xlu0 %1555
        %1557 = vrot.lane.b32.xlu0 %v1267, 32
        %v1558 = vpop.permute.xlu0 %1557
        %v1561 = vpack.c.bf16 %v1361, %v1361
        %v1562 = vpack.c.bf16 %v1362, %v1362
        %v1563 = vpack.c.bf16 %v1448, %v1448
        %v1564 = vpack.c.bf16 %v1450, %v1450
        %v1565 = vpack.c.bf16 %v1456, %v1456
        %v1566 = vpack.c.bf16 %v1458, %v1458
        %v1567 = vpack.c.bf16 %v1464, %v1464
        %v1568 = vpack.c.bf16 %v1466, %v1466
        %v1569 = vpack.c.bf16 %v1425, %v1425
        %v1570 = vpack.c.bf16 %v1426, %v1426
        %v1571 = vpack.c.bf16 %v1472, %v1472
        %v1572 = vpack.c.bf16 %v1474, %v1474
        %v1573 = vpack.c.bf16 %v1480, %v1480
        %v1574 = vpack.c.bf16 %v1482, %v1482
        %v1575 = vpack.c.bf16 %v1488, %v1488
        %v1576 = vpack.c.bf16 %v1490, %v1490
        %v1577 = vpack.c.bf16 %v1497, %v1497
        %v1578 = vpack.c.bf16 %v1498, %v1498
        %v1579 = vpack.c.bf16 %v1520, %v1520
        %v1580 = vpack.c.bf16 %v1522, %v1522
        %v1581 = vpack.c.bf16 %v1528, %v1528
        %v1582 = vpack.c.bf16 %v1530, %v1530
        %v1583 = vpack.c.bf16 %v1536, %v1536
        %v1584 = vpack.c.bf16 %v1538, %v1538
        %v1585 = vpack.c.bf16 %v1265, %v1265
        %v1586 = vpack.c.bf16 %v1267, %v1267
        %v1587 = vpack.c.bf16 %v1544, %v1544
        %v1588 = vpack.c.bf16 %v1546, %v1546
        %v1589 = vpack.c.bf16 %v1550, %v1550
        %v1590 = vpack.c.bf16 %v1552, %v1552
        %v1591 = vpack.c.bf16 %v1556, %v1556
        %v1592 = vpack.c.bf16 %v1558, %v1558
        %v1593 = vlaneseq
        %v1594 = vshrl.u32 %v1593, 7
        %v1595 = vadd.s32 %v1594, 8
        %v1596 = vlaneseq
        %v1597 = vand.u32 %v1596, 127
        %vm1598 = vcmp.le.s32.totalorder %v1597, %v1594
        %vm1599 = vcmp.le.s32.totalorder %v1597, %v1595
        %v1600 = vsel %vm1598, 0.0, -1e+09
        %v1601 = vsel %vm1599, 0.0, -1e+09
        %v1604 = vunpack.c.l.b16 %v1561
        %v1605 = vunpack.c.l.b16 %v1562
        %v1606 = vpack.c.b16 %v1605, %v1604
        %v1609 = vunpack.c.l.b16 %v1577
        %v1610 = vunpack.c.l.b16 %v1578
        %v1611 = vpack.c.b16 %v1610, %v1609
        %vm1612 = vcmask 261120
        %v1614 = vsel %vm1612, %v1606, 0
        %v1617 = vsel %vm1612, %v1611, 0
        %1619 = vmatpush.bf16.xpose.msra.mxu0 0
        %1620 = vmatpush.bf16.xpose.msra.mxu0 0
        %1621 = vmatpush.bf16.xpose.msra.mxu0 0
        %1622 = vmatpush.bf16.xpose.msra.mxu0 0
        %1623 = vmatpush.bf16.xpose.msra.mxu0 0
        %1624 = vmatpush.bf16.xpose.msra.mxu0 0
        %1625 = vmatpush.bf16.xpose.msra.mxu0 0
        %1626 = vmatpush.bf16.xpose.msra.mxu0 %v1617
        %1627 = vmatmul.bf16.gmra.mxu0 %v1614
        %v1628 = vpop.f32.mrf.mxu0
        %v1629 = vadd.f32 %v1600, %v1628
        %v1630 = vpop.f32.mrf.mxu0
        %v1631 = vadd.f32 %v1601, %v1630
        %1632 = vdwg.mxu0
        %v1635 = vunpack.c.l.b16 %v1563
        %v1636 = vunpack.c.l.b16 %v1564
        %v1637 = vpack.c.b16 %v1636, %v1635
        %v1639 = vsel %vm1612, %v1637, 0
        %1641 = vmatpush.bf16.xpose.msra.mxu0 0
        %1642 = vmatpush.bf16.xpose.msra.mxu0 0
        %1643 = vmatpush.bf16.xpose.msra.mxu0 0
        %1644 = vmatpush.bf16.xpose.msra.mxu0 0
        %1645 = vmatpush.bf16.xpose.msra.mxu0 0
        %1646 = vmatpush.bf16.xpose.msra.mxu0 0
        %1647 = vmatpush.bf16.xpose.msra.mxu0 0
        %1648 = vmatpush.bf16.xpose.msra.mxu0 %v1617
        %1649 = vmatmul.bf16.gmra.mxu0 %v1639
        %v1650 = vpop.f32.mrf.mxu0
        %v1651 = vadd.f32 %v1600, %v1650
        %v1652 = vpop.f32.mrf.mxu0
        %v1653 = vadd.f32 %v1601, %v1652
        %1654 = vdwg.mxu0
        %v1657 = vunpack.c.l.b16 %v1565
        %v1658 = vunpack.c.l.b16 %v1566
        %v1659 = vpack.c.b16 %v1658, %v1657
        %v1662 = vunpack.c.l.b16 %v1579
        %v1663 = vunpack.c.l.b16 %v1580
        %v1664 = vpack.c.b16 %v1663, %v1662
        %v1666 = vsel %vm1612, %v1659, 0
        %v1669 = vsel %vm1612, %v1664, 0
        %1671 = vmatpush.bf16.xpose.msra.mxu0 0
        %1672 = vmatpush.bf16.xpose.msra.mxu0 0
        %1673 = vmatpush.bf16.xpose.msra.mxu0 0
        %1674 = vmatpush.bf16.xpose.msra.mxu0 0
        %1675 = vmatpush.bf16.xpose.msra.mxu0 0
        %1676 = vmatpush.bf16.xpose.msra.mxu0 0
        %1677 = vmatpush.bf16.xpose.msra.mxu0 0
        %1678 = vmatpush.bf16.xpose.msra.mxu0 %v1669
        %1679 = vmatmul.bf16.gmra.mxu0 %v1666
        %v1680 = vpop.f32.mrf.mxu0
        %v1681 = vadd.f32 %v1600, %v1680
        %v1682 = vpop.f32.mrf.mxu0
        %v1683 = vadd.f32 %v1601, %v1682
        %1684 = vdwg.mxu0
        %v1687 = vunpack.c.l.b16 %v1567
        %v1688 = vunpack.c.l.b16 %v1568
        %v1689 = vpack.c.b16 %v1688, %v1687
        %v1691 = vsel %vm1612, %v1689, 0
        %1693 = vmatpush.bf16.xpose.msra.mxu0 0
        %1694 = vmatpush.bf16.xpose.msra.mxu0 0
        %1695 = vmatpush.bf16.xpose.msra.mxu0 0
        %1696 = vmatpush.bf16.xpose.msra.mxu0 0
        %1697 = vmatpush.bf16.xpose.msra.mxu0 0
        %1698 = vmatpush.bf16.xpose.msra.mxu0 0
        %1699 = vmatpush.bf16.xpose.msra.mxu0 0
        %1700 = vmatpush.bf16.xpose.msra.mxu0 %v1669
        %1701 = vmatmul.bf16.gmra.mxu0 %v1691
        %v1702 = vpop.f32.mrf.mxu0
        %v1703 = vadd.f32 %v1600, %v1702
        %v1704 = vpop.f32.mrf.mxu0
        %v1705 = vadd.f32 %v1601, %v1704
        %1706 = vdwg.mxu0
        %v1709 = vunpack.c.l.b16 %v1569
        %v1710 = vunpack.c.l.b16 %v1570
        %v1711 = vpack.c.b16 %v1710, %v1709
        %v1714 = vunpack.c.l.b16 %v1581
        %v1715 = vunpack.c.l.b16 %v1582
        %v1716 = vpack.c.b16 %v1715, %v1714
        %v1718 = vsel %vm1612, %v1711, 0
        %v1721 = vsel %vm1612, %v1716, 0
        %1723 = vmatpush.bf16.xpose.msra.mxu0 0
        %1724 = vmatpush.bf16.xpose.msra.mxu0 0
        %1725 = vmatpush.bf16.xpose.msra.mxu0 0
        %1726 = vmatpush.bf16.xpose.msra.mxu0 0
        %1727 = vmatpush.bf16.xpose.msra.mxu0 0
        %1728 = vmatpush.bf16.xpose.msra.mxu0 0
        %1729 = vmatpush.bf16.xpose.msra.mxu0 0
        %1730 = vmatpush.bf16.xpose.msra.mxu0 %v1721
        %1731 = vmatmul.bf16.gmra.mxu0 %v1718
        %v1732 = vpop.f32.mrf.mxu0
        %v1733 = vadd.f32 %v1600, %v1732
        %v1734 = vpop.f32.mrf.mxu0
        %v1735 = vadd.f32 %v1601, %v1734
        %1736 = vdwg.mxu0
        %v1739 = vunpack.c.l.b16 %v1571
        %v1740 = vunpack.c.l.b16 %v1572
        %v1741 = vpack.c.b16 %v1740, %v1739
        %v1743 = vsel %vm1612, %v1741, 0
        %1745 = vmatpush.bf16.xpose.msra.mxu0 0
        %1746 = vmatpush.bf16.xpose.msra.mxu0 0
        %1747 = vmatpush.bf16.xpose.msra.mxu0 0
        %1748 = vmatpush.bf16.xpose.msra.mxu0 0
        %1749 = vmatpush.bf16.xpose.msra.mxu0 0
        %1750 = vmatpush.bf16.xpose.msra.mxu0 0
        %1751 = vmatpush.bf16.xpose.msra.mxu0 0
        %1752 = vmatpush.bf16.xpose.msra.mxu0 %v1721
        %1753 = vmatmul.bf16.gmra.mxu0 %v1743
        %v1754 = vpop.f32.mrf.mxu0
        %v1755 = vadd.f32 %v1600, %v1754
        %v1756 = vpop.f32.mrf.mxu0
        %v1757 = vadd.f32 %v1601, %v1756
        %1758 = vdwg.mxu0
        %v1761 = vunpack.c.l.b16 %v1573
        %v1762 = vunpack.c.l.b16 %v1574
        %v1763 = vpack.c.b16 %v1762, %v1761
        %v1766 = vunpack.c.l.b16 %v1583
        %v1767 = vunpack.c.l.b16 %v1584
        %v1768 = vpack.c.b16 %v1767, %v1766
        %v1770 = vsel %vm1612, %v1763, 0
        %v1773 = vsel %vm1612, %v1768, 0
        %1775 = vmatpush.bf16.xpose.msra.mxu0 0
        %1776 = vmatpush.bf16.xpose.msra.mxu0 0
        %1777 = vmatpush.bf16.xpose.msra.mxu0 0
        %1778 = vmatpush.bf16.xpose.msra.mxu0 0
        %1779 = vmatpush.bf16.xpose.msra.mxu0 0
        %1780 = vmatpush.bf16.xpose.msra.mxu0 0
        %1781 = vmatpush.bf16.xpose.msra.mxu0 0
        %1782 = vmatpush.bf16.xpose.msra.mxu0 %v1773
        %1783 = vmatmul.bf16.gmra.mxu0 %v1770
        %v1784 = vpop.f32.mrf.mxu0
        %v1785 = vadd.f32 %v1600, %v1784
        %v1786 = vpop.f32.mrf.mxu0
        %v1787 = vadd.f32 %v1601, %v1786
        %1788 = vdwg.mxu0
        %v1791 = vunpack.c.l.b16 %v1575
        %v1792 = vunpack.c.l.b16 %v1576
        %v1793 = vpack.c.b16 %v1792, %v1791
        %v1795 = vsel %vm1612, %v1793, 0
        %1797 = vmatpush.bf16.xpose.msra.mxu0 0
        %1798 = vmatpush.bf16.xpose.msra.mxu0 0
        %1799 = vmatpush.bf16.xpose.msra.mxu0 0
        %1800 = vmatpush.bf16.xpose.msra.mxu0 0
        %1801 = vmatpush.bf16.xpose.msra.mxu0 0
        %1802 = vmatpush.bf16.xpose.msra.mxu0 0
        %1803 = vmatpush.bf16.xpose.msra.mxu0 0
        %1804 = vmatpush.bf16.xpose.msra.mxu0 %v1773
        %1805 = vmatmul.bf16.gmra.mxu0 %v1795
        %v1806 = vpop.f32.mrf.mxu0
        %v1807 = vadd.f32 %v1600, %v1806
        %v1808 = vpop.f32.mrf.mxu0
        %v1809 = vadd.f32 %v1601, %v1808
        %1810 = vdwg.mxu0
        %vm1811 = vcmask 130048
        %v1812 = vsel %vm1811, %v1629, -inf
        %1813 = vmax.xlane.f32.xlu0 %v1812
        %v1814 = vpop.xlane.xlu0 %1813
        %v1815 = vsel %vm1811, %v1631, -inf
        %1816 = vmax.xlane.f32.xlu0 %v1815
        %v1817 = vpop.xlane.xlu0 %1816
        %v1818 = vsel %vm1811, %v1651, -inf
        %1819 = vmax.xlane.f32.xlu0 %v1818
        %v1820 = vpop.xlane.xlu0 %1819
        %v1821 = vsel %vm1811, %v1653, -inf
        %1822 = vmax.xlane.f32.xlu0 %v1821
        %v1823 = vpop.xlane.xlu0 %1822
        %v1824 = vsel %vm1811, %v1681, -inf
        %1825 = vmax.xlane.f32.xlu0 %v1824
        %v1826 = vpop.xlane.xlu0 %1825
        %v1827 = vsel %vm1811, %v1683, -inf
        %1828 = vmax.xlane.f32.xlu0 %v1827
        %v1829 = vpop.xlane.xlu0 %1828
        %v1830 = vsel %vm1811, %v1703, -inf
        %1831 = vmax.xlane.f32.xlu0 %v1830
        %v1832 = vpop.xlane.xlu0 %1831
        %v1833 = vsel %vm1811, %v1705, -inf
        %1834 = vmax.xlane.f32.xlu0 %v1833
        %v1835 = vpop.xlane.xlu0 %1834
        %v1836 = vsel %vm1811, %v1733, -inf
        %1837 = vmax.xlane.f32.xlu0 %v1836
        %v1838 = vpop.xlane.xlu0 %1837
        %v1839 = vsel %vm1811, %v1735, -inf
        %1840 = vmax.xlane.f32.xlu0 %v1839
        %v1841 = vpop.xlane.xlu0 %1840
        %v1842 = vsel %vm1811, %v1755, -inf
        %1843 = vmax.xlane.f32.xlu0 %v1842
        %v1844 = vpop.xlane.xlu0 %1843
        %v1845 = vsel %vm1811, %v1757, -inf
        %1846 = vmax.xlane.f32.xlu0 %v1845
        %v1847 = vpop.xlane.xlu0 %1846
        %v1848 = vsel %vm1811, %v1785, -inf
        %1849 = vmax.xlane.f32.xlu0 %v1848
        %v1850 = vpop.xlane.xlu0 %1849
        %v1851 = vsel %vm1811, %v1787, -inf
        %1852 = vmax.xlane.f32.xlu0 %v1851
        %v1853 = vpop.xlane.xlu0 %1852
        %v1854 = vsel %vm1811, %v1807, -inf
        %1855 = vmax.xlane.f32.xlu0 %v1854
        %v1856 = vpop.xlane.xlu0 %1855
        %v1857 = vsel %vm1811, %v1809, -inf
        %1858 = vmax.xlane.f32.xlu0 %v1857
        %v1859 = vpop.xlane.xlu0 %1858
        %v1860 = vsub.f32 %v1629, %v1814
        %v1861 = vsub.f32 %v1631, %v1817
        %v1862 = vsub.f32 %v1651, %v1820
        %v1863 = vsub.f32 %v1653, %v1823
        %v1864 = vsub.f32 %v1681, %v1826
        %v1865 = vsub.f32 %v1683, %v1829
        %v1866 = vsub.f32 %v1703, %v1832
        %v1867 = vsub.f32 %v1705, %v1835
        %v1868 = vsub.f32 %v1733, %v1838
        %v1869 = vsub.f32 %v1735, %v1841
        %v1870 = vsub.f32 %v1755, %v1844
        %v1871 = vsub.f32 %v1757, %v1847
        %v1872 = vsub.f32 %v1785, %v1850
        %v1873 = vsub.f32 %v1787, %v1853
        %v1874 = vsub.f32 %v1807, %v1856
        %v1875 = vsub.f32 %v1809, %v1859
        %v1876 = vmul.f32 %v1860, 1.442695
        %v1877 = vpow.pop %v1876
        %v1878 = vmul.f32 %v1861, 1.442695
        %v1879 = vpow.pop %v1878
        %v1880 = vmul.f32 %v1862, 1.442695
        %v1881 = vpow.pop %v1880
        %v1882 = vmul.f32 %v1863, 1.442695
        %v1883 = vpow.pop %v1882
        %v1884 = vmul.f32 %v1864, 1.442695
        %v1885 = vpow.pop %v1884
        %v1886 = vmul.f32 %v1865, 1.442695
        %v1887 = vpow.pop %v1886
        %v1888 = vmul.f32 %v1866, 1.442695
        %v1889 = vpow.pop %v1888
        %v1890 = vmul.f32 %v1867, 1.442695
        %v1891 = vpow.pop %v1890
        %v1892 = vmul.f32 %v1868, 1.442695
        %v1893 = vpow.pop %v1892
        %v1894 = vmul.f32 %v1869, 1.442695
        %v1895 = vpow.pop %v1894
        %v1896 = vmul.f32 %v1870, 1.442695
        %v1897 = vpow.pop %v1896
        %v1898 = vmul.f32 %v1871, 1.442695
        %v1899 = vpow.pop %v1898
        %v1900 = vmul.f32 %v1872, 1.442695
        %v1901 = vpow.pop %v1900
        %v1902 = vmul.f32 %v1873, 1.442695
        %v1903 = vpow.pop %v1902
        %v1904 = vmul.f32 %v1874, 1.442695
        %v1905 = vpow.pop %v1904
        %v1906 = vmul.f32 %v1875, 1.442695
        %v1907 = vpow.pop %v1906
        %v1908 = vsel %vm1811, %v1877, 0.0
        %1909 = vadd.xlane.f32.xlu0 %v1908
        %v1910 = vpop.xlane.xlu0 %1909
        %v1911 = vsel %vm1811, %v1879, 0.0
        %1912 = vadd.xlane.f32.xlu0 %v1911
        %v1913 = vpop.xlane.xlu0 %1912
        %v1914 = vsel %vm1811, %v1881, 0.0
        %1915 = vadd.xlane.f32.xlu0 %v1914
        %v1916 = vpop.xlane.xlu0 %1915
        %v1917 = vsel %vm1811, %v1883, 0.0
        %1918 = vadd.xlane.f32.xlu0 %v1917
        %v1919 = vpop.xlane.xlu0 %1918
        %v1920 = vsel %vm1811, %v1885, 0.0
        %1921 = vadd.xlane.f32.xlu0 %v1920
        %v1922 = vpop.xlane.xlu0 %1921
        %v1923 = vsel %vm1811, %v1887, 0.0
        %1924 = vadd.xlane.f32.xlu0 %v1923
        %v1925 = vpop.xlane.xlu0 %1924
        %v1926 = vsel %vm1811, %v1889, 0.0
        %1927 = vadd.xlane.f32.xlu0 %v1926
        %v1928 = vpop.xlane.xlu0 %1927
        %v1929 = vsel %vm1811, %v1891, 0.0
        %1930 = vadd.xlane.f32.xlu0 %v1929
        %v1931 = vpop.xlane.xlu0 %1930
        %v1932 = vsel %vm1811, %v1893, 0.0
        %1933 = vadd.xlane.f32.xlu0 %v1932
        %v1934 = vpop.xlane.xlu0 %1933
        %v1935 = vsel %vm1811, %v1895, 0.0
        %1936 = vadd.xlane.f32.xlu0 %v1935
        %v1937 = vpop.xlane.xlu0 %1936
        %v1938 = vsel %vm1811, %v1897, 0.0
        %1939 = vadd.xlane.f32.xlu0 %v1938
        %v1940 = vpop.xlane.xlu0 %1939
        %v1941 = vsel %vm1811, %v1899, 0.0
        %1942 = vadd.xlane.f32.xlu0 %v1941
        %v1943 = vpop.xlane.xlu0 %1942
        %v1944 = vsel %vm1811, %v1901, 0.0
        %1945 = vadd.xlane.f32.xlu0 %v1944
        %v1946 = vpop.xlane.xlu0 %1945
        %v1947 = vsel %vm1811, %v1903, 0.0
        %1948 = vadd.xlane.f32.xlu0 %v1947
        %v1949 = vpop.xlane.xlu0 %1948
        %v1950 = vsel %vm1811, %v1905, 0.0
        %1951 = vadd.xlane.f32.xlu0 %v1950
        %v1952 = vpop.xlane.xlu0 %1951
        %v1953 = vsel %vm1811, %v1907, 0.0
        %1954 = vadd.xlane.f32.xlu0 %v1953
        %v1955 = vpop.xlane.xlu0 %1954
        %v1956 = vrcp.pop %v1910
        %v1957 = vrcp.pop %v1913
        %v1958 = vrcp.pop %v1916
        %v1959 = vrcp.pop %v1919
        %v1960 = vrcp.pop %v1922
        %v1961 = vrcp.pop %v1925
        %v1962 = vrcp.pop %v1928
        %v1963 = vrcp.pop %v1931
        %v1964 = vrcp.pop %v1934
        %v1965 = vrcp.pop %v1937
        %v1966 = vrcp.pop %v1940
        %v1967 = vrcp.pop %v1943
        %v1968 = vrcp.pop %v1946
        %v1969 = vrcp.pop %v1949
        %v1970 = vrcp.pop %v1952
        %v1971 = vrcp.pop %v1955
        %v1972 = vmul.f32 %v1877, %v1956
        %v1973 = vmul.f32 %v1879, %v1957
        %v1974 = vmul.f32 %v1881, %v1958
        %v1975 = vmul.f32 %v1883, %v1959
        %v1976 = vmul.f32 %v1885, %v1960
        %v1977 = vmul.f32 %v1887, %v1961
        %v1978 = vmul.f32 %v1889, %v1962
        %v1979 = vmul.f32 %v1891, %v1963
        %v1980 = vmul.f32 %v1893, %v1964
        %v1981 = vmul.f32 %v1895, %v1965
        %v1982 = vmul.f32 %v1897, %v1966
        %v1983 = vmul.f32 %v1899, %v1967
        %v1984 = vmul.f32 %v1901, %v1968
        %v1985 = vmul.f32 %v1903, %v1969
        %v1986 = vmul.f32 %v1905, %v1970
        %v1987 = vmul.f32 %v1907, %v1971
        %v1988 = vpack.c.bf16 %v1972, %v1972
        %v1989 = vpack.c.bf16 %v1973, %v1973
        %v1990 = vpack.c.bf16 %v1974, %v1974
        %v1991 = vpack.c.bf16 %v1975, %v1975
        %v1992 = vpack.c.bf16 %v1976, %v1976
        %v1993 = vpack.c.bf16 %v1977, %v1977
        %v1994 = vpack.c.bf16 %v1978, %v1978
        %v1995 = vpack.c.bf16 %v1979, %v1979
        %v1996 = vpack.c.bf16 %v1980, %v1980
        %v1997 = vpack.c.bf16 %v1981, %v1981
        %v1998 = vpack.c.bf16 %v1982, %v1982
        %v1999 = vpack.c.bf16 %v1983, %v1983
        %v2000 = vpack.c.bf16 %v1984, %v1984
        %v2001 = vpack.c.bf16 %v1985, %v1985
        %v2002 = vpack.c.bf16 %v1986, %v1986
        %v2003 = vpack.c.bf16 %v1987, %v1987
        %v2006 = vunpack.c.l.b16 %v1988
        %v2007 = vunpack.c.l.b16 %v1989
        %v2008 = vpack.c.b16 %v2007, %v2006
        %v2011 = vunpack.c.l.b16 %v1585
        %v2012 = vunpack.c.l.b16 %v1586
        %v2013 = vpack.c.b16 %v2012, %v2011
        %v2016 = vsel %vm1811, %v2008, 0
        %2018 = vmatpush.bf16.msra.mxu0 0
        %2019 = vmatpush.bf16.msra.mxu0 0
        %2020 = vmatpush.bf16.msra.mxu0 0
        %2021 = vmatpush.bf16.msra.mxu0 0
        %2022 = vmatpush.bf16.msra.mxu0 0
        %2023 = vmatpush.bf16.msra.mxu0 0
        %2024 = vmatpush.bf16.msra.mxu0 0
        %2025 = vmatpush.bf16.msra.mxu0 %v2013
        %2026 = vmatmul.bf16.gmra.mxu0 %v2016
        %v2027 = vpop.f32.mrf.mxu0
        %v2028 = vadd.f32 0.0, %v2027
        %v2029 = vpop.f32.mrf.mxu0
        %v2030 = vadd.f32 0.0, %v2029
        %2031 = vdwg.mxu0
        %v2034 = vunpack.c.l.b16 %v1990
        %v2035 = vunpack.c.l.b16 %v1991
        %v2036 = vpack.c.b16 %v2035, %v2034
        %v2038 = vsel %vm1811, %v2036, 0
        %2040 = vmatpush.bf16.msra.mxu0 0
        %2041 = vmatpush.bf16.msra.mxu0 0
        %2042 = vmatpush.bf16.msra.mxu0 0
        %2043 = vmatpush.bf16.msra.mxu0 0
        %2044 = vmatpush.bf16.msra.mxu0 0
        %2045 = vmatpush.bf16.msra.mxu0 0
        %2046 = vmatpush.bf16.msra.mxu0 0
        %2047 = vmatpush.bf16.msra.mxu0 %v2013
        %2048 = vmatmul.bf16.gmra.mxu0 %v2038
        %v2049 = vpop.f32.mrf.mxu0
        %v2050 = vadd.f32 0.0, %v2049
        %v2051 = vpop.f32.mrf.mxu0
        %v2052 = vadd.f32 0.0, %v2051
        %2053 = vdwg.mxu0
        %v2056 = vunpack.c.l.b16 %v1992
        %v2057 = vunpack.c.l.b16 %v1993
        %v2058 = vpack.c.b16 %v2057, %v2056
        %v2061 = vunpack.c.l.b16 %v1587
        %v2062 = vunpack.c.l.b16 %v1588
        %v2063 = vpack.c.b16 %v2062, %v2061
        %v2066 = vsel %vm1811, %v2058, 0
        %2068 = vmatpush.bf16.msra.mxu0 0
        %2069 = vmatpush.bf16.msra.mxu0 0
        %2070 = vmatpush.bf16.msra.mxu0 0
        %2071 = vmatpush.bf16.msra.mxu0 0
        %2072 = vmatpush.bf16.msra.mxu0 0
        %2073 = vmatpush.bf16.msra.mxu0 0
        %2074 = vmatpush.bf16.msra.mxu0 0
        %2075 = vmatpush.bf16.msra.mxu0 %v2063
        %2076 = vmatmul.bf16.gmra.mxu0 %v2066
        %v2077 = vpop.f32.mrf.mxu0
        %v2078 = vadd.f32 0.0, %v2077
        %v2079 = vpop.f32.mrf.mxu0
        %v2080 = vadd.f32 0.0, %v2079
        %2081 = vdwg.mxu0
        %v2084 = vunpack.c.l.b16 %v1994
        %v2085 = vunpack.c.l.b16 %v1995
        %v2086 = vpack.c.b16 %v2085, %v2084
        %v2088 = vsel %vm1811, %v2086, 0
        %2090 = vmatpush.bf16.msra.mxu0 0
        %2091 = vmatpush.bf16.msra.mxu0 0
        %2092 = vmatpush.bf16.msra.mxu0 0
        %2093 = vmatpush.bf16.msra.mxu0 0
        %2094 = vmatpush.bf16.msra.mxu0 0
        %2095 = vmatpush.bf16.msra.mxu0 0
        %2096 = vmatpush.bf16.msra.mxu0 0
        %2097 = vmatpush.bf16.msra.mxu0 %v2063
        %2098 = vmatmul.bf16.gmra.mxu0 %v2088
        %v2099 = vpop.f32.mrf.mxu0
        %v2100 = vadd.f32 0.0, %v2099
        %v2101 = vpop.f32.mrf.mxu0
        %v2102 = vadd.f32 0.0, %v2101
        %2103 = vdwg.mxu0
        %v2106 = vunpack.c.l.b16 %v1996
        %v2107 = vunpack.c.l.b16 %v1997
        %v2108 = vpack.c.b16 %v2107, %v2106
        %v2111 = vunpack.c.l.b16 %v1589
        %v2112 = vunpack.c.l.b16 %v1590
        %v2113 = vpack.c.b16 %v2112, %v2111
        %v2116 = vsel %vm1811, %v2108, 0
        %2118 = vmatpush.bf16.msra.mxu0 0
        %2119 = vmatpush.bf16.msra.mxu0 0
        %2120 = vmatpush.bf16.msra.mxu0 0
        %2121 = vmatpush.bf16.msra.mxu0 0
        %2122 = vmatpush.bf16.msra.mxu0 0
        %2123 = vmatpush.bf16.msra.mxu0 0
        %2124 = vmatpush.bf16.msra.mxu0 0
        %2125 = vmatpush.bf16.msra.mxu0 %v2113
        %2126 = vmatmul.bf16.gmra.mxu0 %v2116
        %v2127 = vpop.f32.mrf.mxu0
        %v2128 = vadd.f32 0.0, %v2127
        %v2129 = vpop.f32.mrf.mxu0
        %v2130 = vadd.f32 0.0, %v2129
        %2131 = vdwg.mxu0
        %v2134 = vunpack.c.l.b16 %v1998
        %v2135 = vunpack.c.l.b16 %v1999
        %v2136 = vpack.c.b16 %v2135, %v2134
        %v2138 = vsel %vm1811, %v2136, 0
        %2140 = vmatpush.bf16.msra.mxu0 0
        %2141 = vmatpush.bf16.msra.mxu0 0
        %2142 = vmatpush.bf16.msra.mxu0 0
        %2143 = vmatpush.bf16.msra.mxu0 0
        %2144 = vmatpush.bf16.msra.mxu0 0
        %2145 = vmatpush.bf16.msra.mxu0 0
        %2146 = vmatpush.bf16.msra.mxu0 0
        %2147 = vmatpush.bf16.msra.mxu0 %v2113
        %2148 = vmatmul.bf16.gmra.mxu0 %v2138
        %v2149 = vpop.f32.mrf.mxu0
        %v2150 = vadd.f32 0.0, %v2149
        %v2151 = vpop.f32.mrf.mxu0
        %v2152 = vadd.f32 0.0, %v2151
        %2153 = vdwg.mxu0
        %v2156 = vunpack.c.l.b16 %v2000
        %v2157 = vunpack.c.l.b16 %v2001
        %v2158 = vpack.c.b16 %v2157, %v2156
        %v2161 = vunpack.c.l.b16 %v1591
        %v2162 = vunpack.c.l.b16 %v1592
        %v2163 = vpack.c.b16 %v2162, %v2161
        %v2166 = vsel %vm1811, %v2158, 0
        %2168 = vmatpush.bf16.msra.mxu0 0
        %2169 = vmatpush.bf16.msra.mxu0 0
        %2170 = vmatpush.bf16.msra.mxu0 0
        %2171 = vmatpush.bf16.msra.mxu0 0
        %2172 = vmatpush.bf16.msra.mxu0 0
        %2173 = vmatpush.bf16.msra.mxu0 0
        %2174 = vmatpush.bf16.msra.mxu0 0
        %2175 = vmatpush.bf16.msra.mxu0 %v2163
        %2176 = vmatmul.bf16.gmra.mxu0 %v2166
        %v2177 = vpop.f32.mrf.mxu0
        %v2178 = vadd.f32 0.0, %v2177
        %v2179 = vpop.f32.mrf.mxu0
        %v2180 = vadd.f32 0.0, %v2179
        %2181 = vdwg.mxu0
        %v2184 = vunpack.c.l.b16 %v2002
        %v2185 = vunpack.c.l.b16 %v2003
        %v2186 = vpack.c.b16 %v2185, %v2184
        %v2188 = vsel %vm1811, %v2186, 0
        %2190 = vmatpush.bf16.msra.mxu0 0
        %2191 = vmatpush.bf16.msra.mxu0 0
        %2192 = vmatpush.bf16.msra.mxu0 0
        %2193 = vmatpush.bf16.msra.mxu0 0
        %2194 = vmatpush.bf16.msra.mxu0 0
        %2195 = vmatpush.bf16.msra.mxu0 0
        %2196 = vmatpush.bf16.msra.mxu0 0
        %2197 = vmatpush.bf16.msra.mxu0 %v2163
        %2198 = vmatmul.bf16.gmra.mxu0 %v2188
        %v2199 = vpop.f32.mrf.mxu0
        %v2200 = vadd.f32 0.0, %v2199
        %v2201 = vpop.f32.mrf.mxu0
        %v2202 = vadd.f32 0.0, %v2201
        %2203 = vdwg.mxu0
        %2206 = vrot.lane.b32.xlu0 %v2050, 32
        %v2207 = vpop.permute.xlu0 %2206
        %2208 = vrot.lane.b32.xlu0 %v2052, 32
        %v2209 = vpop.permute.xlu0 %2208
        %2214 = vrot.lane.b32.xlu0 %v2078, 64
        %v2215 = vpop.permute.xlu0 %2214
        %2216 = vrot.lane.b32.xlu0 %v2080, 64
        %v2217 = vpop.permute.xlu0 %2216
        %2222 = vrot.lane.b32.xlu0 %v2100, 96
        %v2223 = vpop.permute.xlu0 %2222
        %2224 = vrot.lane.b32.xlu0 %v2102, 96
        %v2225 = vpop.permute.xlu0 %2224
        %2230 = vrot.lane.b32.xlu0 %v2150, 32
        %v2231 = vpop.permute.xlu0 %2230
        %2232 = vrot.lane.b32.xlu0 %v2152, 32
        %v2233 = vpop.permute.xlu0 %2232
        %2238 = vrot.lane.b32.xlu0 %v2178, 64
        %v2239 = vpop.permute.xlu0 %2238
        %2240 = vrot.lane.b32.xlu0 %v2180, 64
        %v2241 = vpop.permute.xlu0 %2240
        %2246 = vrot.lane.b32.xlu0 %v2200, 96
        %v2247 = vpop.permute.xlu0 %2246
        %2248 = vrot.lane.b32.xlu0 %v2202, 96
        %v2249 = vpop.permute.xlu0 %2248
        %v2252 = vsel %vm1612, %v2028, %v2207
        %v2253 = vsel %vm1612, %v2030, %v2209
        %vm2254 = vcmask 523264
        %v2255 = vsel %vm2254, %v2252, %v2215
        %v2256 = vsel %vm2254, %v2253, %v2217
        %vm2257 = vcmask 785408
        %v2258 = vsel %vm2257, %v2255, %v2223
        %v2259 = vsel %vm2257, %v2256, %v2225
        %v2260 = vsel %vm1612, %v2128, %v2231
        %v2261 = vsel %vm1612, %v2130, %v2233
        %v2262 = vsel %vm2254, %v2260, %v2239
        %v2263 = vsel %vm2254, %v2261, %v2241
        %v2264 = vsel %vm2257, %v2262, %v2247
        %v2265 = vsel %vm2257, %v2263, %v2249
        %v2266 = vpack.c.bf16 %v2259, %v2258
        %v2267 = vpack.c.bf16 %v2265, %v2264
        %v2268 = vld [vmem:[#allocation10] sm:$0xff]
        %v2269 = vld [vmem:[#allocation10 + $0x8] sm:$0xff]
        %v2270 = vld [vmem:[#allocation10 + $0x10] sm:$0xff]
        %v2271 = vld [vmem:[#allocation10 + $0x18] sm:$0xff]
        %v2272 = vld [vmem:[#allocation10 + $0x20] sm:$0xff]
        %v2273 = vld [vmem:[#allocation10 + $0x28] sm:$0xff]
        %v2274 = vld [vmem:[#allocation10 + $0x30] sm:$0xff]
        %v2275 = vld [vmem:[#allocation10 + $0x38] sm:$0xff]
        %v2276 = vld [vmem:[#allocation10 + $0x40] sm:$0xff]
        %v2277 = vld [vmem:[#allocation10 + $0x48] sm:$0xff]
        %v2278 = vld [vmem:[#allocation10 + $0x50] sm:$0xff]
        %v2279 = vld [vmem:[#allocation10 + $0x58] sm:$0xff]
        %v2280 = vld [vmem:[#allocation10 + $0x60] sm:$0xff]
        %v2281 = vld [vmem:[#allocation10 + $0x68] sm:$0xff]
        %v2282 = vld [vmem:[#allocation10 + $0x70] sm:$0xff]
        %v2283 = vld [vmem:[#allocation10 + $0x78] sm:$0xff]
        %v2284 = vld [vmem:[#allocation10 + $0x80] sm:$0xff]
        %v2285 = vld [vmem:[#allocation10 + $0x88] sm:$0xff]
        %v2286 = vld [vmem:[#allocation10 + $0x90] sm:$0xff]
        %v2287 = vld [vmem:[#allocation10 + $0x98] sm:$0xff]
        %v2288 = vld [vmem:[#allocation10 + $0xa0] sm:$0xff]
        %v2289 = vld [vmem:[#allocation10 + $0xa8] sm:$0xff]
        %v2290 = vld [vmem:[#allocation10 + $0xb0] sm:$0xff]
        %v2291 = vld [vmem:[#allocation10 + $0xb8] sm:$0xff]
        %v2292 = vld [vmem:[#allocation10 + $0xc0] sm:$0xff]
        %v2293 = vld [vmem:[#allocation10 + $0xc8] sm:$0xff]
        %v2294 = vld [vmem:[#allocation10 + $0xd0] sm:$0xff]
        %v2295 = vld [vmem:[#allocation10 + $0xd8] sm:$0xff]
        %v2296 = vld [vmem:[#allocation10 + $0xe0] sm:$0xff]
        %v2297 = vld [vmem:[#allocation10 + $0xe8] sm:$0xff]
        %v2298 = vld [vmem:[#allocation10 + $0xf0] sm:$0xff]
        %v2299 = vld [vmem:[#allocation10 + $0xf8] sm:$0xff]
        %v2332 = vunpack.c.l.b16 %v2268
        %v2333 = vunpack.c.h.b16 %v2268
        %v2334 = vunpack.c.l.b16 %v2269
        %v2335 = vunpack.c.h.b16 %v2269
        %v2336 = vunpack.c.l.b16 %v2270
        %v2337 = vunpack.c.h.b16 %v2270
        %v2338 = vunpack.c.l.b16 %v2271
        %v2339 = vunpack.c.h.b16 %v2271
        %v2340 = vunpack.c.l.b16 %v2272
        %v2341 = vunpack.c.h.b16 %v2272
        %v2342 = vunpack.c.l.b16 %v2273
        %v2343 = vunpack.c.h.b16 %v2273
        %v2344 = vunpack.c.l.b16 %v2274
        %v2345 = vunpack.c.h.b16 %v2274
        %v2346 = vunpack.c.l.b16 %v2275
        %v2347 = vunpack.c.h.b16 %v2275
        %v2348 = vunpack.c.l.b16 %v2276
        %v2349 = vunpack.c.h.b16 %v2276
        %v2350 = vunpack.c.l.b16 %v2277
        %v2351 = vunpack.c.h.b16 %v2277
        %v2352 = vunpack.c.l.b16 %v2278
        %v2353 = vunpack.c.h.b16 %v2278
        %v2354 = vunpack.c.l.b16 %v2279
        %v2355 = vunpack.c.h.b16 %v2279
        %v2356 = vunpack.c.l.b16 %v2280
        %v2357 = vunpack.c.h.b16 %v2280
        %v2358 = vunpack.c.l.b16 %v2281
        %v2359 = vunpack.c.h.b16 %v2281
        %v2360 = vunpack.c.l.b16 %v2282
        %v2361 = vunpack.c.h.b16 %v2282
        %v2362 = vunpack.c.l.b16 %v2283
        %v2363 = vunpack.c.h.b16 %v2283
        %v2364 = vunpack.c.l.b16 %v2284
        %v2365 = vunpack.c.h.b16 %v2284
        %v2366 = vunpack.c.l.b16 %v2285
        %v2367 = vunpack.c.h.b16 %v2285
        %v2368 = vunpack.c.l.b16 %v2286
        %v2369 = vunpack.c.h.b16 %v2286
        %v2370 = vunpack.c.l.b16 %v2287
        %v2371 = vunpack.c.h.b16 %v2287
        %v2372 = vunpack.c.l.b16 %v2288
        %v2373 = vunpack.c.h.b16 %v2288
        %v2374 = vunpack.c.l.b16 %v2289
        %v2375 = vunpack.c.h.b16 %v2289
        %v2376 = vunpack.c.l.b16 %v2290
        %v2377 = vunpack.c.h.b16 %v2290
        %v2378 = vunpack.c.l.b16 %v2291
        %v2379 = vunpack.c.h.b16 %v2291
        %v2380 = vunpack.c.l.b16 %v2292
        %v2381 = vunpack.c.h.b16 %v2292
        %v2382 = vunpack.c.l.b16 %v2293
        %v2383 = vunpack.c.h.b16 %v2293
        %v2384 = vunpack.c.l.b16 %v2294
        %v2385 = vunpack.c.h.b16 %v2294
        %v2386 = vunpack.c.l.b16 %v2295
        %v2387 = vunpack.c.h.b16 %v2295
        %v2388 = vunpack.c.l.b16 %v2296
        %v2389 = vunpack.c.h.b16 %v2296
        %v2390 = vunpack.c.l.b16 %v2297
        %v2391 = vunpack.c.h.b16 %v2297
        %v2392 = vunpack.c.l.b16 %v2298
        %v2393 = vunpack.c.h.b16 %v2298
        %v2394 = vunpack.c.l.b16 %v2299
        %v2395 = vunpack.c.h.b16 %v2299
        %v2396 = vpack.c.b16 %v2334, %v2332
        %v2397 = vpack.c.b16 %v2335, %v2333
        %v2398 = vpack.c.b16 %v2338, %v2336
        %v2399 = vpack.c.b16 %v2339, %v2337
        %v2400 = vpack.c.b16 %v2342, %v2340
        %v2401 = vpack.c.b16 %v2343, %v2341
        %v2402 = vpack.c.b16 %v2346, %v2344
        %v2403 = vpack.c.b16 %v2347, %v2345
        %v2404 = vpack.c.b16 %v2350, %v2348
        %v2405 = vpack.c.b16 %v2351, %v2349
        %v2406 = vpack.c.b16 %v2354, %v2352
        %v2407 = vpack.c.b16 %v2355, %v2353
        %v2408 = vpack.c.b16 %v2358, %v2356
        %v2409 = vpack.c.b16 %v2359, %v2357
        %v2410 = vpack.c.b16 %v2362, %v2360
        %v2411 = vpack.c.b16 %v2363, %v2361
        %v2412 = vpack.c.b16 %v2366, %v2364
        %v2413 = vpack.c.b16 %v2367, %v2365
        %v2414 = vpack.c.b16 %v2370, %v2368
        %v2415 = vpack.c.b16 %v2371, %v2369
        %v2416 = vpack.c.b16 %v2374, %v2372
        %v2417 = vpack.c.b16 %v2375, %v2373
        %v2418 = vpack.c.b16 %v2378, %v2376
        %v2419 = vpack.c.b16 %v2379, %v2377
        %v2420 = vpack.c.b16 %v2382, %v2380
        %v2421 = vpack.c.b16 %v2383, %v2381
        %v2422 = vpack.c.b16 %v2386, %v2384
        %v2423 = vpack.c.b16 %v2387, %v2385
        %v2424 = vpack.c.b16 %v2390, %v2388
        %v2425 = vpack.c.b16 %v2391, %v2389
        %v2426 = vpack.c.b16 %v2394, %v2392
        %v2427 = vpack.c.b16 %v2395, %v2393
        %2460 = vmatpush.bf16.msra.mxu0 %v2410
        %2461 = vmatpush.bf16.msra.mxu0 %v2408
        %2462 = vmatpush.bf16.msra.mxu0 %v2406
        %2463 = vmatpush.bf16.msra.mxu0 %v2404
        %2464 = vmatpush.bf16.msra.mxu0 %v2402
        %2465 = vmatpush.bf16.msra.mxu0 %v2400
        %2466 = vmatpush.bf16.msra.mxu0 %v2398
        %2467 = vmatpush.bf16.msra.mxu0 %v2396
        %2468 = vmatmul.bf16.gmra.mxu0 %v2266
        %v2469 = vpop.f32.mrf.mxu0
        %v2470 = vadd.f32 0.0, %v2469
        %v2471 = vpop.f32.mrf.mxu0
        %v2472 = vadd.f32 0.0, %v2471
        %2473 = vdwg.mxu0
        %2474 = vmatpush.bf16.msra.mxu0 %v2426
        %2475 = vmatpush.bf16.msra.mxu0 %v2424
        %2476 = vmatpush.bf16.msra.mxu0 %v2422
        %2477 = vmatpush.bf16.msra.mxu0 %v2420
        %2478 = vmatpush.bf16.msra.mxu0 %v2418
        %2479 = vmatpush.bf16.msra.mxu0 %v2416
        %2480 = vmatpush.bf16.msra.mxu0 %v2414
        %2481 = vmatpush.bf16.msra.mxu0 %v2412
        %2482 = vmatmul.bf16.gmra.mxu0 %v2267
        %v2483 = vpop.f32.mrf.mxu0
        %v2484 = vadd.f32 %v2470, %v2483
        %v2485 = vpop.f32.mrf.mxu0
        %v2486 = vadd.f32 %v2472, %v2485
        %2487 = vdwg.mxu0
        %2488 = vmatpush.bf16.msra.mxu0 %v2411
        %2489 = vmatpush.bf16.msra.mxu0 %v2409
        %2490 = vmatpush.bf16.msra.mxu0 %v2407
        %2491 = vmatpush.bf16.msra.mxu0 %v2405
        %2492 = vmatpush.bf16.msra.mxu0 %v2403
        %2493 = vmatpush.bf16.msra.mxu0 %v2401
        %2494 = vmatpush.bf16.msra.mxu0 %v2399
        %2495 = vmatpush.bf16.msra.mxu0 %v2397
        %2496 = vmatmul.bf16.gmra.mxu0 %v2266
        %v2497 = vpop.f32.mrf.mxu0
        %v2498 = vadd.f32 0.0, %v2497
        %v2499 = vpop.f32.mrf.mxu0
        %v2500 = vadd.f32 0.0, %v2499
        %2501 = vdwg.mxu0
        %2502 = vmatpush.bf16.msra.mxu0 %v2427
        %2503 = vmatpush.bf16.msra.mxu0 %v2425
        %2504 = vmatpush.bf16.msra.mxu0 %v2423
        %2505 = vmatpush.bf16.msra.mxu0 %v2421
        %2506 = vmatpush.bf16.msra.mxu0 %v2419
        %2507 = vmatpush.bf16.msra.mxu0 %v2417
        %2508 = vmatpush.bf16.msra.mxu0 %v2415
        %2509 = vmatpush.bf16.msra.mxu0 %v2413
        %2510 = vmatmul.bf16.gmra.mxu0 %v2267
        %v2511 = vpop.f32.mrf.mxu0
        %v2512 = vadd.f32 %v2498, %v2511
        %v2513 = vpop.f32.mrf.mxu0
        %v2514 = vadd.f32 %v2500, %v2513
        %2515 = vdwg.mxu0
        %v2516 = vadd.f32 %v402, %v2484
        %v2517 = vadd.f32 %v403, %v2512
        %v2518 = vadd.f32 %v404, %v2486
        %v2519 = vadd.f32 %v405, %v2514
        %v2520 = vmul.f32 %v2516, %v2516
        %v2521 = vmul.f32 %v2517, %v2517
        %v2522 = vmul.f32 %v2518, %v2518
        %v2523 = vmul.f32 %v2519, %v2519
        %v2524 = vadd.f32 %v2520, %v2521
        %2525 = vadd.xlane.f32.xlu0 %v2524
        %v2526 = vpop.xlane.xlu0 %2525
        %v2527 = vadd.f32 %v2522, %v2523
        %2528 = vadd.xlane.f32.xlu0 %v2527
        %v2529 = vpop.xlane.xlu0 %2528
        %v2530 = vmul.f32 %v2526, %v422
        %v2531 = vmul.f32 %v2529, %v422
        %v2532 = vadd.f32 %v2530, 1e-05
        %v2533 = vadd.f32 %v2531, 1e-05
        %v2534 = vrsqrt.pop %v2532
        %v2535 = vmul.f32 %v2534, %v2532
        %v2536 = vmul.f32 %v2535, %v2534
        %v2537 = vmul.f32 0.5, %v2536
        %v2538 = vsub.f32 1.5, %v2537
        %v2539 = vmul.f32 %v2534, %v2538
        %vm2540 = vweird.f32 %v2532
        %vm2541 = vweird.f32 %v2534
        %vm2542 = vmor %vm2540, %vm2541
        %v2543 = vsel %vm2542, %v2534, %v2539
        %v2544 = vrsqrt.pop %v2533
        %v2545 = vmul.f32 %v2544, %v2533
        %v2546 = vmul.f32 %v2545, %v2544
        %v2547 = vmul.f32 0.5, %v2546
        %v2548 = vsub.f32 1.5, %v2547
        %v2549 = vmul.f32 %v2544, %v2548
        %vm2550 = vweird.f32 %v2533
        %vm2551 = vweird.f32 %v2544
        %vm2552 = vmor %vm2550, %vm2551
        %v2553 = vsel %vm2552, %v2544, %v2549
        %v2554 = vmul.f32 %v2516, %v2543
        %v2555 = vmul.f32 %v2517, %v2543
        %v2556 = vmul.f32 %v2518, %v2553
        %v2557 = vmul.f32 %v2519, %v2553
        %v2558 = vpack.c.bf16 %v2556, %v2554
        %v2559 = vpack.c.bf16 %v2557, %v2555
        %v2560 = vld [vmem:[#allocation11] sm:$0xff]
        %v2561 = vld [vmem:[#allocation11 + $0x8] sm:$0xff]
        %v2562 = vld [vmem:[#allocation11 + $0x10] sm:$0xff]
        %v2563 = vld [vmem:[#allocation11 + $0x18] sm:$0xff]
        %v2564 = vld [vmem:[#allocation11 + $0x20] sm:$0xff]
        %v2565 = vld [vmem:[#allocation11 + $0x28] sm:$0xff]
        %v2566 = vld [vmem:[#allocation11 + $0x30] sm:$0xff]
        %v2567 = vld [vmem:[#allocation11 + $0x38] sm:$0xff]
        %v2568 = vld [vmem:[#allocation11 + $0x40] sm:$0xff]
        %v2569 = vld [vmem:[#allocation11 + $0x48] sm:$0xff]
        %v2570 = vld [vmem:[#allocation11 + $0x50] sm:$0xff]
        %v2571 = vld [vmem:[#allocation11 + $0x58] sm:$0xff]
        %v2572 = vld [vmem:[#allocation11 + $0x60] sm:$0xff]
        %v2573 = vld [vmem:[#allocation11 + $0x68] sm:$0xff]
        %v2574 = vld [vmem:[#allocation11 + $0x70] sm:$0xff]
        %v2575 = vld [vmem:[#allocation11 + $0x78] sm:$0xff]
        %v2576 = vld [vmem:[#allocation11 + $0x80] sm:$0xff]
        %v2577 = vld [vmem:[#allocation11 + $0x88] sm:$0xff]
        %v2578 = vld [vmem:[#allocation11 + $0x90] sm:$0xff]
        %v2579 = vld [vmem:[#allocation11 + $0x98] sm:$0xff]
        %v2580 = vld [vmem:[#allocation11 + $0xa0] sm:$0xff]
        %v2581 = vld [vmem:[#allocation11 + $0xa8] sm:$0xff]
        %v2582 = vld [vmem:[#allocation11 + $0xb0] sm:$0xff]
        %v2583 = vld [vmem:[#allocation11 + $0xb8] sm:$0xff]
        %v2584 = vld [vmem:[#allocation11 + $0xc0] sm:$0xff]
        %v2585 = vld [vmem:[#allocation11 + $0xc8] sm:$0xff]
        %v2586 = vld [vmem:[#allocation11 + $0xd0] sm:$0xff]
        %v2587 = vld [vmem:[#allocation11 + $0xd8] sm:$0xff]
        %v2588 = vld [vmem:[#allocation11 + $0xe0] sm:$0xff]
        %v2589 = vld [vmem:[#allocation11 + $0xe8] sm:$0xff]
        %v2590 = vld [vmem:[#allocation11 + $0xf0] sm:$0xff]
        %v2591 = vld [vmem:[#allocation11 + $0xf8] sm:$0xff]
        %v2592 = vld [vmem:[#allocation11 + $0x100] sm:$0xff]
        %v2593 = vld [vmem:[#allocation11 + $0x108] sm:$0xff]
        %v2594 = vld [vmem:[#allocation11 + $0x110] sm:$0xff]
        %v2595 = vld [vmem:[#allocation11 + $0x118] sm:$0xff]
        %v2596 = vld [vmem:[#allocation11 + $0x120] sm:$0xff]
        %v2597 = vld [vmem:[#allocation11 + $0x128] sm:$0xff]
        %v2598 = vld [vmem:[#allocation11 + $0x130] sm:$0xff]
        %v2599 = vld [vmem:[#allocation11 + $0x138] sm:$0xff]
        %v2600 = vld [vmem:[#allocation11 + $0x140] sm:$0xff]
        %v2601 = vld [vmem:[#allocation11 + $0x148] sm:$0xff]
        %v2602 = vld [vmem:[#allocation11 + $0x150] sm:$0xff]
        %v2603 = vld [vmem:[#allocation11 + $0x158] sm:$0xff]
        %v2604 = vld [vmem:[#allocation11 + $0x160] sm:$0xff]
        %v2605 = vld [vmem:[#allocation11 + $0x168] sm:$0xff]
        %v2606 = vld [vmem:[#allocation11 + $0x170] sm:$0xff]
        %v2607 = vld [vmem:[#allocation11 + $0x178] sm:$0xff]
        %v2608 = vld [vmem:[#allocation11 + $0x180] sm:$0xff]
        %v2609 = vld [vmem:[#allocation11 + $0x188] sm:$0xff]
        %v2610 = vld [vmem:[#allocation11 + $0x190] sm:$0xff]
        %v2611 = vld [vmem:[#allocation11 + $0x198] sm:$0xff]
        %v2612 = vld [vmem:[#allocation11 + $0x1a0] sm:$0xff]
        %v2613 = vld [vmem:[#allocation11 + $0x1a8] sm:$0xff]
        %v2614 = vld [vmem:[#allocation11 + $0x1b0] sm:$0xff]
        %v2615 = vld [vmem:[#allocation11 + $0x1b8] sm:$0xff]
        %v2616 = vld [vmem:[#allocation11 + $0x1c0] sm:$0xff]
        %v2617 = vld [vmem:[#allocation11 + $0x1c8] sm:$0xff]
        %v2618 = vld [vmem:[#allocation11 + $0x1d0] sm:$0xff]
        %v2619 = vld [vmem:[#allocation11 + $0x1d8] sm:$0xff]
        %v2620 = vld [vmem:[#allocation11 + $0x1e0] sm:$0xff]
        %v2621 = vld [vmem:[#allocation11 + $0x1e8] sm:$0xff]
        %v2622 = vld [vmem:[#allocation11 + $0x1f0] sm:$0xff]
        %v2623 = vld [vmem:[#allocation11 + $0x1f8] sm:$0xff]
        %v2624 = vld [vmem:[#allocation11 + $0x200] sm:$0xff]
        %v2625 = vld [vmem:[#allocation11 + $0x208] sm:$0xff]
        %v2626 = vld [vmem:[#allocation11 + $0x210] sm:$0xff]
        %v2627 = vld [vmem:[#allocation11 + $0x218] sm:$0xff]
        %v2628 = vld [vmem:[#allocation11 + $0x220] sm:$0xff]
        %v2629 = vld [vmem:[#allocation11 + $0x228] sm:$0xff]
        %v2630 = vld [vmem:[#allocation11 + $0x230] sm:$0xff]
        %v2631 = vld [vmem:[#allocation11 + $0x238] sm:$0xff]
        %v2632 = vld [vmem:[#allocation11 + $0x240] sm:$0xff]
        %v2633 = vld [vmem:[#allocation11 + $0x248] sm:$0xff]
        %v2634 = vld [vmem:[#allocation11 + $0x250] sm:$0xff]
        %v2635 = vld [vmem:[#allocation11 + $0x258] sm:$0xff]
        %v2636 = vld [vmem:[#allocation11 + $0x260] sm:$0xff]
        %v2637 = vld [vmem:[#allocation11 + $0x268] sm:$0xff]
        %v2638 = vld [vmem:[#allocation11 + $0x270] sm:$0xff]
        %v2639 = vld [vmem:[#allocation11 + $0x278] sm:$0xff]
        %v2640 = vld [vmem:[#allocation11 + $0x280] sm:$0xff]
        %v2641 = vld [vmem:[#allocation11 + $0x288] sm:$0xff]
        %v2642 = vld [vmem:[#allocation11 + $0x290] sm:$0xff]
        %v2643 = vld [vmem:[#allocation11 + $0x298] sm:$0xff]
        %v2644 = vld [vmem:[#allocation11 + $0x2a0] sm:$0xff]
        %v2645 = vld [vmem:[#allocation11 + $0x2a8] sm:$0xff]
        %v2646 = vld [vmem:[#allocation11 + $0x2b0] sm:$0xff]
        %v2647 = vld [vmem:[#allocation11 + $0x2b8] sm:$0xff]
        %v2648 = vld [vmem:[#allocation11 + $0x2c0] sm:$0xff]
        %v2649 = vld [vmem:[#allocation11 + $0x2c8] sm:$0xff]
        %v2650 = vld [vmem:[#allocation11 + $0x2d0] sm:$0xff]
        %v2651 = vld [vmem:[#allocation11 + $0x2d8] sm:$0xff]
        %v2652 = vld [vmem:[#allocation11 + $0x2e0] sm:$0xff]
        %v2653 = vld [vmem:[#allocation11 + $0x2e8] sm:$0xff]
        %v2654 = vld [vmem:[#allocation11 + $0x2f0] sm:$0xff]
        %v2655 = vld [vmem:[#allocation11 + $0x2f8] sm:$0xff]
        %v2656 = vld [vmem:[#allocation11 + $0x300] sm:$0xff]
        %v2657 = vld [vmem:[#allocation11 + $0x308] sm:$0xff]
        %v2658 = vld [vmem:[#allocation11 + $0x310] sm:$0xff]
        %v2659 = vld [vmem:[#allocation11 + $0x318] sm:$0xff]
        %v2660 = vld [vmem:[#allocation11 + $0x320] sm:$0xff]
        %v2661 = vld [vmem:[#allocation11 + $0x328] sm:$0xff]
        %v2662 = vld [vmem:[#allocation11 + $0x330] sm:$0xff]
        %v2663 = vld [vmem:[#allocation11 + $0x338] sm:$0xff]
        %v2664 = vld [vmem:[#allocation11 + $0x340] sm:$0xff]
        %v2665 = vld [vmem:[#allocation11 + $0x348] sm:$0xff]
        %v2666 = vld [vmem:[#allocation11 + $0x350] sm:$0xff]
        %v2667 = vld [vmem:[#allocation11 + $0x358] sm:$0xff]
        %v2668 = vld [vmem:[#allocation11 + $0x360] sm:$0xff]
        %v2669 = vld [vmem:[#allocation11 + $0x368] sm:$0xff]
        %v2670 = vld [vmem:[#allocation11 + $0x370] sm:$0xff]
        %v2671 = vld [vmem:[#allocation11 + $0x378] sm:$0xff]
        %v2672 = vld [vmem:[#allocation11 + $0x380] sm:$0xff]
        %v2673 = vld [vmem:[#allocation11 + $0x388] sm:$0xff]
        %v2674 = vld [vmem:[#allocation11 + $0x390] sm:$0xff]
        %v2675 = vld [vmem:[#allocation11 + $0x398] sm:$0xff]
        %v2676 = vld [vmem:[#allocation11 + $0x3a0] sm:$0xff]
        %v2677 = vld [vmem:[#allocation11 + $0x3a8] sm:$0xff]
        %v2678 = vld [vmem:[#allocation11 + $0x3b0] sm:$0xff]
        %v2679 = vld [vmem:[#allocation11 + $0x3b8] sm:$0xff]
        %v2680 = vld [vmem:[#allocation11 + $0x3c0] sm:$0xff]
        %v2681 = vld [vmem:[#allocation11 + $0x3c8] sm:$0xff]
        %v2682 = vld [vmem:[#allocation11 + $0x3d0] sm:$0xff]
        %v2683 = vld [vmem:[#allocation11 + $0x3d8] sm:$0xff]
        %v2684 = vld [vmem:[#allocation11 + $0x3e0] sm:$0xff]
        %v2685 = vld [vmem:[#allocation11 + $0x3e8] sm:$0xff]
        %v2686 = vld [vmem:[#allocation11 + $0x3f0] sm:$0xff]
        %v2687 = vld [vmem:[#allocation11 + $0x3f8] sm:$0xff]
        %v2688 = vld [vmem:[#allocation11 + $0x400] sm:$0xff]
        %v2689 = vld [vmem:[#allocation11 + $0x408] sm:$0xff]
        %v2690 = vld [vmem:[#allocation11 + $0x410] sm:$0xff]
        %v2691 = vld [vmem:[#allocation11 + $0x418] sm:$0xff]
        %v2692 = vld [vmem:[#allocation11 + $0x420] sm:$0xff]
        %v2693 = vld [vmem:[#allocation11 + $0x428] sm:$0xff]
        %v2694 = vld [vmem:[#allocation11 + $0x430] sm:$0xff]
        %v2695 = vld [vmem:[#allocation11 + $0x438] sm:$0xff]
        %v2696 = vld [vmem:[#allocation11 + $0x440] sm:$0xff]
        %v2697 = vld [vmem:[#allocation11 + $0x448] sm:$0xff]
        %v2698 = vld [vmem:[#allocation11 + $0x450] sm:$0xff]
        %v2699 = vld [vmem:[#allocation11 + $0x458] sm:$0xff]
        %v2700 = vld [vmem:[#allocation11 + $0x460] sm:$0xff]
        %v2701 = vld [vmem:[#allocation11 + $0x468] sm:$0xff]
        %v2702 = vld [vmem:[#allocation11 + $0x470] sm:$0xff]
        %v2703 = vld [vmem:[#allocation11 + $0x478] sm:$0xff]
        %v2704 = vld [vmem:[#allocation11 + $0x480] sm:$0xff]
        %v2705 = vld [vmem:[#allocation11 + $0x488] sm:$0xff]
        %v2706 = vld [vmem:[#allocation11 + $0x490] sm:$0xff]
        %v2707 = vld [vmem:[#allocation11 + $0x498] sm:$0xff]
        %v2708 = vld [vmem:[#allocation11 + $0x4a0] sm:$0xff]
        %v2709 = vld [vmem:[#allocation11 + $0x4a8] sm:$0xff]
        %v2710 = vld [vmem:[#allocation11 + $0x4b0] sm:$0xff]
        %v2711 = vld [vmem:[#allocation11 + $0x4b8] sm:$0xff]
        %v2712 = vld [vmem:[#allocation11 + $0x4c0] sm:$0xff]
        %v2713 = vld [vmem:[#allocation11 + $0x4c8] sm:$0xff]
        %v2714 = vld [vmem:[#allocation11 + $0x4d0] sm:$0xff]
        %v2715 = vld [vmem:[#allocation11 + $0x4d8] sm:$0xff]
        %v2716 = vld [vmem:[#allocation11 + $0x4e0] sm:$0xff]
        %v2717 = vld [vmem:[#allocation11 + $0x4e8] sm:$0xff]
        %v2718 = vld [vmem:[#allocation11 + $0x4f0] sm:$0xff]
        %v2719 = vld [vmem:[#allocation11 + $0x4f8] sm:$0xff]
        %v2720 = vld [vmem:[#allocation11 + $0x500] sm:$0xff]
        %v2721 = vld [vmem:[#allocation11 + $0x508] sm:$0xff]
        %v2722 = vld [vmem:[#allocation11 + $0x510] sm:$0xff]
        %v2723 = vld [vmem:[#allocation11 + $0x518] sm:$0xff]
        %v2724 = vld [vmem:[#allocation11 + $0x520] sm:$0xff]
        %v2725 = vld [vmem:[#allocation11 + $0x528] sm:$0xff]
        %v2726 = vld [vmem:[#allocation11 + $0x530] sm:$0xff]
        %v2727 = vld [vmem:[#allocation11 + $0x538] sm:$0xff]
        %v2728 = vld [vmem:[#allocation11 + $0x540] sm:$0xff]
        %v2729 = vld [vmem:[#allocation11 + $0x548] sm:$0xff]
        %v2730 = vld [vmem:[#allocation11 + $0x550] sm:$0xff]
        %v2731 = vld [vmem:[#allocation11 + $0x558] sm:$0xff]
        %v2732 = vld [vmem:[#allocation11 + $0x560] sm:$0xff]
        %v2733 = vld [vmem:[#allocation11 + $0x568] sm:$0xff]
        %v2734 = vld [vmem:[#allocation11 + $0x570] sm:$0xff]
        %v2735 = vld [vmem:[#allocation11 + $0x578] sm:$0xff]
        %v2736 = vld [vmem:[#allocation11 + $0x580] sm:$0xff]
        %v2737 = vld [vmem:[#allocation11 + $0x588] sm:$0xff]
        %v2738 = vld [vmem:[#allocation11 + $0x590] sm:$0xff]
        %v2739 = vld [vmem:[#allocation11 + $0x598] sm:$0xff]
        %v2740 = vld [vmem:[#allocation11 + $0x5a0] sm:$0xff]
        %v2741 = vld [vmem:[#allocation11 + $0x5a8] sm:$0xff]
        %v2742 = vld [vmem:[#allocation11 + $0x5b0] sm:$0xff]
        %v2743 = vld [vmem:[#allocation11 + $0x5b8] sm:$0xff]
        %v2744 = vld [vmem:[#allocation11 + $0x5c0] sm:$0xff]
        %v2745 = vld [vmem:[#allocation11 + $0x5c8] sm:$0xff]
        %v2746 = vld [vmem:[#allocation11 + $0x5d0] sm:$0xff]
        %v2747 = vld [vmem:[#allocation11 + $0x5d8] sm:$0xff]
        %v2748 = vld [vmem:[#allocation11 + $0x5e0] sm:$0xff]
        %v2749 = vld [vmem:[#allocation11 + $0x5e8] sm:$0xff]
        %v2750 = vld [vmem:[#allocation11 + $0x5f0] sm:$0xff]
        %v2751 = vld [vmem:[#allocation11 + $0x5f8] sm:$0xff]
        %v2752 = vld [vmem:[#allocation11 + $0x600] sm:$0xff]
        %v2753 = vld [vmem:[#allocation11 + $0x608] sm:$0xff]
        %v2754 = vld [vmem:[#allocation11 + $0x610] sm:$0xff]
        %v2755 = vld [vmem:[#allocation11 + $0x618] sm:$0xff]
        %v2756 = vld [vmem:[#allocation11 + $0x620] sm:$0xff]
        %v2757 = vld [vmem:[#allocation11 + $0x628] sm:$0xff]
        %v2758 = vld [vmem:[#allocation11 + $0x630] sm:$0xff]
        %v2759 = vld [vmem:[#allocation11 + $0x638] sm:$0xff]
        %v2760 = vld [vmem:[#allocation11 + $0x640] sm:$0xff]
        %v2761 = vld [vmem:[#allocation11 + $0x648] sm:$0xff]
        %v2762 = vld [vmem:[#allocation11 + $0x650] sm:$0xff]
        %v2763 = vld [vmem:[#allocation11 + $0x658] sm:$0xff]
        %v2764 = vld [vmem:[#allocation11 + $0x660] sm:$0xff]
        %v2765 = vld [vmem:[#allocation11 + $0x668] sm:$0xff]
        %v2766 = vld [vmem:[#allocation11 + $0x670] sm:$0xff]
        %v2767 = vld [vmem:[#allocation11 + $0x678] sm:$0xff]
        %v2768 = vld [vmem:[#allocation11 + $0x680] sm:$0xff]
        %v2769 = vld [vmem:[#allocation11 + $0x688] sm:$0xff]
        %v2770 = vld [vmem:[#allocation11 + $0x690] sm:$0xff]
        %v2771 = vld [vmem:[#allocation11 + $0x698] sm:$0xff]
        %v2772 = vld [vmem:[#allocation11 + $0x6a0] sm:$0xff]
        %v2773 = vld [vmem:[#allocation11 + $0x6a8] sm:$0xff]
        %v2774 = vld [vmem:[#allocation11 + $0x6b0] sm:$0xff]
        %v2775 = vld [vmem:[#allocation11 + $0x6b8] sm:$0xff]
        %v2776 = vld [vmem:[#allocation11 + $0x6c0] sm:$0xff]
        %v2777 = vld [vmem:[#allocation11 + $0x6c8] sm:$0xff]
        %v2778 = vld [vmem:[#allocation11 + $0x6d0] sm:$0xff]
        %v2779 = vld [vmem:[#allocation11 + $0x6d8] sm:$0xff]
        %v2780 = vld [vmem:[#allocation11 + $0x6e0] sm:$0xff]
        %v2781 = vld [vmem:[#allocation11 + $0x6e8] sm:$0xff]
        %v2782 = vld [vmem:[#allocation11 + $0x6f0] sm:$0xff]
        %v2783 = vld [vmem:[#allocation11 + $0x6f8] sm:$0xff]
        %v2784 = vld [vmem:[#allocation11 + $0x700] sm:$0xff]
        %v2785 = vld [vmem:[#allocation11 + $0x708] sm:$0xff]
        %v2786 = vld [vmem:[#allocation11 + $0x710] sm:$0xff]
        %v2787 = vld [vmem:[#allocation11 + $0x718] sm:$0xff]
        %v2788 = vld [vmem:[#allocation11 + $0x720] sm:$0xff]
        %v2789 = vld [vmem:[#allocation11 + $0x728] sm:$0xff]
        %v2790 = vld [vmem:[#allocation11 + $0x730] sm:$0xff]
        %v2791 = vld [vmem:[#allocation11 + $0x738] sm:$0xff]
        %v2792 = vld [vmem:[#allocation11 + $0x740] sm:$0xff]
        %v2793 = vld [vmem:[#allocation11 + $0x748] sm:$0xff]
        %v2794 = vld [vmem:[#allocation11 + $0x750] sm:$0xff]
        %v2795 = vld [vmem:[#allocation11 + $0x758] sm:$0xff]
        %v2796 = vld [vmem:[#allocation11 + $0x760] sm:$0xff]
        %v2797 = vld [vmem:[#allocation11 + $0x768] sm:$0xff]
        %v2798 = vld [vmem:[#allocation11 + $0x770] sm:$0xff]
        %v2799 = vld [vmem:[#allocation11 + $0x778] sm:$0xff]
        %v2800 = vld [vmem:[#allocation11 + $0x780] sm:$0xff]
        %v2801 = vld [vmem:[#allocation11 + $0x788] sm:$0xff]
        %v2802 = vld [vmem:[#allocation11 + $0x790] sm:$0xff]
        %v2803 = vld [vmem:[#allocation11 + $0x798] sm:$0xff]
        %v2804 = vld [vmem:[#allocation11 + $0x7a0] sm:$0xff]
        %v2805 = vld [vmem:[#allocation11 + $0x7a8] sm:$0xff]
        %v2806 = vld [vmem:[#allocation11 + $0x7b0] sm:$0xff]
        %v2807 = vld [vmem:[#allocation11 + $0x7b8] sm:$0xff]
        %v2808 = vld [vmem:[#allocation11 + $0x7c0] sm:$0xff]
        %v2809 = vld [vmem:[#allocation11 + $0x7c8] sm:$0xff]
        %v2810 = vld [vmem:[#allocation11 + $0x7d0] sm:$0xff]
        %v2811 = vld [vmem:[#allocation11 + $0x7d8] sm:$0xff]
        %v2812 = vld [vmem:[#allocation11 + $0x7e0] sm:$0xff]
        %v2813 = vld [vmem:[#allocation11 + $0x7e8] sm:$0xff]
        %v2814 = vld [vmem:[#allocation11 + $0x7f0] sm:$0xff]
        %v2815 = vld [vmem:[#allocation11 + $0x7f8] sm:$0xff]
        %v3072 = vunpack.c.l.b16 %v2560
        %v3073 = vunpack.c.h.b16 %v2560
        %v3074 = vunpack.c.l.b16 %v2561
        %v3075 = vunpack.c.h.b16 %v2561
        %v3076 = vunpack.c.l.b16 %v2562
        %v3077 = vunpack.c.h.b16 %v2562
        %v3078 = vunpack.c.l.b16 %v2563
        %v3079 = vunpack.c.h.b16 %v2563
        %v3080 = vunpack.c.l.b16 %v2564
        %v3081 = vunpack.c.h.b16 %v2564
        %v3082 = vunpack.c.l.b16 %v2565
        %v3083 = vunpack.c.h.b16 %v2565
        %v3084 = vunpack.c.l.b16 %v2566
        %v3085 = vunpack.c.h.b16 %v2566
        %v3086 = vunpack.c.l.b16 %v2567
        %v3087 = vunpack.c.h.b16 %v2567
        %v3088 = vunpack.c.l.b16 %v2568
        %v3089 = vunpack.c.h.b16 %v2568
        %v3090 = vunpack.c.l.b16 %v2569
        %v3091 = vunpack.c.h.b16 %v2569
        %v3092 = vunpack.c.l.b16 %v2570
        %v3093 = vunpack.c.h.b16 %v2570
        %v3094 = vunpack.c.l.b16 %v2571
        %v3095 = vunpack.c.h.b16 %v2571
        %v3096 = vunpack.c.l.b16 %v2572
        %v3097 = vunpack.c.h.b16 %v2572
        %v3098 = vunpack.c.l.b16 %v2573
        %v3099 = vunpack.c.h.b16 %v2573
        %v3100 = vunpack.c.l.b16 %v2574
        %v3101 = vunpack.c.h.b16 %v2574
        %v3102 = vunpack.c.l.b16 %v2575
        %v3103 = vunpack.c.h.b16 %v2575
        %v3104 = vunpack.c.l.b16 %v2576
        %v3105 = vunpack.c.h.b16 %v2576
        %v3106 = vunpack.c.l.b16 %v2577
        %v3107 = vunpack.c.h.b16 %v2577
        %v3108 = vunpack.c.l.b16 %v2578
        %v3109 = vunpack.c.h.b16 %v2578
        %v3110 = vunpack.c.l.b16 %v2579
        %v3111 = vunpack.c.h.b16 %v2579
        %v3112 = vunpack.c.l.b16 %v2580
        %v3113 = vunpack.c.h.b16 %v2580
        %v3114 = vunpack.c.l.b16 %v2581
        %v3115 = vunpack.c.h.b16 %v2581
        %v3116 = vunpack.c.l.b16 %v2582
        %v3117 = vunpack.c.h.b16 %v2582
        %v3118 = vunpack.c.l.b16 %v2583
        %v3119 = vunpack.c.h.b16 %v2583
        %v3120 = vunpack.c.l.b16 %v2584
        %v3121 = vunpack.c.h.b16 %v2584
        %v3122 = vunpack.c.l.b16 %v2585
        %v3123 = vunpack.c.h.b16 %v2585
        %v3124 = vunpack.c.l.b16 %v2586
        %v3125 = vunpack.c.h.b16 %v2586
        %v3126 = vunpack.c.l.b16 %v2587
        %v3127 = vunpack.c.h.b16 %v2587
        %v3128 = vunpack.c.l.b16 %v2588
        %v3129 = vunpack.c.h.b16 %v2588
        %v3130 = vunpack.c.l.b16 %v2589
        %v3131 = vunpack.c.h.b16 %v2589
        %v3132 = vunpack.c.l.b16 %v2590
        %v3133 = vunpack.c.h.b16 %v2590
        %v3134 = vunpack.c.l.b16 %v2591
        %v3135 = vunpack.c.h.b16 %v2591
        %v3136 = vunpack.c.l.b16 %v2592
        %v3137 = vunpack.c.h.b16 %v2592
        %v3138 = vunpack.c.l.b16 %v2593
        %v3139 = vunpack.c.h.b16 %v2593
        %v3140 = vunpack.c.l.b16 %v2594
        %v3141 = vunpack.c.h.b16 %v2594
        %v3142 = vunpack.c.l.b16 %v2595
        %v3143 = vunpack.c.h.b16 %v2595
        %v3144 = vunpack.c.l.b16 %v2596
        %v3145 = vunpack.c.h.b16 %v2596
        %v3146 = vunpack.c.l.b16 %v2597
        %v3147 = vunpack.c.h.b16 %v2597
        %v3148 = vunpack.c.l.b16 %v2598
        %v3149 = vunpack.c.h.b16 %v2598
        %v3150 = vunpack.c.l.b16 %v2599
        %v3151 = vunpack.c.h.b16 %v2599
        %v3152 = vunpack.c.l.b16 %v2600
        %v3153 = vunpack.c.h.b16 %v2600
        %v3154 = vunpack.c.l.b16 %v2601
        %v3155 = vunpack.c.h.b16 %v2601
        %v3156 = vunpack.c.l.b16 %v2602
        %v3157 = vunpack.c.h.b16 %v2602
        %v3158 = vunpack.c.l.b16 %v2603
        %v3159 = vunpack.c.h.b16 %v2603
        %v3160 = vunpack.c.l.b16 %v2604
        %v3161 = vunpack.c.h.b16 %v2604
        %v3162 = vunpack.c.l.b16 %v2605
        %v3163 = vunpack.c.h.b16 %v2605
        %v3164 = vunpack.c.l.b16 %v2606
        %v3165 = vunpack.c.h.b16 %v2606
        %v3166 = vunpack.c.l.b16 %v2607
        %v3167 = vunpack.c.h.b16 %v2607
        %v3168 = vunpack.c.l.b16 %v2608
        %v3169 = vunpack.c.h.b16 %v2608
        %v3170 = vunpack.c.l.b16 %v2609
        %v3171 = vunpack.c.h.b16 %v2609
        %v3172 = vunpack.c.l.b16 %v2610
        %v3173 = vunpack.c.h.b16 %v2610
        %v3174 = vunpack.c.l.b16 %v2611
        %v3175 = vunpack.c.h.b16 %v2611
        %v3176 = vunpack.c.l.b16 %v2612
        %v3177 = vunpack.c.h.b16 %v2612
        %v3178 = vunpack.c.l.b16 %v2613
        %v3179 = vunpack.c.h.b16 %v2613
        %v3180 = vunpack.c.l.b16 %v2614
        %v3181 = vunpack.c.h.b16 %v2614
        %v3182 = vunpack.c.l.b16 %v2615
        %v3183 = vunpack.c.h.b16 %v2615
        %v3184 = vunpack.c.l.b16 %v2616
        %v3185 = vunpack.c.h.b16 %v2616
        %v3186 = vunpack.c.l.b16 %v2617
        %v3187 = vunpack.c.h.b16 %v2617
        %v3188 = vunpack.c.l.b16 %v2618
        %v3189 = vunpack.c.h.b16 %v2618
        %v3190 = vunpack.c.l.b16 %v2619
        %v3191 = vunpack.c.h.b16 %v2619
        %v3192 = vunpack.c.l.b16 %v2620
        %v3193 = vunpack.c.h.b16 %v2620
        %v3194 = vunpack.c.l.b16 %v2621
        %v3195 = vunpack.c.h.b16 %v2621
        %v3196 = vunpack.c.l.b16 %v2622
        %v3197 = vunpack.c.h.b16 %v2622
        %v3198 = vunpack.c.l.b16 %v2623
        %v3199 = vunpack.c.h.b16 %v2623
        %v3200 = vunpack.c.l.b16 %v2624
        %v3201 = vunpack.c.h.b16 %v2624
        %v3202 = vunpack.c.l.b16 %v2625
        %v3203 = vunpack.c.h.b16 %v2625
        %v3204 = vunpack.c.l.b16 %v2626
        %v3205 = vunpack.c.h.b16 %v2626
        %v3206 = vunpack.c.l.b16 %v2627
        %v3207 = vunpack.c.h.b16 %v2627
        %v3208 = vunpack.c.l.b16 %v2628
        %v3209 = vunpack.c.h.b16 %v2628
        %v3210 = vunpack.c.l.b16 %v2629
        %v3211 = vunpack.c.h.b16 %v2629
        %v3212 = vunpack.c.l.b16 %v2630
        %v3213 = vunpack.c.h.b16 %v2630
        %v3214 = vunpack.c.l.b16 %v2631
        %v3215 = vunpack.c.h.b16 %v2631
        %v3216 = vunpack.c.l.b16 %v2632
        %v3217 = vunpack.c.h.b16 %v2632
        %v3218 = vunpack.c.l.b16 %v2633
        %v3219 = vunpack.c.h.b16 %v2633
        %v3220 = vunpack.c.l.b16 %v2634
        %v3221 = vunpack.c.h.b16 %v2634
        %v3222 = vunpack.c.l.b16 %v2635
        %v3223 = vunpack.c.h.b16 %v2635
        %v3224 = vunpack.c.l.b16 %v2636
        %v3225 = vunpack.c.h.b16 %v2636
        %v3226 = vunpack.c.l.b16 %v2637
        %v3227 = vunpack.c.h.b16 %v2637
        %v3228 = vunpack.c.l.b16 %v2638
        %v3229 = vunpack.c.h.b16 %v2638
        %v3230 = vunpack.c.l.b16 %v2639
        %v3231 = vunpack.c.h.b16 %v2639
        %v3232 = vunpack.c.l.b16 %v2640
        %v3233 = vunpack.c.h.b16 %v2640
        %v3234 = vunpack.c.l.b16 %v2641
        %v3235 = vunpack.c.h.b16 %v2641
        %v3236 = vunpack.c.l.b16 %v2642
        %v3237 = vunpack.c.h.b16 %v2642
        %v3238 = vunpack.c.l.b16 %v2643
        %v3239 = vunpack.c.h.b16 %v2643
        %v3240 = vunpack.c.l.b16 %v2644
        %v3241 = vunpack.c.h.b16 %v2644
        %v3242 = vunpack.c.l.b16 %v2645
        %v3243 = vunpack.c.h.b16 %v2645
        %v3244 = vunpack.c.l.b16 %v2646
        %v3245 = vunpack.c.h.b16 %v2646
        %v3246 = vunpack.c.l.b16 %v2647
        %v3247 = vunpack.c.h.b16 %v2647
        %v3248 = vunpack.c.l.b16 %v2648
        %v3249 = vunpack.c.h.b16 %v2648
        %v3250 = vunpack.c.l.b16 %v2649
        %v3251 = vunpack.c.h.b16 %v2649
        %v3252 = vunpack.c.l.b16 %v2650
        %v3253 = vunpack.c.h.b16 %v2650
        %v3254 = vunpack.c.l.b16 %v2651
        %v3255 = vunpack.c.h.b16 %v2651
        %v3256 = vunpack.c.l.b16 %v2652
        %v3257 = vunpack.c.h.b16 %v2652
        %v3258 = vunpack.c.l.b16 %v2653
        %v3259 = vunpack.c.h.b16 %v2653
        %v3260 = vunpack.c.l.b16 %v2654
        %v3261 = vunpack.c.h.b16 %v2654
        %v3262 = vunpack.c.l.b16 %v2655
        %v3263 = vunpack.c.h.b16 %v2655
        %v3264 = vunpack.c.l.b16 %v2656
        %v3265 = vunpack.c.h.b16 %v2656
        %v3266 = vunpack.c.l.b16 %v2657
        %v3267 = vunpack.c.h.b16 %v2657
        %v3268 = vunpack.c.l.b16 %v2658
        %v3269 = vunpack.c.h.b16 %v2658
        %v3270 = vunpack.c.l.b16 %v2659
        %v3271 = vunpack.c.h.b16 %v2659
        %v3272 = vunpack.c.l.b16 %v2660
        %v3273 = vunpack.c.h.b16 %v2660
        %v3274 = vunpack.c.l.b16 %v2661
        %v3275 = vunpack.c.h.b16 %v2661
        %v3276 = vunpack.c.l.b16 %v2662
        %v3277 = vunpack.c.h.b16 %v2662
        %v3278 = vunpack.c.l.b16 %v2663
        %v3279 = vunpack.c.h.b16 %v2663
        %v3280 = vunpack.c.l.b16 %v2664
        %v3281 = vunpack.c.h.b16 %v2664
        %v3282 = vunpack.c.l.b16 %v2665
        %v3283 = vunpack.c.h.b16 %v2665
        %v3284 = vunpack.c.l.b16 %v2666
        %v3285 = vunpack.c.h.b16 %v2666
        %v3286 = vunpack.c.l.b16 %v2667
        %v3287 = vunpack.c.h.b16 %v2667
        %v3288 = vunpack.c.l.b16 %v2668
        %v3289 = vunpack.c.h.b16 %v2668
        %v3290 = vunpack.c.l.b16 %v2669
        %v3291 = vunpack.c.h.b16 %v2669
        %v3292 = vunpack.c.l.b16 %v2670
        %v3293 = vunpack.c.h.b16 %v2670
        %v3294 = vunpack.c.l.b16 %v2671
        %v3295 = vunpack.c.h.b16 %v2671
        %v3296 = vunpack.c.l.b16 %v2672
        %v3297 = vunpack.c.h.b16 %v2672
        %v3298 = vunpack.c.l.b16 %v2673
        %v3299 = vunpack.c.h.b16 %v2673
        %v3300 = vunpack.c.l.b16 %v2674
        %v3301 = vunpack.c.h.b16 %v2674
        %v3302 = vunpack.c.l.b16 %v2675
        %v3303 = vunpack.c.h.b16 %v2675
        %v3304 = vunpack.c.l.b16 %v2676
        %v3305 = vunpack.c.h.b16 %v2676
        %v3306 = vunpack.c.l.b16 %v2677
        %v3307 = vunpack.c.h.b16 %v2677
        %v3308 = vunpack.c.l.b16 %v2678
        %v3309 = vunpack.c.h.b16 %v2678
        %v3310 = vunpack.c.l.b16 %v2679
        %v3311 = vunpack.c.h.b16 %v2679
        %v3312 = vunpack.c.l.b16 %v2680
        %v3313 = vunpack.c.h.b16 %v2680
        %v3314 = vunpack.c.l.b16 %v2681
        %v3315 = vunpack.c.h.b16 %v2681
        %v3316 = vunpack.c.l.b16 %v2682
        %v3317 = vunpack.c.h.b16 %v2682
        %v3318 = vunpack.c.l.b16 %v2683
        %v3319 = vunpack.c.h.b16 %v2683
        %v3320 = vunpack.c.l.b16 %v2684
        %v3321 = vunpack.c.h.b16 %v2684
        %v3322 = vunpack.c.l.b16 %v2685
        %v3323 = vunpack.c.h.b16 %v2685
        %v3324 = vunpack.c.l.b16 %v2686
        %v3325 = vunpack.c.h.b16 %v2686
        %v3326 = vunpack.c.l.b16 %v2687
        %v3327 = vunpack.c.h.b16 %v2687
        %v3328 = vunpack.c.l.b16 %v2688
        %v3329 = vunpack.c.h.b16 %v2688
        %v3330 = vunpack.c.l.b16 %v2689
        %v3331 = vunpack.c.h.b16 %v2689
        %v3332 = vunpack.c.l.b16 %v2690
        %v3333 = vunpack.c.h.b16 %v2690
        %v3334 = vunpack.c.l.b16 %v2691
        %v3335 = vunpack.c.h.b16 %v2691
        %v3336 = vunpack.c.l.b16 %v2692
        %v3337 = vunpack.c.h.b16 %v2692
        %v3338 = vunpack.c.l.b16 %v2693
        %v3339 = vunpack.c.h.b16 %v2693
        %v3340 = vunpack.c.l.b16 %v2694
        %v3341 = vunpack.c.h.b16 %v2694
        %v3342 = vunpack.c.l.b16 %v2695
        %v3343 = vunpack.c.h.b16 %v2695
        %v3344 = vunpack.c.l.b16 %v2696
        %v3345 = vunpack.c.h.b16 %v2696
        %v3346 = vunpack.c.l.b16 %v2697
        %v3347 = vunpack.c.h.b16 %v2697
        %v3348 = vunpack.c.l.b16 %v2698
        %v3349 = vunpack.c.h.b16 %v2698
        %v3350 = vunpack.c.l.b16 %v2699
        %v3351 = vunpack.c.h.b16 %v2699
        %v3352 = vunpack.c.l.b16 %v2700
        %v3353 = vunpack.c.h.b16 %v2700
        %v3354 = vunpack.c.l.b16 %v2701
        %v3355 = vunpack.c.h.b16 %v2701
        %v3356 = vunpack.c.l.b16 %v2702
        %v3357 = vunpack.c.h.b16 %v2702
        %v3358 = vunpack.c.l.b16 %v2703
        %v3359 = vunpack.c.h.b16 %v2703
        %v3360 = vunpack.c.l.b16 %v2704
        %v3361 = vunpack.c.h.b16 %v2704
        %v3362 = vunpack.c.l.b16 %v2705
        %v3363 = vunpack.c.h.b16 %v2705
        %v3364 = vunpack.c.l.b16 %v2706
        %v3365 = vunpack.c.h.b16 %v2706
        %v3366 = vunpack.c.l.b16 %v2707
        %v3367 = vunpack.c.h.b16 %v2707
        %v3368 = vunpack.c.l.b16 %v2708
        %v3369 = vunpack.c.h.b16 %v2708
        %v3370 = vunpack.c.l.b16 %v2709
        %v3371 = vunpack.c.h.b16 %v2709
        %v3372 = vunpack.c.l.b16 %v2710
        %v3373 = vunpack.c.h.b16 %v2710
        %v3374 = vunpack.c.l.b16 %v2711
        %v3375 = vunpack.c.h.b16 %v2711
        %v3376 = vunpack.c.l.b16 %v2712
        %v3377 = vunpack.c.h.b16 %v2712
        %v3378 = vunpack.c.l.b16 %v2713
        %v3379 = vunpack.c.h.b16 %v2713
        %v3380 = vunpack.c.l.b16 %v2714
        %v3381 = vunpack.c.h.b16 %v2714
        %v3382 = vunpack.c.l.b16 %v2715
        %v3383 = vunpack.c.h.b16 %v2715
        %v3384 = vunpack.c.l.b16 %v2716
        %v3385 = vunpack.c.h.b16 %v2716
        %v3386 = vunpack.c.l.b16 %v2717
        %v3387 = vunpack.c.h.b16 %v2717
        %v3388 = vunpack.c.l.b16 %v2718
        %v3389 = vunpack.c.h.b16 %v2718
        %v3390 = vunpack.c.l.b16 %v2719
        %v3391 = vunpack.c.h.b16 %v2719
        %v3392 = vunpack.c.l.b16 %v2720
        %v3393 = vunpack.c.h.b16 %v2720
        %v3394 = vunpack.c.l.b16 %v2721
        %v3395 = vunpack.c.h.b16 %v2721
        %v3396 = vunpack.c.l.b16 %v2722
        %v3397 = vunpack.c.h.b16 %v2722
        %v3398 = vunpack.c.l.b16 %v2723
        %v3399 = vunpack.c.h.b16 %v2723
        %v3400 = vunpack.c.l.b16 %v2724
        %v3401 = vunpack.c.h.b16 %v2724
        %v3402 = vunpack.c.l.b16 %v2725
        %v3403 = vunpack.c.h.b16 %v2725
        %v3404 = vunpack.c.l.b16 %v2726
        %v3405 = vunpack.c.h.b16 %v2726
        %v3406 = vunpack.c.l.b16 %v2727
        %v3407 = vunpack.c.h.b16 %v2727
        %v3408 = vunpack.c.l.b16 %v2728
        %v3409 = vunpack.c.h.b16 %v2728
        %v3410 = vunpack.c.l.b16 %v2729
        %v3411 = vunpack.c.h.b16 %v2729
        %v3412 = vunpack.c.l.b16 %v2730
        %v3413 = vunpack.c.h.b16 %v2730
        %v3414 = vunpack.c.l.b16 %v2731
        %v3415 = vunpack.c.h.b16 %v2731
        %v3416 = vunpack.c.l.b16 %v2732
        %v3417 = vunpack.c.h.b16 %v2732
        %v3418 = vunpack.c.l.b16 %v2733
        %v3419 = vunpack.c.h.b16 %v2733
        %v3420 = vunpack.c.l.b16 %v2734
        %v3421 = vunpack.c.h.b16 %v2734
        %v3422 = vunpack.c.l.b16 %v2735
        %v3423 = vunpack.c.h.b16 %v2735
        %v3424 = vunpack.c.l.b16 %v2736
        %v3425 = vunpack.c.h.b16 %v2736
        %v3426 = vunpack.c.l.b16 %v2737
        %v3427 = vunpack.c.h.b16 %v2737
        %v3428 = vunpack.c.l.b16 %v2738
        %v3429 = vunpack.c.h.b16 %v2738
        %v3430 = vunpack.c.l.b16 %v2739
        %v3431 = vunpack.c.h.b16 %v2739
        %v3432 = vunpack.c.l.b16 %v2740
        %v3433 = vunpack.c.h.b16 %v2740
        %v3434 = vunpack.c.l.b16 %v2741
        %v3435 = vunpack.c.h.b16 %v2741
        %v3436 = vunpack.c.l.b16 %v2742
        %v3437 = vunpack.c.h.b16 %v2742
        %v3438 = vunpack.c.l.b16 %v2743
        %v3439 = vunpack.c.h.b16 %v2743
        %v3440 = vunpack.c.l.b16 %v2744
        %v3441 = vunpack.c.h.b16 %v2744
        %v3442 = vunpack.c.l.b16 %v2745
        %v3443 = vunpack.c.h.b16 %v2745
        %v3444 = vunpack.c.l.b16 %v2746
        %v3445 = vunpack.c.h.b16 %v2746
        %v3446 = vunpack.c.l.b16 %v2747
        %v3447 = vunpack.c.h.b16 %v2747
        %v3448 = vunpack.c.l.b16 %v2748
        %v3449 = vunpack.c.h.b16 %v2748
        %v3450 = vunpack.c.l.b16 %v2749
        %v3451 = vunpack.c.h.b16 %v2749
        %v3452 = vunpack.c.l.b16 %v2750
        %v3453 = vunpack.c.h.b16 %v2750
        %v3454 = vunpack.c.l.b16 %v2751
        %v3455 = vunpack.c.h.b16 %v2751
        %v3456 = vunpack.c.l.b16 %v2752
        %v3457 = vunpack.c.h.b16 %v2752
        %v3458 = vunpack.c.l.b16 %v2753
        %v3459 = vunpack.c.h.b16 %v2753
        %v3460 = vunpack.c.l.b16 %v2754
        %v3461 = vunpack.c.h.b16 %v2754
        %v3462 = vunpack.c.l.b16 %v2755
        %v3463 = vunpack.c.h.b16 %v2755
        %v3464 = vunpack.c.l.b16 %v2756
        %v3465 = vunpack.c.h.b16 %v2756
        %v3466 = vunpack.c.l.b16 %v2757
        %v3467 = vunpack.c.h.b16 %v2757
        %v3468 = vunpack.c.l.b16 %v2758
        %v3469 = vunpack.c.h.b16 %v2758
        %v3470 = vunpack.c.l.b16 %v2759
        %v3471 = vunpack.c.h.b16 %v2759
        %v3472 = vunpack.c.l.b16 %v2760
        %v3473 = vunpack.c.h.b16 %v2760
        %v3474 = vunpack.c.l.b16 %v2761
        %v3475 = vunpack.c.h.b16 %v2761
        %v3476 = vunpack.c.l.b16 %v2762
        %v3477 = vunpack.c.h.b16 %v2762
        %v3478 = vunpack.c.l.b16 %v2763
        %v3479 = vunpack.c.h.b16 %v2763
        %v3480 = vunpack.c.l.b16 %v2764
        %v3481 = vunpack.c.h.b16 %v2764
        %v3482 = vunpack.c.l.b16 %v2765
        %v3483 = vunpack.c.h.b16 %v2765
        %v3484 = vunpack.c.l.b16 %v2766
        %v3485 = vunpack.c.h.b16 %v2766
        %v3486 = vunpack.c.l.b16 %v2767
        %v3487 = vunpack.c.h.b16 %v2767
        %v3488 = vunpack.c.l.b16 %v2768
        %v3489 = vunpack.c.h.b16 %v2768
        %v3490 = vunpack.c.l.b16 %v2769
        %v3491 = vunpack.c.h.b16 %v2769
        %v3492 = vunpack.c.l.b16 %v2770
        %v3493 = vunpack.c.h.b16 %v2770
        %v3494 = vunpack.c.l.b16 %v2771
        %v3495 = vunpack.c.h.b16 %v2771
        %v3496 = vunpack.c.l.b16 %v2772
        %v3497 = vunpack.c.h.b16 %v2772
        %v3498 = vunpack.c.l.b16 %v2773
        %v3499 = vunpack.c.h.b16 %v2773
        %v3500 = vunpack.c.l.b16 %v2774
        %v3501 = vunpack.c.h.b16 %v2774
        %v3502 = vunpack.c.l.b16 %v2775
        %v3503 = vunpack.c.h.b16 %v2775
        %v3504 = vunpack.c.l.b16 %v2776
        %v3505 = vunpack.c.h.b16 %v2776
        %v3506 = vunpack.c.l.b16 %v2777
        %v3507 = vunpack.c.h.b16 %v2777
        %v3508 = vunpack.c.l.b16 %v2778
        %v3509 = vunpack.c.h.b16 %v2778
        %v3510 = vunpack.c.l.b16 %v2779
        %v3511 = vunpack.c.h.b16 %v2779
        %v3512 = vunpack.c.l.b16 %v2780
        %v3513 = vunpack.c.h.b16 %v2780
        %v3514 = vunpack.c.l.b16 %v2781
        %v3515 = vunpack.c.h.b16 %v2781
        %v3516 = vunpack.c.l.b16 %v2782
        %v3517 = vunpack.c.h.b16 %v2782
        %v3518 = vunpack.c.l.b16 %v2783
        %v3519 = vunpack.c.h.b16 %v2783
        %v3520 = vunpack.c.l.b16 %v2784
        %v3521 = vunpack.c.h.b16 %v2784
        %v3522 = vunpack.c.l.b16 %v2785
        %v3523 = vunpack.c.h.b16 %v2785
        %v3524 = vunpack.c.l.b16 %v2786
        %v3525 = vunpack.c.h.b16 %v2786
        %v3526 = vunpack.c.l.b16 %v2787
        %v3527 = vunpack.c.h.b16 %v2787
        %v3528 = vunpack.c.l.b16 %v2788
        %v3529 = vunpack.c.h.b16 %v2788
        %v3530 = vunpack.c.l.b16 %v2789
        %v3531 = vunpack.c.h.b16 %v2789
        %v3532 = vunpack.c.l.b16 %v2790
        %v3533 = vunpack.c.h.b16 %v2790
        %v3534 = vunpack.c.l.b16 %v2791
        %v3535 = vunpack.c.h.b16 %v2791
        %v3536 = vunpack.c.l.b16 %v2792
        %v3537 = vunpack.c.h.b16 %v2792
        %v3538 = vunpack.c.l.b16 %v2793
        %v3539 = vunpack.c.h.b16 %v2793
        %v3540 = vunpack.c.l.b16 %v2794
        %v3541 = vunpack.c.h.b16 %v2794
        %v3542 = vunpack.c.l.b16 %v2795
        %v3543 = vunpack.c.h.b16 %v2795
        %v3544 = vunpack.c.l.b16 %v2796
        %v3545 = vunpack.c.h.b16 %v2796
        %v3546 = vunpack.c.l.b16 %v2797
        %v3547 = vunpack.c.h.b16 %v2797
        %v3548 = vunpack.c.l.b16 %v2798
        %v3549 = vunpack.c.h.b16 %v2798
        %v3550 = vunpack.c.l.b16 %v2799
        %v3551 = vunpack.c.h.b16 %v2799
        %v3552 = vunpack.c.l.b16 %v2800
        %v3553 = vunpack.c.h.b16 %v2800
        %v3554 = vunpack.c.l.b16 %v2801
        %v3555 = vunpack.c.h.b16 %v2801
        %v3556 = vunpack.c.l.b16 %v2802
        %v3557 = vunpack.c.h.b16 %v2802
        %v3558 = vunpack.c.l.b16 %v2803
        %v3559 = vunpack.c.h.b16 %v2803
        %v3560 = vunpack.c.l.b16 %v2804
        %v3561 = vunpack.c.h.b16 %v2804
        %v3562 = vunpack.c.l.b16 %v2805
        %v3563 = vunpack.c.h.b16 %v2805
        %v3564 = vunpack.c.l.b16 %v2806
        %v3565 = vunpack.c.h.b16 %v2806
        %v3566 = vunpack.c.l.b16 %v2807
        %v3567 = vunpack.c.h.b16 %v2807
        %v3568 = vunpack.c.l.b16 %v2808
        %v3569 = vunpack.c.h.b16 %v2808
        %v3570 = vunpack.c.l.b16 %v2809
        %v3571 = vunpack.c.h.b16 %v2809
        %v3572 = vunpack.c.l.b16 %v2810
        %v3573 = vunpack.c.h.b16 %v2810
        %v3574 = vunpack.c.l.b16 %v2811
        %v3575 = vunpack.c.h.b16 %v2811
        %v3576 = vunpack.c.l.b16 %v2812
        %v3577 = vunpack.c.h.b16 %v2812
        %v3578 = vunpack.c.l.b16 %v2813
        %v3579 = vunpack.c.h.b16 %v2813
        %v3580 = vunpack.c.l.b16 %v2814
        %v3581 = vunpack.c.h.b16 %v2814
        %v3582 = vunpack.c.l.b16 %v2815
        %v3583 = vunpack.c.h.b16 %v2815
        %v3584 = vpack.c.b16 %v3088, %v3072
        %v3585 = vpack.c.b16 %v3089, %v3073
        %v3586 = vpack.c.b16 %v3090, %v3074
        %v3587 = vpack.c.b16 %v3091, %v3075
        %v3588 = vpack.c.b16 %v3092, %v3076
        %v3589 = vpack.c.b16 %v3093, %v3077
        %v3590 = vpack.c.b16 %v3094, %v3078
        %v3591 = vpack.c.b16 %v3095, %v3079
        %v3592 = vpack.c.b16 %v3096, %v3080
        %v3593 = vpack.c.b16 %v3097, %v3081
        %v3594 = vpack.c.b16 %v3098, %v3082
        %v3595 = vpack.c.b16 %v3099, %v3083
        %v3596 = vpack.c.b16 %v3100, %v3084
        %v3597 = vpack.c.b16 %v3101, %v3085
        %v3598 = vpack.c.b16 %v3102, %v3086
        %v3599 = vpack.c.b16 %v3103, %v3087
        %v3600 = vpack.c.b16 %v3120, %v3104
        %v3601 = vpack.c.b16 %v3121, %v3105
        %v3602 = vpack.c.b16 %v3122, %v3106
        %v3603 = vpack.c.b16 %v3123, %v3107
        %v3604 = vpack.c.b16 %v3124, %v3108
        %v3605 = vpack.c.b16 %v3125, %v3109
        %v3606 = vpack.c.b16 %v3126, %v3110
        %v3607 = vpack.c.b16 %v3127, %v3111
        %v3608 = vpack.c.b16 %v3128, %v3112
        %v3609 = vpack.c.b16 %v3129, %v3113
        %v3610 = vpack.c.b16 %v3130, %v3114
        %v3611 = vpack.c.b16 %v3131, %v3115
        %v3612 = vpack.c.b16 %v3132, %v3116
        %v3613 = vpack.c.b16 %v3133, %v3117
        %v3614 = vpack.c.b16 %v3134, %v3118
        %v3615 = vpack.c.b16 %v3135, %v3119
        %v3616 = vpack.c.b16 %v3152, %v3136
        %v3617 = vpack.c.b16 %v3153, %v3137
        %v3618 = vpack.c.b16 %v3154, %v3138
        %v3619 = vpack.c.b16 %v3155, %v3139
        %v3620 = vpack.c.b16 %v3156, %v3140
        %v3621 = vpack.c.b16 %v3157, %v3141
        %v3622 = vpack.c.b16 %v3158, %v3142
        %v3623 = vpack.c.b16 %v3159, %v3143
        %v3624 = vpack.c.b16 %v3160, %v3144
        %v3625 = vpack.c.b16 %v3161, %v3145
        %v3626 = vpack.c.b16 %v3162, %v3146
        %v3627 = vpack.c.b16 %v3163, %v3147
        %v3628 = vpack.c.b16 %v3164, %v3148
        %v3629 = vpack.c.b16 %v3165, %v3149
        %v3630 = vpack.c.b16 %v3166, %v3150
        %v3631 = vpack.c.b16 %v3167, %v3151
        %v3632 = vpack.c.b16 %v3184, %v3168
        %v3633 = vpack.c.b16 %v3185, %v3169
        %v3634 = vpack.c.b16 %v3186, %v3170
        %v3635 = vpack.c.b16 %v3187, %v3171
        %v3636 = vpack.c.b16 %v3188, %v3172
        %v3637 = vpack.c.b16 %v3189, %v3173
        %v3638 = vpack.c.b16 %v3190, %v3174
        %v3639 = vpack.c.b16 %v3191, %v3175
        %v3640 = vpack.c.b16 %v3192, %v3176
        %v3641 = vpack.c.b16 %v3193, %v3177
        %v3642 = vpack.c.b16 %v3194, %v3178
        %v3643 = vpack.c.b16 %v3195, %v3179
        %v3644 = vpack.c.b16 %v3196, %v3180
        %v3645 = vpack.c.b16 %v3197, %v3181
        %v3646 = vpack.c.b16 %v3198, %v3182
        %v3647 = vpack.c.b16 %v3199, %v3183
        %v3648 = vpack.c.b16 %v3216, %v3200
        %v3649 = vpack.c.b16 %v3217, %v3201
        %v3650 = vpack.c.b16 %v3218, %v3202
        %v3651 = vpack.c.b16 %v3219, %v3203
        %v3652 = vpack.c.b16 %v3220, %v3204
        %v3653 = vpack.c.b16 %v3221, %v3205
        %v3654 = vpack.c.b16 %v3222, %v3206
        %v3655 = vpack.c.b16 %v3223, %v3207
        %v3656 = vpack.c.b16 %v3224, %v3208
        %v3657 = vpack.c.b16 %v3225, %v3209
        %v3658 = vpack.c.b16 %v3226, %v3210
        %v3659 = vpack.c.b16 %v3227, %v3211
        %v3660 = vpack.c.b16 %v3228, %v3212
        %v3661 = vpack.c.b16 %v3229, %v3213
        %v3662 = vpack.c.b16 %v3230, %v3214
        %v3663 = vpack.c.b16 %v3231, %v3215
        %v3664 = vpack.c.b16 %v3248, %v3232
        %v3665 = vpack.c.b16 %v3249, %v3233
        %v3666 = vpack.c.b16 %v3250, %v3234
        %v3667 = vpack.c.b16 %v3251, %v3235
        %v3668 = vpack.c.b16 %v3252, %v3236
        %v3669 = vpack.c.b16 %v3253, %v3237
        %v3670 = vpack.c.b16 %v3254, %v3238
        %v3671 = vpack.c.b16 %v3255, %v3239
        %v3672 = vpack.c.b16 %v3256, %v3240
        %v3673 = vpack.c.b16 %v3257, %v3241
        %v3674 = vpack.c.b16 %v3258, %v3242
        %v3675 = vpack.c.b16 %v3259, %v3243
        %v3676 = vpack.c.b16 %v3260, %v3244
        %v3677 = vpack.c.b16 %v3261, %v3245
        %v3678 = vpack.c.b16 %v3262, %v3246
        %v3679 = vpack.c.b16 %v3263, %v3247
        %v3680 = vpack.c.b16 %v3280, %v3264
        %v3681 = vpack.c.b16 %v3281, %v3265
        %v3682 = vpack.c.b16 %v3282, %v3266
        %v3683 = vpack.c.b16 %v3283, %v3267
        %v3684 = vpack.c.b16 %v3284, %v3268
        %v3685 = vpack.c.b16 %v3285, %v3269
        %v3686 = vpack.c.b16 %v3286, %v3270
        %v3687 = vpack.c.b16 %v3287, %v3271
        %v3688 = vpack.c.b16 %v3288, %v3272
        %v3689 = vpack.c.b16 %v3289, %v3273
        %v3690 = vpack.c.b16 %v3290, %v3274
        %v3691 = vpack.c.b16 %v3291, %v3275
        %v3692 = vpack.c.b16 %v3292, %v3276
        %v3693 = vpack.c.b16 %v3293, %v3277
        %v3694 = vpack.c.b16 %v3294, %v3278
        %v3695 = vpack.c.b16 %v3295, %v3279
        %v3696 = vpack.c.b16 %v3312, %v3296
        %v3697 = vpack.c.b16 %v3313, %v3297
        %v3698 = vpack.c.b16 %v3314, %v3298
        %v3699 = vpack.c.b16 %v3315, %v3299
        %v3700 = vpack.c.b16 %v3316, %v3300
        %v3701 = vpack.c.b16 %v3317, %v3301
        %v3702 = vpack.c.b16 %v3318, %v3302
        %v3703 = vpack.c.b16 %v3319, %v3303
        %v3704 = vpack.c.b16 %v3320, %v3304
        %v3705 = vpack.c.b16 %v3321, %v3305
        %v3706 = vpack.c.b16 %v3322, %v3306
        %v3707 = vpack.c.b16 %v3323, %v3307
        %v3708 = vpack.c.b16 %v3324, %v3308
        %v3709 = vpack.c.b16 %v3325, %v3309
        %v3710 = vpack.c.b16 %v3326, %v3310
        %v3711 = vpack.c.b16 %v3327, %v3311
        %v3712 = vpack.c.b16 %v3344, %v3328
        %v3713 = vpack.c.b16 %v3345, %v3329
        %v3714 = vpack.c.b16 %v3346, %v3330
        %v3715 = vpack.c.b16 %v3347, %v3331
        %v3716 = vpack.c.b16 %v3348, %v3332
        %v3717 = vpack.c.b16 %v3349, %v3333
        %v3718 = vpack.c.b16 %v3350, %v3334
        %v3719 = vpack.c.b16 %v3351, %v3335
        %v3720 = vpack.c.b16 %v3352, %v3336
        %v3721 = vpack.c.b16 %v3353, %v3337
        %v3722 = vpack.c.b16 %v3354, %v3338
        %v3723 = vpack.c.b16 %v3355, %v3339
        %v3724 = vpack.c.b16 %v3356, %v3340
        %v3725 = vpack.c.b16 %v3357, %v3341
        %v3726 = vpack.c.b16 %v3358, %v3342
        %v3727 = vpack.c.b16 %v3359, %v3343
        %v3728 = vpack.c.b16 %v3376, %v3360
        %v3729 = vpack.c.b16 %v3377, %v3361
        %v3730 = vpack.c.b16 %v3378, %v3362
        %v3731 = vpack.c.b16 %v3379, %v3363
        %v3732 = vpack.c.b16 %v3380, %v3364
        %v3733 = vpack.c.b16 %v3381, %v3365
        %v3734 = vpack.c.b16 %v3382, %v3366
        %v3735 = vpack.c.b16 %v3383, %v3367
        %v3736 = vpack.c.b16 %v3384, %v3368
        %v3737 = vpack.c.b16 %v3385, %v3369
        %v3738 = vpack.c.b16 %v3386, %v3370
        %v3739 = vpack.c.b16 %v3387, %v3371
        %v3740 = vpack.c.b16 %v3388, %v3372
        %v3741 = vpack.c.b16 %v3389, %v3373
        %v3742 = vpack.c.b16 %v3390, %v3374
        %v3743 = vpack.c.b16 %v3391, %v3375
        %v3744 = vpack.c.b16 %v3408, %v3392
        %v3745 = vpack.c.b16 %v3409, %v3393
        %v3746 = vpack.c.b16 %v3410, %v3394
        %v3747 = vpack.c.b16 %v3411, %v3395
        %v3748 = vpack.c.b16 %v3412, %v3396
        %v3749 = vpack.c.b16 %v3413, %v3397
        %v3750 = vpack.c.b16 %v3414, %v3398
        %v3751 = vpack.c.b16 %v3415, %v3399
        %v3752 = vpack.c.b16 %v3416, %v3400
        %v3753 = vpack.c.b16 %v3417, %v3401
        %v3754 = vpack.c.b16 %v3418, %v3402
        %v3755 = vpack.c.b16 %v3419, %v3403
        %v3756 = vpack.c.b16 %v3420, %v3404
        %v3757 = vpack.c.b16 %v3421, %v3405
        %v3758 = vpack.c.b16 %v3422, %v3406
        %v3759 = vpack.c.b16 %v3423, %v3407
        %v3760 = vpack.c.b16 %v3440, %v3424
        %v3761 = vpack.c.b16 %v3441, %v3425
        %v3762 = vpack.c.b16 %v3442, %v3426
        %v3763 = vpack.c.b16 %v3443, %v3427
        %v3764 = vpack.c.b16 %v3444, %v3428
        %v3765 = vpack.c.b16 %v3445, %v3429
        %v3766 = vpack.c.b16 %v3446, %v3430
        %v3767 = vpack.c.b16 %v3447, %v3431
        %v3768 = vpack.c.b16 %v3448, %v3432
        %v3769 = vpack.c.b16 %v3449, %v3433
        %v3770 = vpack.c.b16 %v3450, %v3434
        %v3771 = vpack.c.b16 %v3451, %v3435
        %v3772 = vpack.c.b16 %v3452, %v3436
        %v3773 = vpack.c.b16 %v3453, %v3437
        %v3774 = vpack.c.b16 %v3454, %v3438
        %v3775 = vpack.c.b16 %v3455, %v3439
        %v3776 = vpack.c.b16 %v3472, %v3456
        %v3777 = vpack.c.b16 %v3473, %v3457
        %v3778 = vpack.c.b16 %v3474, %v3458
        %v3779 = vpack.c.b16 %v3475, %v3459
        %v3780 = vpack.c.b16 %v3476, %v3460
        %v3781 = vpack.c.b16 %v3477, %v3461
        %v3782 = vpack.c.b16 %v3478, %v3462
        %v3783 = vpack.c.b16 %v3479, %v3463
        %v3784 = vpack.c.b16 %v3480, %v3464
        %v3785 = vpack.c.b16 %v3481, %v3465
        %v3786 = vpack.c.b16 %v3482, %v3466
        %v3787 = vpack.c.b16 %v3483, %v3467
        %v3788 = vpack.c.b16 %v3484, %v3468
        %v3789 = vpack.c.b16 %v3485, %v3469
        %v3790 = vpack.c.b16 %v3486, %v3470
        %v3791 = vpack.c.b16 %v3487, %v3471
        %v3792 = vpack.c.b16 %v3504, %v3488
        %v3793 = vpack.c.b16 %v3505, %v3489
        %v3794 = vpack.c.b16 %v3506, %v3490
        %v3795 = vpack.c.b16 %v3507, %v3491
        %v3796 = vpack.c.b16 %v3508, %v3492
        %v3797 = vpack.c.b16 %v3509, %v3493
        %v3798 = vpack.c.b16 %v3510, %v3494
        %v3799 = vpack.c.b16 %v3511, %v3495
        %v3800 = vpack.c.b16 %v3512, %v3496
        %v3801 = vpack.c.b16 %v3513, %v3497
        %v3802 = vpack.c.b16 %v3514, %v3498
        %v3803 = vpack.c.b16 %v3515, %v3499
        %v3804 = vpack.c.b16 %v3516, %v3500
        %v3805 = vpack.c.b16 %v3517, %v3501
        %v3806 = vpack.c.b16 %v3518, %v3502
        %v3807 = vpack.c.b16 %v3519, %v3503
        %v3808 = vpack.c.b16 %v3536, %v3520
        %v3809 = vpack.c.b16 %v3537, %v3521
        %v3810 = vpack.c.b16 %v3538, %v3522
        %v3811 = vpack.c.b16 %v3539, %v3523
        %v3812 = vpack.c.b16 %v3540, %v3524
        %v3813 = vpack.c.b16 %v3541, %v3525
        %v3814 = vpack.c.b16 %v3542, %v3526
        %v3815 = vpack.c.b16 %v3543, %v3527
        %v3816 = vpack.c.b16 %v3544, %v3528
        %v3817 = vpack.c.b16 %v3545, %v3529
        %v3818 = vpack.c.b16 %v3546, %v3530
        %v3819 = vpack.c.b16 %v3547, %v3531
        %v3820 = vpack.c.b16 %v3548, %v3532
        %v3821 = vpack.c.b16 %v3549, %v3533
        %v3822 = vpack.c.b16 %v3550, %v3534
        %v3823 = vpack.c.b16 %v3551, %v3535
        %v3824 = vpack.c.b16 %v3568, %v3552
        %v3825 = vpack.c.b16 %v3569, %v3553
        %v3826 = vpack.c.b16 %v3570, %v3554
        %v3827 = vpack.c.b16 %v3571, %v3555
        %v3828 = vpack.c.b16 %v3572, %v3556
        %v3829 = vpack.c.b16 %v3573, %v3557
        %v3830 = vpack.c.b16 %v3574, %v3558
        %v3831 = vpack.c.b16 %v3575, %v3559
        %v3832 = vpack.c.b16 %v3576, %v3560
        %v3833 = vpack.c.b16 %v3577, %v3561
        %v3834 = vpack.c.b16 %v3578, %v3562
        %v3835 = vpack.c.b16 %v3579, %v3563
        %v3836 = vpack.c.b16 %v3580, %v3564
        %v3837 = vpack.c.b16 %v3581, %v3565
        %v3838 = vpack.c.b16 %v3582, %v3566
        %v3839 = vpack.c.b16 %v3583, %v3567
        %4096 = vmatpush.bf16.msra.mxu0 %v3696
        %4097 = vmatpush.bf16.msra.mxu0 %v3680
        %4098 = vmatpush.bf16.msra.mxu0 %v3664
        %4099 = vmatpush.bf16.msra.mxu0 %v3648
        %4100 = vmatpush.bf16.msra.mxu0 %v3632
        %4101 = vmatpush.bf16.msra.mxu0 %v3616
        %4102 = vmatpush.bf16.msra.mxu0 %v3600
        %4103 = vmatpush.bf16.msra.mxu0 %v3584
        %4104 = vmatmul.bf16.gmra.mxu0 %v2558
        %v4105 = vpop.f32.mrf.mxu0
        %v4106 = vadd.f32 0.0, %v4105
        %v4107 = vpop.f32.mrf.mxu0
        %v4108 = vadd.f32 0.0, %v4107
        %4109 = vdwg.mxu0
        %4110 = vmatpush.bf16.msra.mxu0 %v3824
        %4111 = vmatpush.bf16.msra.mxu0 %v3808
        %4112 = vmatpush.bf16.msra.mxu0 %v3792
        %4113 = vmatpush.bf16.msra.mxu0 %v3776
        %4114 = vmatpush.bf16.msra.mxu0 %v3760
        %4115 = vmatpush.bf16.msra.mxu0 %v3744
        %4116 = vmatpush.bf16.msra.mxu0 %v3728
        %4117 = vmatpush.bf16.msra.mxu0 %v3712
        %4118 = vmatmul.bf16.gmra.mxu0 %v2559
        %v4119 = vpop.f32.mrf.mxu0
        %v4120 = vadd.f32 %v4106, %v4119
        %v4121 = vpop.f32.mrf.mxu0
        %v4122 = vadd.f32 %v4108, %v4121
        %4123 = vdwg.mxu0
        %4124 = vmatpush.bf16.msra.mxu0 %v3697
        %4125 = vmatpush.bf16.msra.mxu0 %v3681
        %4126 = vmatpush.bf16.msra.mxu0 %v3665
        %4127 = vmatpush.bf16.msra.mxu0 %v3649
        %4128 = vmatpush.bf16.msra.mxu0 %v3633
        %4129 = vmatpush.bf16.msra.mxu0 %v3617
        %4130 = vmatpush.bf16.msra.mxu0 %v3601
        %4131 = vmatpush.bf16.msra.mxu0 %v3585
        %4132 = vmatmul.bf16.gmra.mxu0 %v2558
        %v4133 = vpop.f32.mrf.mxu0
        %v4134 = vadd.f32 0.0, %v4133
        %v4135 = vpop.f32.mrf.mxu0
        %v4136 = vadd.f32 0.0, %v4135
        %4137 = vdwg.mxu0
        %4138 = vmatpush.bf16.msra.mxu0 %v3825
        %4139 = vmatpush.bf16.msra.mxu0 %v3809
        %4140 = vmatpush.bf16.msra.mxu0 %v3793
        %4141 = vmatpush.bf16.msra.mxu0 %v3777
        %4142 = vmatpush.bf16.msra.mxu0 %v3761
        %4143 = vmatpush.bf16.msra.mxu0 %v3745
        %4144 = vmatpush.bf16.msra.mxu0 %v3729
        %4145 = vmatpush.bf16.msra.mxu0 %v3713
        %4146 = vmatmul.bf16.gmra.mxu0 %v2559
        %v4147 = vpop.f32.mrf.mxu0
        %v4148 = vadd.f32 %v4134, %v4147
        %v4149 = vpop.f32.mrf.mxu0
        %v4150 = vadd.f32 %v4136, %v4149
        %4151 = vdwg.mxu0
        %4152 = vmatpush.bf16.msra.mxu0 %v3698
        %4153 = vmatpush.bf16.msra.mxu0 %v3682
        %4154 = vmatpush.bf16.msra.mxu0 %v3666
        %4155 = vmatpush.bf16.msra.mxu0 %v3650
        %4156 = vmatpush.bf16.msra.mxu0 %v3634
        %4157 = vmatpush.bf16.msra.mxu0 %v3618
        %4158 = vmatpush.bf16.msra.mxu0 %v3602
        %4159 = vmatpush.bf16.msra.mxu0 %v3586
        %4160 = vmatmul.bf16.gmra.mxu0 %v2558
        %v4161 = vpop.f32.mrf.mxu0
        %v4162 = vadd.f32 0.0, %v4161
        %v4163 = vpop.f32.mrf.mxu0
        %v4164 = vadd.f32 0.0, %v4163
        %4165 = vdwg.mxu0
        %4166 = vmatpush.bf16.msra.mxu0 %v3826
        %4167 = vmatpush.bf16.msra.mxu0 %v3810
        %4168 = vmatpush.bf16.msra.mxu0 %v3794
        %4169 = vmatpush.bf16.msra.mxu0 %v3778
        %4170 = vmatpush.bf16.msra.mxu0 %v3762
        %4171 = vmatpush.bf16.msra.mxu0 %v3746
        %4172 = vmatpush.bf16.msra.mxu0 %v3730
        %4173 = vmatpush.bf16.msra.mxu0 %v3714
        %4174 = vmatmul.bf16.gmra.mxu0 %v2559
        %v4175 = vpop.f32.mrf.mxu0
        %v4176 = vadd.f32 %v4162, %v4175
        %v4177 = vpop.f32.mrf.mxu0
        %v4178 = vadd.f32 %v4164, %v4177
        %4179 = vdwg.mxu0
        %4180 = vmatpush.bf16.msra.mxu0 %v3699
        %4181 = vmatpush.bf16.msra.mxu0 %v3683
        %4182 = vmatpush.bf16.msra.mxu0 %v3667
        %4183 = vmatpush.bf16.msra.mxu0 %v3651
        %4184 = vmatpush.bf16.msra.mxu0 %v3635
        %4185 = vmatpush.bf16.msra.mxu0 %v3619
        %4186 = vmatpush.bf16.msra.mxu0 %v3603
        %4187 = vmatpush.bf16.msra.mxu0 %v3587
        %4188 = vmatmul.bf16.gmra.mxu0 %v2558
        %v4189 = vpop.f32.mrf.mxu0
        %v4190 = vadd.f32 0.0, %v4189
        %v4191 = vpop.f32.mrf.mxu0
        %v4192 = vadd.f32 0.0, %v4191
        %4193 = vdwg.mxu0
        %4194 = vmatpush.bf16.msra.mxu0 %v3827
        %4195 = vmatpush.bf16.msra.mxu0 %v3811
        %4196 = vmatpush.bf16.msra.mxu0 %v3795
        %4197 = vmatpush.bf16.msra.mxu0 %v3779
        %4198 = vmatpush.bf16.msra.mxu0 %v3763
        %4199 = vmatpush.bf16.msra.mxu0 %v3747
        %4200 = vmatpush.bf16.msra.mxu0 %v3731
        %4201 = vmatpush.bf16.msra.mxu0 %v3715
        %4202 = vmatmul.bf16.gmra.mxu0 %v2559
        %v4203 = vpop.f32.mrf.mxu0
        %v4204 = vadd.f32 %v4190, %v4203
        %v4205 = vpop.f32.mrf.mxu0
        %v4206 = vadd.f32 %v4192, %v4205
        %4207 = vdwg.mxu0
        %4208 = vmatpush.bf16.msra.mxu0 %v3700
        %4209 = vmatpush.bf16.msra.mxu0 %v3684
        %4210 = vmatpush.bf16.msra.mxu0 %v3668
        %4211 = vmatpush.bf16.msra.mxu0 %v3652
        %4212 = vmatpush.bf16.msra.mxu0 %v3636
        %4213 = vmatpush.bf16.msra.mxu0 %v3620
        %4214 = vmatpush.bf16.msra.mxu0 %v3604
        %4215 = vmatpush.bf16.msra.mxu0 %v3588
        %4216 = vmatmul.bf16.gmra.mxu0 %v2558
        %v4217 = vpop.f32.mrf.mxu0
        %v4218 = vadd.f32 0.0, %v4217
        %v4219 = vpop.f32.mrf.mxu0
        %v4220 = vadd.f32 0.0, %v4219
        %4221 = vdwg.mxu0
        %4222 = vmatpush.bf16.msra.mxu0 %v3828
        %4223 = vmatpush.bf16.msra.mxu0 %v3812
        %4224 = vmatpush.bf16.msra.mxu0 %v3796
        %4225 = vmatpush.bf16.msra.mxu0 %v3780
        %4226 = vmatpush.bf16.msra.mxu0 %v3764
        %4227 = vmatpush.bf16.msra.mxu0 %v3748
        %4228 = vmatpush.bf16.msra.mxu0 %v3732
        %4229 = vmatpush.bf16.msra.mxu0 %v3716
        %4230 = vmatmul.bf16.gmra.mxu0 %v2559
        %v4231 = vpop.f32.mrf.mxu0
        %v4232 = vadd.f32 %v4218, %v4231
        %v4233 = vpop.f32.mrf.mxu0
        %v4234 = vadd.f32 %v4220, %v4233
        %4235 = vdwg.mxu0
        %4236 = vmatpush.bf16.msra.mxu0 %v3701
        %4237 = vmatpush.bf16.msra.mxu0 %v3685
        %4238 = vmatpush.bf16.msra.mxu0 %v3669
        %4239 = vmatpush.bf16.msra.mxu0 %v3653
        %4240 = vmatpush.bf16.msra.mxu0 %v3637
        %4241 = vmatpush.bf16.msra.mxu0 %v3621
        %4242 = vmatpush.bf16.msra.mxu0 %v3605
        %4243 = vmatpush.bf16.msra.mxu0 %v3589
        %4244 = vmatmul.bf16.gmra.mxu0 %v2558
        %v4245 = vpop.f32.mrf.mxu0
        %v4246 = vadd.f32 0.0, %v4245
        %v4247 = vpop.f32.mrf.mxu0
        %v4248 = vadd.f32 0.0, %v4247
        %4249 = vdwg.mxu0
        %4250 = vmatpush.bf16.msra.mxu0 %v3829
        %4251 = vmatpush.bf16.msra.mxu0 %v3813
        %4252 = vmatpush.bf16.msra.mxu0 %v3797
        %4253 = vmatpush.bf16.msra.mxu0 %v3781
        %4254 = vmatpush.bf16.msra.mxu0 %v3765
        %4255 = vmatpush.bf16.msra.mxu0 %v3749
        %4256 = vmatpush.bf16.msra.mxu0 %v3733
        %4257 = vmatpush.bf16.msra.mxu0 %v3717
        %4258 = vmatmul.bf16.gmra.mxu0 %v2559
        %v4259 = vpop.f32.mrf.mxu0
        %v4260 = vadd.f32 %v4246, %v4259
        %v4261 = vpop.f32.mrf.mxu0
        %v4262 = vadd.f32 %v4248, %v4261
        %4263 = vdwg.mxu0
        %4264 = vmatpush.bf16.msra.mxu0 %v3702
        %4265 = vmatpush.bf16.msra.mxu0 %v3686
        %4266 = vmatpush.bf16.msra.mxu0 %v3670
        %4267 = vmatpush.bf16.msra.mxu0 %v3654
        %4268 = vmatpush.bf16.msra.mxu0 %v3638
        %4269 = vmatpush.bf16.msra.mxu0 %v3622
        %4270 = vmatpush.bf16.msra.mxu0 %v3606
        %4271 = vmatpush.bf16.msra.mxu0 %v3590
        %4272 = vmatmul.bf16.gmra.mxu0 %v2558
        %v4273 = vpop.f32.mrf.mxu0
        %v4274 = vadd.f32 0.0, %v4273
        %v4275 = vpop.f32.mrf.mxu0
        %v4276 = vadd.f32 0.0, %v4275
        %4277 = vdwg.mxu0
        %4278 = vmatpush.bf16.msra.mxu0 %v3830
        %4279 = vmatpush.bf16.msra.mxu0 %v3814
        %4280 = vmatpush.bf16.msra.mxu0 %v3798
        %4281 = vmatpush.bf16.msra.mxu0 %v3782
        %4282 = vmatpush.bf16.msra.mxu0 %v3766
        %4283 = vmatpush.bf16.msra.mxu0 %v3750
        %4284 = vmatpush.bf16.msra.mxu0 %v3734
        %4285 = vmatpush.bf16.msra.mxu0 %v3718
        %4286 = vmatmul.bf16.gmra.mxu0 %v2559
        %v4287 = vpop.f32.mrf.mxu0
        %v4288 = vadd.f32 %v4274, %v4287
        %v4289 = vpop.f32.mrf.mxu0
        %v4290 = vadd.f32 %v4276, %v4289
        %4291 = vdwg.mxu0
        %4292 = vmatpush.bf16.msra.mxu0 %v3703
        %4293 = vmatpush.bf16.msra.mxu0 %v3687
        %4294 = vmatpush.bf16.msra.mxu0 %v3671
        %4295 = vmatpush.bf16.msra.mxu0 %v3655
        %4296 = vmatpush.bf16.msra.mxu0 %v3639
        %4297 = vmatpush.bf16.msra.mxu0 %v3623
        %4298 = vmatpush.bf16.msra.mxu0 %v3607
        %4299 = vmatpush.bf16.msra.mxu0 %v3591
        %4300 = vmatmul.bf16.gmra.mxu0 %v2558
        %v4301 = vpop.f32.mrf.mxu0
        %v4302 = vadd.f32 0.0, %v4301
        %v4303 = vpop.f32.mrf.mxu0
        %v4304 = vadd.f32 0.0, %v4303
        %4305 = vdwg.mxu0
        %4306 = vmatpush.bf16.msra.mxu0 %v3831
        %4307 = vmatpush.bf16.msra.mxu0 %v3815
        %4308 = vmatpush.bf16.msra.mxu0 %v3799
        %4309 = vmatpush.bf16.msra.mxu0 %v3783
        %4310 = vmatpush.bf16.msra.mxu0 %v3767
        %4311 = vmatpush.bf16.msra.mxu0 %v3751
        %4312 = vmatpush.bf16.msra.mxu0 %v3735
        %4313 = vmatpush.bf16.msra.mxu0 %v3719
        %4314 = vmatmul.bf16.gmra.mxu0 %v2559
        %v4315 = vpop.f32.mrf.mxu0
        %v4316 = vadd.f32 %v4302, %v4315
        %v4317 = vpop.f32.mrf.mxu0
        %v4318 = vadd.f32 %v4304, %v4317
        %4319 = vdwg.mxu0
        %4320 = vmatpush.bf16.msra.mxu0 %v3704
        %4321 = vmatpush.bf16.msra.mxu0 %v3688
        %4322 = vmatpush.bf16.msra.mxu0 %v3672
        %4323 = vmatpush.bf16.msra.mxu0 %v3656
        %4324 = vmatpush.bf16.msra.mxu0 %v3640
        %4325 = vmatpush.bf16.msra.mxu0 %v3624
        %4326 = vmatpush.bf16.msra.mxu0 %v3608
        %4327 = vmatpush.bf16.msra.mxu0 %v3592
        %4328 = vmatmul.bf16.gmra.mxu0 %v2558
        %v4329 = vpop.f32.mrf.mxu0
        %v4330 = vadd.f32 0.0, %v4329
        %v4331 = vpop.f32.mrf.mxu0
        %v4332 = vadd.f32 0.0, %v4331
        %4333 = vdwg.mxu0
        %4334 = vmatpush.bf16.msra.mxu0 %v3832
        %4335 = vmatpush.bf16.msra.mxu0 %v3816
        %4336 = vmatpush.bf16.msra.mxu0 %v3800
        %4337 = vmatpush.bf16.msra.mxu0 %v3784
        %4338 = vmatpush.bf16.msra.mxu0 %v3768
        %4339 = vmatpush.bf16.msra.mxu0 %v3752
        %4340 = vmatpush.bf16.msra.mxu0 %v3736
        %4341 = vmatpush.bf16.msra.mxu0 %v3720
        %4342 = vmatmul.bf16.gmra.mxu0 %v2559
        %v4343 = vpop.f32.mrf.mxu0
        %v4344 = vadd.f32 %v4330, %v4343
        %v4345 = vpop.f32.mrf.mxu0
        %v4346 = vadd.f32 %v4332, %v4345
        %4347 = vdwg.mxu0
        %4348 = vmatpush.bf16.msra.mxu0 %v3705
        %4349 = vmatpush.bf16.msra.mxu0 %v3689
        %4350 = vmatpush.bf16.msra.mxu0 %v3673
        %4351 = vmatpush.bf16.msra.mxu0 %v3657
        %4352 = vmatpush.bf16.msra.mxu0 %v3641
        %4353 = vmatpush.bf16.msra.mxu0 %v3625
        %4354 = vmatpush.bf16.msra.mxu0 %v3609
        %4355 = vmatpush.bf16.msra.mxu0 %v3593
        %4356 = vmatmul.bf16.gmra.mxu0 %v2558
        %v4357 = vpop.f32.mrf.mxu0
        %v4358 = vadd.f32 0.0, %v4357
        %v4359 = vpop.f32.mrf.mxu0
        %v4360 = vadd.f32 0.0, %v4359
        %4361 = vdwg.mxu0
        %4362 = vmatpush.bf16.msra.mxu0 %v3833
        %4363 = vmatpush.bf16.msra.mxu0 %v3817
        %4364 = vmatpush.bf16.msra.mxu0 %v3801
        %4365 = vmatpush.bf16.msra.mxu0 %v3785
        %4366 = vmatpush.bf16.msra.mxu0 %v3769
        %4367 = vmatpush.bf16.msra.mxu0 %v3753
        %4368 = vmatpush.bf16.msra.mxu0 %v3737
        %4369 = vmatpush.bf16.msra.mxu0 %v3721
        %4370 = vmatmul.bf16.gmra.mxu0 %v2559
        %v4371 = vpop.f32.mrf.mxu0
        %v4372 = vadd.f32 %v4358, %v4371
        %v4373 = vpop.f32.mrf.mxu0
        %v4374 = vadd.f32 %v4360, %v4373
        %4375 = vdwg.mxu0
        %4376 = vmatpush.bf16.msra.mxu0 %v3706
        %4377 = vmatpush.bf16.msra.mxu0 %v3690
        %4378 = vmatpush.bf16.msra.mxu0 %v3674
        %4379 = vmatpush.bf16.msra.mxu0 %v3658
        %4380 = vmatpush.bf16.msra.mxu0 %v3642
        %4381 = vmatpush.bf16.msra.mxu0 %v3626
        %4382 = vmatpush.bf16.msra.mxu0 %v3610
        %4383 = vmatpush.bf16.msra.mxu0 %v3594
        %4384 = vmatmul.bf16.gmra.mxu0 %v2558
        %v4385 = vpop.f32.mrf.mxu0
        %v4386 = vadd.f32 0.0, %v4385
        %v4387 = vpop.f32.mrf.mxu0
        %v4388 = vadd.f32 0.0, %v4387
        %4389 = vdwg.mxu0
        %4390 = vmatpush.bf16.msra.mxu0 %v3834
        %4391 = vmatpush.bf16.msra.mxu0 %v3818
        %4392 = vmatpush.bf16.msra.mxu0 %v3802
        %4393 = vmatpush.bf16.msra.mxu0 %v3786
        %4394 = vmatpush.bf16.msra.mxu0 %v3770
        %4395 = vmatpush.bf16.msra.mxu0 %v3754
        %4396 = vmatpush.bf16.msra.mxu0 %v3738
        %4397 = vmatpush.bf16.msra.mxu0 %v3722
        %4398 = vmatmul.bf16.gmra.mxu0 %v2559
        %v4399 = vpop.f32.mrf.mxu0
        %v4400 = vadd.f32 %v4386, %v4399
        %v4401 = vpop.f32.mrf.mxu0
        %v4402 = vadd.f32 %v4388, %v4401
        %4403 = vdwg.mxu0
        %4404 = vmatpush.bf16.msra.mxu0 %v3707
        %4405 = vmatpush.bf16.msra.mxu0 %v3691
        %4406 = vmatpush.bf16.msra.mxu0 %v3675
        %4407 = vmatpush.bf16.msra.mxu0 %v3659
        %4408 = vmatpush.bf16.msra.mxu0 %v3643
        %4409 = vmatpush.bf16.msra.mxu0 %v3627
        %4410 = vmatpush.bf16.msra.mxu0 %v3611
        %4411 = vmatpush.bf16.msra.mxu0 %v3595
        %4412 = vmatmul.bf16.gmra.mxu0 %v2558
        %v4413 = vpop.f32.mrf.mxu0
        %v4414 = vadd.f32 0.0, %v4413
        %v4415 = vpop.f32.mrf.mxu0
        %v4416 = vadd.f32 0.0, %v4415
        %4417 = vdwg.mxu0
        %4418 = vmatpush.bf16.msra.mxu0 %v3835
        %4419 = vmatpush.bf16.msra.mxu0 %v3819
        %4420 = vmatpush.bf16.msra.mxu0 %v3803
        %4421 = vmatpush.bf16.msra.mxu0 %v3787
        %4422 = vmatpush.bf16.msra.mxu0 %v3771
        %4423 = vmatpush.bf16.msra.mxu0 %v3755
        %4424 = vmatpush.bf16.msra.mxu0 %v3739
        %4425 = vmatpush.bf16.msra.mxu0 %v3723
        %4426 = vmatmul.bf16.gmra.mxu0 %v2559
        %v4427 = vpop.f32.mrf.mxu0
        %v4428 = vadd.f32 %v4414, %v4427
        %v4429 = vpop.f32.mrf.mxu0
        %v4430 = vadd.f32 %v4416, %v4429
        %4431 = vdwg.mxu0
        %4432 = vmatpush.bf16.msra.mxu0 %v3708
        %4433 = vmatpush.bf16.msra.mxu0 %v3692
        %4434 = vmatpush.bf16.msra.mxu0 %v3676
        %4435 = vmatpush.bf16.msra.mxu0 %v3660
        %4436 = vmatpush.bf16.msra.mxu0 %v3644
        %4437 = vmatpush.bf16.msra.mxu0 %v3628
        %4438 = vmatpush.bf16.msra.mxu0 %v3612
        %4439 = vmatpush.bf16.msra.mxu0 %v3596
        %4440 = vmatmul.bf16.gmra.mxu0 %v2558
        %v4441 = vpop.f32.mrf.mxu0
        %v4442 = vadd.f32 0.0, %v4441
        %v4443 = vpop.f32.mrf.mxu0
        %v4444 = vadd.f32 0.0, %v4443
        %4445 = vdwg.mxu0
        %4446 = vmatpush.bf16.msra.mxu0 %v3836
        %4447 = vmatpush.bf16.msra.mxu0 %v3820
        %4448 = vmatpush.bf16.msra.mxu0 %v3804
        %4449 = vmatpush.bf16.msra.mxu0 %v3788
        %4450 = vmatpush.bf16.msra.mxu0 %v3772
        %4451 = vmatpush.bf16.msra.mxu0 %v3756
        %4452 = vmatpush.bf16.msra.mxu0 %v3740
        %4453 = vmatpush.bf16.msra.mxu0 %v3724
        %4454 = vmatmul.bf16.gmra.mxu0 %v2559
        %v4455 = vpop.f32.mrf.mxu0
        %v4456 = vadd.f32 %v4442, %v4455
        %v4457 = vpop.f32.mrf.mxu0
        %v4458 = vadd.f32 %v4444, %v4457
        %4459 = vdwg.mxu0
        %4460 = vmatpush.bf16.msra.mxu0 %v3709
        %4461 = vmatpush.bf16.msra.mxu0 %v3693
        %4462 = vmatpush.bf16.msra.mxu0 %v3677
        %4463 = vmatpush.bf16.msra.mxu0 %v3661
        %4464 = vmatpush.bf16.msra.mxu0 %v3645
        %4465 = vmatpush.bf16.msra.mxu0 %v3629
        %4466 = vmatpush.bf16.msra.mxu0 %v3613
        %4467 = vmatpush.bf16.msra.mxu0 %v3597
        %4468 = vmatmul.bf16.gmra.mxu0 %v2558
        %v4469 = vpop.f32.mrf.mxu0
        %v4470 = vadd.f32 0.0, %v4469
        %v4471 = vpop.f32.mrf.mxu0
        %v4472 = vadd.f32 0.0, %v4471
        %4473 = vdwg.mxu0
        %4474 = vmatpush.bf16.msra.mxu0 %v3837
        %4475 = vmatpush.bf16.msra.mxu0 %v3821
        %4476 = vmatpush.bf16.msra.mxu0 %v3805
        %4477 = vmatpush.bf16.msra.mxu0 %v3789
        %4478 = vmatpush.bf16.msra.mxu0 %v3773
        %4479 = vmatpush.bf16.msra.mxu0 %v3757
        %4480 = vmatpush.bf16.msra.mxu0 %v3741
        %4481 = vmatpush.bf16.msra.mxu0 %v3725
        %4482 = vmatmul.bf16.gmra.mxu0 %v2559
        %v4483 = vpop.f32.mrf.mxu0
        %v4484 = vadd.f32 %v4470, %v4483
        %v4485 = vpop.f32.mrf.mxu0
        %v4486 = vadd.f32 %v4472, %v4485
        %4487 = vdwg.mxu0
        %4488 = vmatpush.bf16.msra.mxu0 %v3710
        %4489 = vmatpush.bf16.msra.mxu0 %v3694
        %4490 = vmatpush.bf16.msra.mxu0 %v3678
        %4491 = vmatpush.bf16.msra.mxu0 %v3662
        %4492 = vmatpush.bf16.msra.mxu0 %v3646
        %4493 = vmatpush.bf16.msra.mxu0 %v3630
        %4494 = vmatpush.bf16.msra.mxu0 %v3614
        %4495 = vmatpush.bf16.msra.mxu0 %v3598
        %4496 = vmatmul.bf16.gmra.mxu0 %v2558
        %v4497 = vpop.f32.mrf.mxu0
        %v4498 = vadd.f32 0.0, %v4497
        %v4499 = vpop.f32.mrf.mxu0
        %v4500 = vadd.f32 0.0, %v4499
        %4501 = vdwg.mxu0
        %4502 = vmatpush.bf16.msra.mxu0 %v3838
        %4503 = vmatpush.bf16.msra.mxu0 %v3822
        %4504 = vmatpush.bf16.msra.mxu0 %v3806
        %4505 = vmatpush.bf16.msra.mxu0 %v3790
        %4506 = vmatpush.bf16.msra.mxu0 %v3774
        %4507 = vmatpush.bf16.msra.mxu0 %v3758
        %4508 = vmatpush.bf16.msra.mxu0 %v3742
        %4509 = vmatpush.bf16.msra.mxu0 %v3726
        %4510 = vmatmul.bf16.gmra.mxu0 %v2559
        %v4511 = vpop.f32.mrf.mxu0
        %v4512 = vadd.f32 %v4498, %v4511
        %v4513 = vpop.f32.mrf.mxu0
        %v4514 = vadd.f32 %v4500, %v4513
        %4515 = vdwg.mxu0
        %4516 = vmatpush.bf16.msra.mxu0 %v3711
        %4517 = vmatpush.bf16.msra.mxu0 %v3695
        %4518 = vmatpush.bf16.msra.mxu0 %v3679
        %4519 = vmatpush.bf16.msra.mxu0 %v3663
        %4520 = vmatpush.bf16.msra.mxu0 %v3647
        %4521 = vmatpush.bf16.msra.mxu0 %v3631
        %4522 = vmatpush.bf16.msra.mxu0 %v3615
        %4523 = vmatpush.bf16.msra.mxu0 %v3599
        %4524 = vmatmul.bf16.gmra.mxu0 %v2558
        %v4525 = vpop.f32.mrf.mxu0
        %v4526 = vadd.f32 0.0, %v4525
        %v4527 = vpop.f32.mrf.mxu0
        %v4528 = vadd.f32 0.0, %v4527
        %4529 = vdwg.mxu0
        %4530 = vmatpush.bf16.msra.mxu0 %v3839
        %4531 = vmatpush.bf16.msra.mxu0 %v3823
        %4532 = vmatpush.bf16.msra.mxu0 %v3807
        %4533 = vmatpush.bf16.msra.mxu0 %v3791
        %4534 = vmatpush.bf16.msra.mxu0 %v3775
        %4535 = vmatpush.bf16.msra.mxu0 %v3759
        %4536 = vmatpush.bf16.msra.mxu0 %v3743
        %4537 = vmatpush.bf16.msra.mxu0 %v3727
        %4538 = vmatmul.bf16.gmra.mxu0 %v2559
        %v4539 = vpop.f32.mrf.mxu0
        %v4540 = vadd.f32 %v4526, %v4539
        %v4541 = vpop.f32.mrf.mxu0
        %v4542 = vadd.f32 %v4528, %v4541
        %4543 = vdwg.mxu0
        %v4544 = vxor.u32 %v4120, 2147483648
        %v4545 = vxor.u32 %v4148, 2147483648
        %v4546 = vxor.u32 %v4176, 2147483648
        %v4547 = vxor.u32 %v4204, 2147483648
        %v4548 = vxor.u32 %v4232, 2147483648
        %v4549 = vxor.u32 %v4260, 2147483648
        %v4550 = vxor.u32 %v4288, 2147483648
        %v4551 = vxor.u32 %v4316, 2147483648
        %v4552 = vxor.u32 %v4122, 2147483648
        %v4553 = vxor.u32 %v4150, 2147483648
        %v4554 = vxor.u32 %v4178, 2147483648
        %v4555 = vxor.u32 %v4206, 2147483648
        %v4556 = vxor.u32 %v4234, 2147483648
        %v4557 = vxor.u32 %v4262, 2147483648
        %v4558 = vxor.u32 %v4290, 2147483648
        %v4559 = vxor.u32 %v4318, 2147483648
        %v4560 = vmul.f32 %v4544, 1.442695
        %v4561 = vpow.pop %v4560
        %v4562 = vmul.f32 %v4545, 1.442695
        %v4563 = vpow.pop %v4562
        %v4564 = vmul.f32 %v4546, 1.442695
        %v4565 = vpow.pop %v4564
        %v4566 = vmul.f32 %v4547, 1.442695
        %v4567 = vpow.pop %v4566
        %v4568 = vmul.f32 %v4548, 1.442695
        %v4569 = vpow.pop %v4568
        %v4570 = vmul.f32 %v4549, 1.442695
        %v4571 = vpow.pop %v4570
        %v4572 = vmul.f32 %v4550, 1.442695
        %v4573 = vpow.pop %v4572
        %v4574 = vmul.f32 %v4551, 1.442695
        %v4575 = vpow.pop %v4574
        %v4576 = vmul.f32 %v4552, 1.442695
        %v4577 = vpow.pop %v4576
        %v4578 = vmul.f32 %v4553, 1.442695
        %v4579 = vpow.pop %v4578
        %v4580 = vmul.f32 %v4554, 1.442695
        %v4581 = vpow.pop %v4580
        %v4582 = vmul.f32 %v4555, 1.442695
        %v4583 = vpow.pop %v4582
        %v4584 = vmul.f32 %v4556, 1.442695
        %v4585 = vpow.pop %v4584
        %v4586 = vmul.f32 %v4557, 1.442695
        %v4587 = vpow.pop %v4586
        %v4588 = vmul.f32 %v4558, 1.442695
        %v4589 = vpow.pop %v4588
        %v4590 = vmul.f32 %v4559, 1.442695
        %v4591 = vpow.pop %v4590
        %v4592 = vadd.f32 %v4561, 1.0
        %v4593 = vadd.f32 %v4563, 1.0
        %v4594 = vadd.f32 %v4565, 1.0
        %v4595 = vadd.f32 %v4567, 1.0
        %v4596 = vadd.f32 %v4569, 1.0
        %v4597 = vadd.f32 %v4571, 1.0
        %v4598 = vadd.f32 %v4573, 1.0
        %v4599 = vadd.f32 %v4575, 1.0
        %v4600 = vadd.f32 %v4577, 1.0
        %v4601 = vadd.f32 %v4579, 1.0
        %v4602 = vadd.f32 %v4581, 1.0
        %v4603 = vadd.f32 %v4583, 1.0
        %v4604 = vadd.f32 %v4585, 1.0
        %v4605 = vadd.f32 %v4587, 1.0
        %v4606 = vadd.f32 %v4589, 1.0
        %v4607 = vadd.f32 %v4591, 1.0
        %v4608 = vrcp.pop %v4592
        %v4609 = vmul.f32 %v4592, %v4608
        %v4610 = vsub.f32 1.0, %v4609
        %v4611 = vmul.f32 %v4608, %v4610
        %v4612 = vadd.f32 %v4608, %v4611
        %vm4613 = vweird.f32 %v4592
        %vm4614 = vweird.f32 %v4608
        %vm4615 = vmor %vm4613, %vm4614
        %v4616 = vsel %vm4615, %v4608, %v4612
        %v4617 = vand.u32 2147483647, %v4592
        %vm4618 = vcmp.eq.f32.partialorder %v4617, 8.507059e+37
        %v4619 = vand.u32 %v4592, 2147483648
        %v4620 = vor.u32 1.1754944e-38, %v4619
        %v4621 = vsel %vm4618, %v4620, %v4616
        %v4622 = vmul.f32 1.0, %v4621
        %v4623 = vrcp.pop %v4593
        %v4624 = vmul.f32 %v4593, %v4623
        %v4625 = vsub.f32 1.0, %v4624
        %v4626 = vmul.f32 %v4623, %v4625
        %v4627 = vadd.f32 %v4623, %v4626
        %vm4628 = vweird.f32 %v4593
        %vm4629 = vweird.f32 %v4623
        %vm4630 = vmor %vm4628, %vm4629
        %v4631 = vsel %vm4630, %v4623, %v4627
        %v4632 = vand.u32 2147483647, %v4593
        %vm4633 = vcmp.eq.f32.partialorder %v4632, 8.507059e+37
        %v4634 = vand.u32 %v4593, 2147483648
        %v4635 = vor.u32 1.1754944e-38, %v4634
        %v4636 = vsel %vm4633, %v4635, %v4631
        %v4637 = vmul.f32 1.0, %v4636
        %v4638 = vrcp.pop %v4594
        %v4639 = vmul.f32 %v4594, %v4638
        %v4640 = vsub.f32 1.0, %v4639
        %v4641 = vmul.f32 %v4638, %v4640
        %v4642 = vadd.f32 %v4638, %v4641
        %vm4643 = vweird.f32 %v4594
        %vm4644 = vweird.f32 %v4638
        %vm4645 = vmor %vm4643, %vm4644
        %v4646 = vsel %vm4645, %v4638, %v4642
        %v4647 = vand.u32 2147483647, %v4594
        %vm4648 = vcmp.eq.f32.partialorder %v4647, 8.507059e+37
        %v4649 = vand.u32 %v4594, 2147483648
        %v4650 = vor.u32 1.1754944e-38, %v4649
        %v4651 = vsel %vm4648, %v4650, %v4646
        %v4652 = vmul.f32 1.0, %v4651
        %v4653 = vrcp.pop %v4595
        %v4654 = vmul.f32 %v4595, %v4653
        %v4655 = vsub.f32 1.0, %v4654
        %v4656 = vmul.f32 %v4653, %v4655
        %v4657 = vadd.f32 %v4653, %v4656
        %vm4658 = vweird.f32 %v4595
        %vm4659 = vweird.f32 %v4653
        %vm4660 = vmor %vm4658, %vm4659
        %v4661 = vsel %vm4660, %v4653, %v4657
        %v4662 = vand.u32 2147483647, %v4595
        %vm4663 = vcmp.eq.f32.partialorder %v4662, 8.507059e+37
        %v4664 = vand.u32 %v4595, 2147483648
        %v4665 = vor.u32 1.1754944e-38, %v4664
        %v4666 = vsel %vm4663, %v4665, %v4661
        %v4667 = vmul.f32 1.0, %v4666
        %v4668 = vrcp.pop %v4596
        %v4669 = vmul.f32 %v4596, %v4668
        %v4670 = vsub.f32 1.0, %v4669
        %v4671 = vmul.f32 %v4668, %v4670
        %v4672 = vadd.f32 %v4668, %v4671
        %vm4673 = vweird.f32 %v4596
        %vm4674 = vweird.f32 %v4668
        %vm4675 = vmor %vm4673, %vm4674
        %v4676 = vsel %vm4675, %v4668, %v4672
        %v4677 = vand.u32 2147483647, %v4596
        %vm4678 = vcmp.eq.f32.partialorder %v4677, 8.507059e+37
        %v4679 = vand.u32 %v4596, 2147483648
        %v4680 = vor.u32 1.1754944e-38, %v4679
        %v4681 = vsel %vm4678, %v4680, %v4676
        %v4682 = vmul.f32 1.0, %v4681
        %v4683 = vrcp.pop %v4597
        %v4684 = vmul.f32 %v4597, %v4683
        %v4685 = vsub.f32 1.0, %v4684
        %v4686 = vmul.f32 %v4683, %v4685
        %v4687 = vadd.f32 %v4683, %v4686
        %vm4688 = vweird.f32 %v4597
        %vm4689 = vweird.f32 %v4683
        %vm4690 = vmor %vm4688, %vm4689
        %v4691 = vsel %vm4690, %v4683, %v4687
        %v4692 = vand.u32 2147483647, %v4597
        %vm4693 = vcmp.eq.f32.partialorder %v4692, 8.507059e+37
        %v4694 = vand.u32 %v4597, 2147483648
        %v4695 = vor.u32 1.1754944e-38, %v4694
        %v4696 = vsel %vm4693, %v4695, %v4691
        %v4697 = vmul.f32 1.0, %v4696
        %v4698 = vrcp.pop %v4598
        %v4699 = vmul.f32 %v4598, %v4698
        %v4700 = vsub.f32 1.0, %v4699
        %v4701 = vmul.f32 %v4698, %v4700
        %v4702 = vadd.f32 %v4698, %v4701
        %vm4703 = vweird.f32 %v4598
        %vm4704 = vweird.f32 %v4698
        %vm4705 = vmor %vm4703, %vm4704
        %v4706 = vsel %vm4705, %v4698, %v4702
        %v4707 = vand.u32 2147483647, %v4598
        %vm4708 = vcmp.eq.f32.partialorder %v4707, 8.507059e+37
        %v4709 = vand.u32 %v4598, 2147483648
        %v4710 = vor.u32 1.1754944e-38, %v4709
        %v4711 = vsel %vm4708, %v4710, %v4706
        %v4712 = vmul.f32 1.0, %v4711
        %v4713 = vrcp.pop %v4599
        %v4714 = vmul.f32 %v4599, %v4713
        %v4715 = vsub.f32 1.0, %v4714
        %v4716 = vmul.f32 %v4713, %v4715
        %v4717 = vadd.f32 %v4713, %v4716
        %vm4718 = vweird.f32 %v4599
        %vm4719 = vweird.f32 %v4713
        %vm4720 = vmor %vm4718, %vm4719
        %v4721 = vsel %vm4720, %v4713, %v4717
        %v4722 = vand.u32 2147483647, %v4599
        %vm4723 = vcmp.eq.f32.partialorder %v4722, 8.507059e+37
        %v4724 = vand.u32 %v4599, 2147483648
        %v4725 = vor.u32 1.1754944e-38, %v4724
        %v4726 = vsel %vm4723, %v4725, %v4721
        %v4727 = vmul.f32 1.0, %v4726
        %v4728 = vrcp.pop %v4600
        %v4729 = vmul.f32 %v4600, %v4728
        %v4730 = vsub.f32 1.0, %v4729
        %v4731 = vmul.f32 %v4728, %v4730
        %v4732 = vadd.f32 %v4728, %v4731
        %vm4733 = vweird.f32 %v4600
        %vm4734 = vweird.f32 %v4728
        %vm4735 = vmor %vm4733, %vm4734
        %v4736 = vsel %vm4735, %v4728, %v4732
        %v4737 = vand.u32 2147483647, %v4600
        %vm4738 = vcmp.eq.f32.partialorder %v4737, 8.507059e+37
        %v4739 = vand.u32 %v4600, 2147483648
        %v4740 = vor.u32 1.1754944e-38, %v4739
        %v4741 = vsel %vm4738, %v4740, %v4736
        %v4742 = vmul.f32 1.0, %v4741
        %v4743 = vrcp.pop %v4601
        %v4744 = vmul.f32 %v4601, %v4743
        %v4745 = vsub.f32 1.0, %v4744
        %v4746 = vmul.f32 %v4743, %v4745
        %v4747 = vadd.f32 %v4743, %v4746
        %vm4748 = vweird.f32 %v4601
        %vm4749 = vweird.f32 %v4743
        %vm4750 = vmor %vm4748, %vm4749
        %v4751 = vsel %vm4750, %v4743, %v4747
        %v4752 = vand.u32 2147483647, %v4601
        %vm4753 = vcmp.eq.f32.partialorder %v4752, 8.507059e+37
        %v4754 = vand.u32 %v4601, 2147483648
        %v4755 = vor.u32 1.1754944e-38, %v4754
        %v4756 = vsel %vm4753, %v4755, %v4751
        %v4757 = vmul.f32 1.0, %v4756
        %v4758 = vrcp.pop %v4602
        %v4759 = vmul.f32 %v4602, %v4758
        %v4760 = vsub.f32 1.0, %v4759
        %v4761 = vmul.f32 %v4758, %v4760
        %v4762 = vadd.f32 %v4758, %v4761
        %vm4763 = vweird.f32 %v4602
        %vm4764 = vweird.f32 %v4758
        %vm4765 = vmor %vm4763, %vm4764
        %v4766 = vsel %vm4765, %v4758, %v4762
        %v4767 = vand.u32 2147483647, %v4602
        %vm4768 = vcmp.eq.f32.partialorder %v4767, 8.507059e+37
        %v4769 = vand.u32 %v4602, 2147483648
        %v4770 = vor.u32 1.1754944e-38, %v4769
        %v4771 = vsel %vm4768, %v4770, %v4766
        %v4772 = vmul.f32 1.0, %v4771
        %v4773 = vrcp.pop %v4603
        %v4774 = vmul.f32 %v4603, %v4773
        %v4775 = vsub.f32 1.0, %v4774
        %v4776 = vmul.f32 %v4773, %v4775
        %v4777 = vadd.f32 %v4773, %v4776
        %vm4778 = vweird.f32 %v4603
        %vm4779 = vweird.f32 %v4773
        %vm4780 = vmor %vm4778, %vm4779
        %v4781 = vsel %vm4780, %v4773, %v4777
        %v4782 = vand.u32 2147483647, %v4603
        %vm4783 = vcmp.eq.f32.partialorder %v4782, 8.507059e+37
        %v4784 = vand.u32 %v4603, 2147483648
        %v4785 = vor.u32 1.1754944e-38, %v4784
        %v4786 = vsel %vm4783, %v4785, %v4781
        %v4787 = vmul.f32 1.0, %v4786
        %v4788 = vrcp.pop %v4604
        %v4789 = vmul.f32 %v4604, %v4788
        %v4790 = vsub.f32 1.0, %v4789
        %v4791 = vmul.f32 %v4788, %v4790
        %v4792 = vadd.f32 %v4788, %v4791
        %vm4793 = vweird.f32 %v4604
        %vm4794 = vweird.f32 %v4788
        %vm4795 = vmor %vm4793, %vm4794
        %v4796 = vsel %vm4795, %v4788, %v4792
        %v4797 = vand.u32 2147483647, %v4604
        %vm4798 = vcmp.eq.f32.partialorder %v4797, 8.507059e+37
        %v4799 = vand.u32 %v4604, 2147483648
        %v4800 = vor.u32 1.1754944e-38, %v4799
        %v4801 = vsel %vm4798, %v4800, %v4796
        %v4802 = vmul.f32 1.0, %v4801
        %v4803 = vrcp.pop %v4605
        %v4804 = vmul.f32 %v4605, %v4803
        %v4805 = vsub.f32 1.0, %v4804
        %v4806 = vmul.f32 %v4803, %v4805
        %v4807 = vadd.f32 %v4803, %v4806
        %vm4808 = vweird.f32 %v4605
        %vm4809 = vweird.f32 %v4803
        %vm4810 = vmor %vm4808, %vm4809
        %v4811 = vsel %vm4810, %v4803, %v4807
        %v4812 = vand.u32 2147483647, %v4605
        %vm4813 = vcmp.eq.f32.partialorder %v4812, 8.507059e+37
        %v4814 = vand.u32 %v4605, 2147483648
        %v4815 = vor.u32 1.1754944e-38, %v4814
        %v4816 = vsel %vm4813, %v4815, %v4811
        %v4817 = vmul.f32 1.0, %v4816
        %v4818 = vrcp.pop %v4606
        %v4819 = vmul.f32 %v4606, %v4818
        %v4820 = vsub.f32 1.0, %v4819
        %v4821 = vmul.f32 %v4818, %v4820
        %v4822 = vadd.f32 %v4818, %v4821
        %vm4823 = vweird.f32 %v4606
        %vm4824 = vweird.f32 %v4818
        %vm4825 = vmor %vm4823, %vm4824
        %v4826 = vsel %vm4825, %v4818, %v4822
        %v4827 = vand.u32 2147483647, %v4606
        %vm4828 = vcmp.eq.f32.partialorder %v4827, 8.507059e+37
        %v4829 = vand.u32 %v4606, 2147483648
        %v4830 = vor.u32 1.1754944e-38, %v4829
        %v4831 = vsel %vm4828, %v4830, %v4826
        %v4832 = vmul.f32 1.0, %v4831
        %v4833 = vrcp.pop %v4607
        %v4834 = vmul.f32 %v4607, %v4833
        %v4835 = vsub.f32 1.0, %v4834
        %v4836 = vmul.f32 %v4833, %v4835
        %v4837 = vadd.f32 %v4833, %v4836
        %vm4838 = vweird.f32 %v4607
        %vm4839 = vweird.f32 %v4833
        %vm4840 = vmor %vm4838, %vm4839
        %v4841 = vsel %vm4840, %v4833, %v4837
        %v4842 = vand.u32 2147483647, %v4607
        %vm4843 = vcmp.eq.f32.partialorder %v4842, 8.507059e+37
        %v4844 = vand.u32 %v4607, 2147483648
        %v4845 = vor.u32 1.1754944e-38, %v4844
        %v4846 = vsel %vm4843, %v4845, %v4841
        %v4847 = vmul.f32 1.0, %v4846
        %v4848 = vmul.f32 %v4120, %v4622
        %v4849 = vmul.f32 %v4148, %v4637
        %v4850 = vmul.f32 %v4176, %v4652
        %v4851 = vmul.f32 %v4204, %v4667
        %v4852 = vmul.f32 %v4232, %v4682
        %v4853 = vmul.f32 %v4260, %v4697
        %v4854 = vmul.f32 %v4288, %v4712
        %v4855 = vmul.f32 %v4316, %v4727
        %v4856 = vmul.f32 %v4122, %v4742
        %v4857 = vmul.f32 %v4150, %v4757
        %v4858 = vmul.f32 %v4178, %v4772
        %v4859 = vmul.f32 %v4206, %v4787
        %v4860 = vmul.f32 %v4234, %v4802
        %v4861 = vmul.f32 %v4262, %v4817
        %v4862 = vmul.f32 %v4290, %v4832
        %v4863 = vmul.f32 %v4318, %v4847
        %v4864 = vmul.f32 %v4848, %v4344
        %v4865 = vmul.f32 %v4849, %v4372
        %v4866 = vmul.f32 %v4850, %v4400
        %v4867 = vmul.f32 %v4851, %v4428
        %v4868 = vmul.f32 %v4852, %v4456
        %v4869 = vmul.f32 %v4853, %v4484
        %v4870 = vmul.f32 %v4854, %v4512
        %v4871 = vmul.f32 %v4855, %v4540
        %v4872 = vmul.f32 %v4856, %v4346
        %v4873 = vmul.f32 %v4857, %v4374
        %v4874 = vmul.f32 %v4858, %v4402
        %v4875 = vmul.f32 %v4859, %v4430
        %v4876 = vmul.f32 %v4860, %v4458
        %v4877 = vmul.f32 %v4861, %v4486
        %v4878 = vmul.f32 %v4862, %v4514
        %v4879 = vmul.f32 %v4863, %v4542
        %v4880 = vpack.c.bf16 %v4872, %v4864
        %v4881 = vpack.c.bf16 %v4873, %v4865
        %v4882 = vpack.c.bf16 %v4874, %v4866
        %v4883 = vpack.c.bf16 %v4875, %v4867
        %v4884 = vpack.c.bf16 %v4876, %v4868
        %v4885 = vpack.c.bf16 %v4877, %v4869
        %v4886 = vpack.c.bf16 %v4878, %v4870
        %v4887 = vpack.c.bf16 %v4879, %v4871
        %v4888 = vld [vmem:[#allocation13] sm:$0xff]
        %v4889 = vld [vmem:[#allocation13 + $0x8] sm:$0xff]
        %v4890 = vld [vmem:[#allocation13 + $0x10] sm:$0xff]
        %v4891 = vld [vmem:[#allocation13 + $0x18] sm:$0xff]
        %v4892 = vld [vmem:[#allocation13 + $0x20] sm:$0xff]
        %v4893 = vld [vmem:[#allocation13 + $0x28] sm:$0xff]
        %v4894 = vld [vmem:[#allocation13 + $0x30] sm:$0xff]
        %v4895 = vld [vmem:[#allocation13 + $0x38] sm:$0xff]
        %v4896 = vld [vmem:[#allocation13 + $0x40] sm:$0xff]
        %v4897 = vld [vmem:[#allocation13 + $0x48] sm:$0xff]
        %v4898 = vld [vmem:[#allocation13 + $0x50] sm:$0xff]
        %v4899 = vld [vmem:[#allocation13 + $0x58] sm:$0xff]
        %v4900 = vld [vmem:[#allocation13 + $0x60] sm:$0xff]
        %v4901 = vld [vmem:[#allocation13 + $0x68] sm:$0xff]
        %v4902 = vld [vmem:[#allocation13 + $0x70] sm:$0xff]
        %v4903 = vld [vmem:[#allocation13 + $0x78] sm:$0xff]
        %v4904 = vld [vmem:[#allocation13 + $0x80] sm:$0xff]
        %v4905 = vld [vmem:[#allocation13 + $0x88] sm:$0xff]
        %v4906 = vld [vmem:[#allocation13 + $0x90] sm:$0xff]
        %v4907 = vld [vmem:[#allocation13 + $0x98] sm:$0xff]
        %v4908 = vld [vmem:[#allocation13 + $0xa0] sm:$0xff]
        %v4909 = vld [vmem:[#allocation13 + $0xa8] sm:$0xff]
        %v4910 = vld [vmem:[#allocation13 + $0xb0] sm:$0xff]
        %v4911 = vld [vmem:[#allocation13 + $0xb8] sm:$0xff]
        %v4912 = vld [vmem:[#allocation13 + $0xc0] sm:$0xff]
        %v4913 = vld [vmem:[#allocation13 + $0xc8] sm:$0xff]
        %v4914 = vld [vmem:[#allocation13 + $0xd0] sm:$0xff]
        %v4915 = vld [vmem:[#allocation13 + $0xd8] sm:$0xff]
        %v4916 = vld [vmem:[#allocation13 + $0xe0] sm:$0xff]
        %v4917 = vld [vmem:[#allocation13 + $0xe8] sm:$0xff]
        %v4918 = vld [vmem:[#allocation13 + $0xf0] sm:$0xff]
        %v4919 = vld [vmem:[#allocation13 + $0xf8] sm:$0xff]
        %v4920 = vld [vmem:[#allocation13 + $0x100] sm:$0xff]
        %v4921 = vld [vmem:[#allocation13 + $0x108] sm:$0xff]
        %v4922 = vld [vmem:[#allocation13 + $0x110] sm:$0xff]
        %v4923 = vld [vmem:[#allocation13 + $0x118] sm:$0xff]
        %v4924 = vld [vmem:[#allocation13 + $0x120] sm:$0xff]
        %v4925 = vld [vmem:[#allocation13 + $0x128] sm:$0xff]
        %v4926 = vld [vmem:[#allocation13 + $0x130] sm:$0xff]
        %v4927 = vld [vmem:[#allocation13 + $0x138] sm:$0xff]
        %v4928 = vld [vmem:[#allocation13 + $0x140] sm:$0xff]
        %v4929 = vld [vmem:[#allocation13 + $0x148] sm:$0xff]
        %v4930 = vld [vmem:[#allocation13 + $0x150] sm:$0xff]
        %v4931 = vld [vmem:[#allocation13 + $0x158] sm:$0xff]
        %v4932 = vld [vmem:[#allocation13 + $0x160] sm:$0xff]
        %v4933 = vld [vmem:[#allocation13 + $0x168] sm:$0xff]
        %v4934 = vld [vmem:[#allocation13 + $0x170] sm:$0xff]
        %v4935 = vld [vmem:[#allocation13 + $0x178] sm:$0xff]
        %v4936 = vld [vmem:[#allocation13 + $0x180] sm:$0xff]
        %v4937 = vld [vmem:[#allocation13 + $0x188] sm:$0xff]
        %v4938 = vld [vmem:[#allocation13 + $0x190] sm:$0xff]
        %v4939 = vld [vmem:[#allocation13 + $0x198] sm:$0xff]
        %v4940 = vld [vmem:[#allocation13 + $0x1a0] sm:$0xff]
        %v4941 = vld [vmem:[#allocation13 + $0x1a8] sm:$0xff]
        %v4942 = vld [vmem:[#allocation13 + $0x1b0] sm:$0xff]
        %v4943 = vld [vmem:[#allocation13 + $0x1b8] sm:$0xff]
        %v4944 = vld [vmem:[#allocation13 + $0x1c0] sm:$0xff]
        %v4945 = vld [vmem:[#allocation13 + $0x1c8] sm:$0xff]
        %v4946 = vld [vmem:[#allocation13 + $0x1d0] sm:$0xff]
        %v4947 = vld [vmem:[#allocation13 + $0x1d8] sm:$0xff]
        %v4948 = vld [vmem:[#allocation13 + $0x1e0] sm:$0xff]
        %v4949 = vld [vmem:[#allocation13 + $0x1e8] sm:$0xff]
        %v4950 = vld [vmem:[#allocation13 + $0x1f0] sm:$0xff]
        %v4951 = vld [vmem:[#allocation13 + $0x1f8] sm:$0xff]
        %v4952 = vld [vmem:[#allocation13 + $0x200] sm:$0xff]
        %v4953 = vld [vmem:[#allocation13 + $0x208] sm:$0xff]
        %v4954 = vld [vmem:[#allocation13 + $0x210] sm:$0xff]
        %v4955 = vld [vmem:[#allocation13 + $0x218] sm:$0xff]
        %v4956 = vld [vmem:[#allocation13 + $0x220] sm:$0xff]
        %v4957 = vld [vmem:[#allocation13 + $0x228] sm:$0xff]
        %v4958 = vld [vmem:[#allocation13 + $0x230] sm:$0xff]
        %v4959 = vld [vmem:[#allocation13 + $0x238] sm:$0xff]
        %v4960 = vld [vmem:[#allocation13 + $0x240] sm:$0xff]
        %v4961 = vld [vmem:[#allocation13 + $0x248] sm:$0xff]
        %v4962 = vld [vmem:[#allocation13 + $0x250] sm:$0xff]
        %v4963 = vld [vmem:[#allocation13 + $0x258] sm:$0xff]
        %v4964 = vld [vmem:[#allocation13 + $0x260] sm:$0xff]
        %v4965 = vld [vmem:[#allocation13 + $0x268] sm:$0xff]
        %v4966 = vld [vmem:[#allocation13 + $0x270] sm:$0xff]
        %v4967 = vld [vmem:[#allocation13 + $0x278] sm:$0xff]
        %v4968 = vld [vmem:[#allocation13 + $0x280] sm:$0xff]
        %v4969 = vld [vmem:[#allocation13 + $0x288] sm:$0xff]
        %v4970 = vld [vmem:[#allocation13 + $0x290] sm:$0xff]
        %v4971 = vld [vmem:[#allocation13 + $0x298] sm:$0xff]
        %v4972 = vld [vmem:[#allocation13 + $0x2a0] sm:$0xff]
        %v4973 = vld [vmem:[#allocation13 + $0x2a8] sm:$0xff]
        %v4974 = vld [vmem:[#allocation13 + $0x2b0] sm:$0xff]
        %v4975 = vld [vmem:[#allocation13 + $0x2b8] sm:$0xff]
        %v4976 = vld [vmem:[#allocation13 + $0x2c0] sm:$0xff]
        %v4977 = vld [vmem:[#allocation13 + $0x2c8] sm:$0xff]
        %v4978 = vld [vmem:[#allocation13 + $0x2d0] sm:$0xff]
        %v4979 = vld [vmem:[#allocation13 + $0x2d8] sm:$0xff]
        %v4980 = vld [vmem:[#allocation13 + $0x2e0] sm:$0xff]
        %v4981 = vld [vmem:[#allocation13 + $0x2e8] sm:$0xff]
        %v4982 = vld [vmem:[#allocation13 + $0x2f0] sm:$0xff]
        %v4983 = vld [vmem:[#allocation13 + $0x2f8] sm:$0xff]
        %v4984 = vld [vmem:[#allocation13 + $0x300] sm:$0xff]
        %v4985 = vld [vmem:[#allocation13 + $0x308] sm:$0xff]
        %v4986 = vld [vmem:[#allocation13 + $0x310] sm:$0xff]
        %v4987 = vld [vmem:[#allocation13 + $0x318] sm:$0xff]
        %v4988 = vld [vmem:[#allocation13 + $0x320] sm:$0xff]
        %v4989 = vld [vmem:[#allocation13 + $0x328] sm:$0xff]
        %v4990 = vld [vmem:[#allocation13 + $0x330] sm:$0xff]
        %v4991 = vld [vmem:[#allocation13 + $0x338] sm:$0xff]
        %v4992 = vld [vmem:[#allocation13 + $0x340] sm:$0xff]
        %v4993 = vld [vmem:[#allocation13 + $0x348] sm:$0xff]
        %v4994 = vld [vmem:[#allocation13 + $0x350] sm:$0xff]
        %v4995 = vld [vmem:[#allocation13 + $0x358] sm:$0xff]
        %v4996 = vld [vmem:[#allocation13 + $0x360] sm:$0xff]
        %v4997 = vld [vmem:[#allocation13 + $0x368] sm:$0xff]
        %v4998 = vld [vmem:[#allocation13 + $0x370] sm:$0xff]
        %v4999 = vld [vmem:[#allocation13 + $0x378] sm:$0xff]
        %v5000 = vld [vmem:[#allocation13 + $0x380] sm:$0xff]
        %v5001 = vld [vmem:[#allocation13 + $0x388] sm:$0xff]
        %v5002 = vld [vmem:[#allocation13 + $0x390] sm:$0xff]
        %v5003 = vld [vmem:[#allocation13 + $0x398] sm:$0xff]
        %v5004 = vld [vmem:[#allocation13 + $0x3a0] sm:$0xff]
        %v5005 = vld [vmem:[#allocation13 + $0x3a8] sm:$0xff]
        %v5006 = vld [vmem:[#allocation13 + $0x3b0] sm:$0xff]
        %v5007 = vld [vmem:[#allocation13 + $0x3b8] sm:$0xff]
        %v5008 = vld [vmem:[#allocation13 + $0x3c0] sm:$0xff]
        %v5009 = vld [vmem:[#allocation13 + $0x3c8] sm:$0xff]
        %v5010 = vld [vmem:[#allocation13 + $0x3d0] sm:$0xff]
        %v5011 = vld [vmem:[#allocation13 + $0x3d8] sm:$0xff]
        %v5012 = vld [vmem:[#allocation13 + $0x3e0] sm:$0xff]
        %v5013 = vld [vmem:[#allocation13 + $0x3e8] sm:$0xff]
        %v5014 = vld [vmem:[#allocation13 + $0x3f0] sm:$0xff]
        %v5015 = vld [vmem:[#allocation13 + $0x3f8] sm:$0xff]
        %v5144 = vunpack.c.l.b16 %v4888
        %v5145 = vunpack.c.h.b16 %v4888
        %v5146 = vunpack.c.l.b16 %v4889
        %v5147 = vunpack.c.h.b16 %v4889
        %v5148 = vunpack.c.l.b16 %v4890
        %v5149 = vunpack.c.h.b16 %v4890
        %v5150 = vunpack.c.l.b16 %v4891
        %v5151 = vunpack.c.h.b16 %v4891
        %v5152 = vunpack.c.l.b16 %v4892
        %v5153 = vunpack.c.h.b16 %v4892
        %v5154 = vunpack.c.l.b16 %v4893
        %v5155 = vunpack.c.h.b16 %v4893
        %v5156 = vunpack.c.l.b16 %v4894
        %v5157 = vunpack.c.h.b16 %v4894
        %v5158 = vunpack.c.l.b16 %v4895
        %v5159 = vunpack.c.h.b16 %v4895
        %v5160 = vunpack.c.l.b16 %v4896
        %v5161 = vunpack.c.h.b16 %v4896
        %v5162 = vunpack.c.l.b16 %v4897
        %v5163 = vunpack.c.h.b16 %v4897
        %v5164 = vunpack.c.l.b16 %v4898
        %v5165 = vunpack.c.h.b16 %v4898
        %v5166 = vunpack.c.l.b16 %v4899
        %v5167 = vunpack.c.h.b16 %v4899
        %v5168 = vunpack.c.l.b16 %v4900
        %v5169 = vunpack.c.h.b16 %v4900
        %v5170 = vunpack.c.l.b16 %v4901
        %v5171 = vunpack.c.h.b16 %v4901
        %v5172 = vunpack.c.l.b16 %v4902
        %v5173 = vunpack.c.h.b16 %v4902
        %v5174 = vunpack.c.l.b16 %v4903
        %v5175 = vunpack.c.h.b16 %v4903
        %v5176 = vunpack.c.l.b16 %v4904
        %v5177 = vunpack.c.h.b16 %v4904
        %v5178 = vunpack.c.l.b16 %v4905
        %v5179 = vunpack.c.h.b16 %v4905
        %v5180 = vunpack.c.l.b16 %v4906
        %v5181 = vunpack.c.h.b16 %v4906
        %v5182 = vunpack.c.l.b16 %v4907
        %v5183 = vunpack.c.h.b16 %v4907
        %v5184 = vunpack.c.l.b16 %v4908
        %v5185 = vunpack.c.h.b16 %v4908
        %v5186 = vunpack.c.l.b16 %v4909
        %v5187 = vunpack.c.h.b16 %v4909
        %v5188 = vunpack.c.l.b16 %v4910
        %v5189 = vunpack.c.h.b16 %v4910
        %v5190 = vunpack.c.l.b16 %v4911
        %v5191 = vunpack.c.h.b16 %v4911
        %v5192 = vunpack.c.l.b16 %v4912
        %v5193 = vunpack.c.h.b16 %v4912
        %v5194 = vunpack.c.l.b16 %v4913
        %v5195 = vunpack.c.h.b16 %v4913
        %v5196 = vunpack.c.l.b16 %v4914
        %v5197 = vunpack.c.h.b16 %v4914
        %v5198 = vunpack.c.l.b16 %v4915
        %v5199 = vunpack.c.h.b16 %v4915
        %v5200 = vunpack.c.l.b16 %v4916
        %v5201 = vunpack.c.h.b16 %v4916
        %v5202 = vunpack.c.l.b16 %v4917
        %v5203 = vunpack.c.h.b16 %v4917
        %v5204 = vunpack.c.l.b16 %v4918
        %v5205 = vunpack.c.h.b16 %v4918
        %v5206 = vunpack.c.l.b16 %v4919
        %v5207 = vunpack.c.h.b16 %v4919
        %v5208 = vunpack.c.l.b16 %v4920
        %v5209 = vunpack.c.h.b16 %v4920
        %v5210 = vunpack.c.l.b16 %v4921
        %v5211 = vunpack.c.h.b16 %v4921
        %v5212 = vunpack.c.l.b16 %v4922
        %v5213 = vunpack.c.h.b16 %v4922
        %v5214 = vunpack.c.l.b16 %v4923
        %v5215 = vunpack.c.h.b16 %v4923
        %v5216 = vunpack.c.l.b16 %v4924
        %v5217 = vunpack.c.h.b16 %v4924
        %v5218 = vunpack.c.l.b16 %v4925
        %v5219 = vunpack.c.h.b16 %v4925
        %v5220 = vunpack.c.l.b16 %v4926
        %v5221 = vunpack.c.h.b16 %v4926
        %v5222 = vunpack.c.l.b16 %v4927
        %v5223 = vunpack.c.h.b16 %v4927
        %v5224 = vunpack.c.l.b16 %v4928
        %v5225 = vunpack.c.h.b16 %v4928
        %v5226 = vunpack.c.l.b16 %v4929
        %v5227 = vunpack.c.h.b16 %v4929
        %v5228 = vunpack.c.l.b16 %v4930
        %v5229 = vunpack.c.h.b16 %v4930
        %v5230 = vunpack.c.l.b16 %v4931
        %v5231 = vunpack.c.h.b16 %v4931
        %v5232 = vunpack.c.l.b16 %v4932
        %v5233 = vunpack.c.h.b16 %v4932
        %v5234 = vunpack.c.l.b16 %v4933
        %v5235 = vunpack.c.h.b16 %v4933
        %v5236 = vunpack.c.l.b16 %v4934
        %v5237 = vunpack.c.h.b16 %v4934
        %v5238 = vunpack.c.l.b16 %v4935
        %v5239 = vunpack.c.h.b16 %v4935
        %v5240 = vunpack.c.l.b16 %v4936
        %v5241 = vunpack.c.h.b16 %v4936
        %v5242 = vunpack.c.l.b16 %v4937
        %v5243 = vunpack.c.h.b16 %v4937
        %v5244 = vunpack.c.l.b16 %v4938
        %v5245 = vunpack.c.h.b16 %v4938
        %v5246 = vunpack.c.l.b16 %v4939
        %v5247 = vunpack.c.h.b16 %v4939
        %v5248 = vunpack.c.l.b16 %v4940
        %v5249 = vunpack.c.h.b16 %v4940
        %v5250 = vunpack.c.l.b16 %v4941
        %v5251 = vunpack.c.h.b16 %v4941
        %v5252 = vunpack.c.l.b16 %v4942
        %v5253 = vunpack.c.h.b16 %v4942
        %v5254 = vunpack.c.l.b16 %v4943
        %v5255 = vunpack.c.h.b16 %v4943
        %v5256 = vunpack.c.l.b16 %v4944
        %v5257 = vunpack.c.h.b16 %v4944
        %v5258 = vunpack.c.l.b16 %v4945
        %v5259 = vunpack.c.h.b16 %v4945
        %v5260 = vunpack.c.l.b16 %v4946
        %v5261 = vunpack.c.h.b16 %v4946
        %v5262 = vunpack.c.l.b16 %v4947
        %v5263 = vunpack.c.h.b16 %v4947
        %v5264 = vunpack.c.l.b16 %v4948
        %v5265 = vunpack.c.h.b16 %v4948
        %v5266 = vunpack.c.l.b16 %v4949
        %v5267 = vunpack.c.h.b16 %v4949
        %v5268 = vunpack.c.l.b16 %v4950
        %v5269 = vunpack.c.h.b16 %v4950
        %v5270 = vunpack.c.l.b16 %v4951
        %v5271 = vunpack.c.h.b16 %v4951
        %v5272 = vunpack.c.l.b16 %v4952
        %v5273 = vunpack.c.h.b16 %v4952
        %v5274 = vunpack.c.l.b16 %v4953
        %v5275 = vunpack.c.h.b16 %v4953
        %v5276 = vunpack.c.l.b16 %v4954
        %v5277 = vunpack.c.h.b16 %v4954
        %v5278 = vunpack.c.l.b16 %v4955
        %v5279 = vunpack.c.h.b16 %v4955
        %v5280 = vunpack.c.l.b16 %v4956
        %v5281 = vunpack.c.h.b16 %v4956
        %v5282 = vunpack.c.l.b16 %v4957
        %v5283 = vunpack.c.h.b16 %v4957
        %v5284 = vunpack.c.l.b16 %v4958
        %v5285 = vunpack.c.h.b16 %v4958
        %v5286 = vunpack.c.l.b16 %v4959
        %v5287 = vunpack.c.h.b16 %v4959
        %v5288 = vunpack.c.l.b16 %v4960
        %v5289 = vunpack.c.h.b16 %v4960
        %v5290 = vunpack.c.l.b16 %v4961
        %v5291 = vunpack.c.h.b16 %v4961
        %v5292 = vunpack.c.l.b16 %v4962
        %v5293 = vunpack.c.h.b16 %v4962
        %v5294 = vunpack.c.l.b16 %v4963
        %v5295 = vunpack.c.h.b16 %v4963
        %v5296 = vunpack.c.l.b16 %v4964
        %v5297 = vunpack.c.h.b16 %v4964
        %v5298 = vunpack.c.l.b16 %v4965
        %v5299 = vunpack.c.h.b16 %v4965
        %v5300 = vunpack.c.l.b16 %v4966
        %v5301 = vunpack.c.h.b16 %v4966
        %v5302 = vunpack.c.l.b16 %v4967
        %v5303 = vunpack.c.h.b16 %v4967
        %v5304 = vunpack.c.l.b16 %v4968
        %v5305 = vunpack.c.h.b16 %v4968
        %v5306 = vunpack.c.l.b16 %v4969
        %v5307 = vunpack.c.h.b16 %v4969
        %v5308 = vunpack.c.l.b16 %v4970
        %v5309 = vunpack.c.h.b16 %v4970
        %v5310 = vunpack.c.l.b16 %v4971
        %v5311 = vunpack.c.h.b16 %v4971
        %v5312 = vunpack.c.l.b16 %v4972
        %v5313 = vunpack.c.h.b16 %v4972
        %v5314 = vunpack.c.l.b16 %v4973
        %v5315 = vunpack.c.h.b16 %v4973
        %v5316 = vunpack.c.l.b16 %v4974
        %v5317 = vunpack.c.h.b16 %v4974
        %v5318 = vunpack.c.l.b16 %v4975
        %v5319 = vunpack.c.h.b16 %v4975
        %v5320 = vunpack.c.l.b16 %v4976
        %v5321 = vunpack.c.h.b16 %v4976
        %v5322 = vunpack.c.l.b16 %v4977
        %v5323 = vunpack.c.h.b16 %v4977
        %v5324 = vunpack.c.l.b16 %v4978
        %v5325 = vunpack.c.h.b16 %v4978
        %v5326 = vunpack.c.l.b16 %v4979
        %v5327 = vunpack.c.h.b16 %v4979
        %v5328 = vunpack.c.l.b16 %v4980
        %v5329 = vunpack.c.h.b16 %v4980
        %v5330 = vunpack.c.l.b16 %v4981
        %v5331 = vunpack.c.h.b16 %v4981
        %v5332 = vunpack.c.l.b16 %v4982
        %v5333 = vunpack.c.h.b16 %v4982
        %v5334 = vunpack.c.l.b16 %v4983
        %v5335 = vunpack.c.h.b16 %v4983
        %v5336 = vunpack.c.l.b16 %v4984
        %v5337 = vunpack.c.h.b16 %v4984
        %v5338 = vunpack.c.l.b16 %v4985
        %v5339 = vunpack.c.h.b16 %v4985
        %v5340 = vunpack.c.l.b16 %v4986
        %v5341 = vunpack.c.h.b16 %v4986
        %v5342 = vunpack.c.l.b16 %v4987
        %v5343 = vunpack.c.h.b16 %v4987
        %v5344 = vunpack.c.l.b16 %v4988
        %v5345 = vunpack.c.h.b16 %v4988
        %v5346 = vunpack.c.l.b16 %v4989
        %v5347 = vunpack.c.h.b16 %v4989
        %v5348 = vunpack.c.l.b16 %v4990
        %v5349 = vunpack.c.h.b16 %v4990
        %v5350 = vunpack.c.l.b16 %v4991
        %v5351 = vunpack.c.h.b16 %v4991
        %v5352 = vunpack.c.l.b16 %v4992
        %v5353 = vunpack.c.h.b16 %v4992
        %v5354 = vunpack.c.l.b16 %v4993
        %v5355 = vunpack.c.h.b16 %v4993
        %v5356 = vunpack.c.l.b16 %v4994
        %v5357 = vunpack.c.h.b16 %v4994
        %v5358 = vunpack.c.l.b16 %v4995
        %v5359 = vunpack.c.h.b16 %v4995
        %v5360 = vunpack.c.l.b16 %v4996
        %v5361 = vunpack.c.h.b16 %v4996
        %v5362 = vunpack.c.l.b16 %v4997
        %v5363 = vunpack.c.h.b16 %v4997
        %v5364 = vunpack.c.l.b16 %v4998
        %v5365 = vunpack.c.h.b16 %v4998
        %v5366 = vunpack.c.l.b16 %v4999
        %v5367 = vunpack.c.h.b16 %v4999
        %v5368 = vunpack.c.l.b16 %v5000
        %v5369 = vunpack.c.h.b16 %v5000
        %v5370 = vunpack.c.l.b16 %v5001
        %v5371 = vunpack.c.h.b16 %v5001
        %v5372 = vunpack.c.l.b16 %v5002
        %v5373 = vunpack.c.h.b16 %v5002
        %v5374 = vunpack.c.l.b16 %v5003
        %v5375 = vunpack.c.h.b16 %v5003
        %v5376 = vunpack.c.l.b16 %v5004
        %v5377 = vunpack.c.h.b16 %v5004
        %v5378 = vunpack.c.l.b16 %v5005
        %v5379 = vunpack.c.h.b16 %v5005
        %v5380 = vunpack.c.l.b16 %v5006
        %v5381 = vunpack.c.h.b16 %v5006
        %v5382 = vunpack.c.l.b16 %v5007
        %v5383 = vunpack.c.h.b16 %v5007
        %v5384 = vunpack.c.l.b16 %v5008
        %v5385 = vunpack.c.h.b16 %v5008
        %v5386 = vunpack.c.l.b16 %v5009
        %v5387 = vunpack.c.h.b16 %v5009
        %v5388 = vunpack.c.l.b16 %v5010
        %v5389 = vunpack.c.h.b16 %v5010
        %v5390 = vunpack.c.l.b16 %v5011
        %v5391 = vunpack.c.h.b16 %v5011
        %v5392 = vunpack.c.l.b16 %v5012
        %v5393 = vunpack.c.h.b16 %v5012
        %v5394 = vunpack.c.l.b16 %v5013
        %v5395 = vunpack.c.h.b16 %v5013
        %v5396 = vunpack.c.l.b16 %v5014
        %v5397 = vunpack.c.h.b16 %v5014
        %v5398 = vunpack.c.l.b16 %v5015
        %v5399 = vunpack.c.h.b16 %v5015
        %v5400 = vpack.c.b16 %v5146, %v5144
        %v5401 = vpack.c.b16 %v5147, %v5145
        %v5402 = vpack.c.b16 %v5150, %v5148
        %v5403 = vpack.c.b16 %v5151, %v5149
        %v5404 = vpack.c.b16 %v5154, %v5152
        %v5405 = vpack.c.b16 %v5155, %v5153
        %v5406 = vpack.c.b16 %v5158, %v5156
        %v5407 = vpack.c.b16 %v5159, %v5157
        %v5408 = vpack.c.b16 %v5162, %v5160
        %v5409 = vpack.c.b16 %v5163, %v5161
        %v5410 = vpack.c.b16 %v5166, %v5164
        %v5411 = vpack.c.b16 %v5167, %v5165
        %v5412 = vpack.c.b16 %v5170, %v5168
        %v5413 = vpack.c.b16 %v5171, %v5169
        %v5414 = vpack.c.b16 %v5174, %v5172
        %v5415 = vpack.c.b16 %v5175, %v5173
        %v5416 = vpack.c.b16 %v5178, %v5176
        %v5417 = vpack.c.b16 %v5179, %v5177
        %v5418 = vpack.c.b16 %v5182, %v5180
        %v5419 = vpack.c.b16 %v5183, %v5181
        %v5420 = vpack.c.b16 %v5186, %v5184
        %v5421 = vpack.c.b16 %v5187, %v5185
        %v5422 = vpack.c.b16 %v5190, %v5188
        %v5423 = vpack.c.b16 %v5191, %v5189
        %v5424 = vpack.c.b16 %v5194, %v5192
        %v5425 = vpack.c.b16 %v5195, %v5193
        %v5426 = vpack.c.b16 %v5198, %v5196
        %v5427 = vpack.c.b16 %v5199, %v5197
        %v5428 = vpack.c.b16 %v5202, %v5200
        %v5429 = vpack.c.b16 %v5203, %v5201
        %v5430 = vpack.c.b16 %v5206, %v5204
        %v5431 = vpack.c.b16 %v5207, %v5205
        %v5432 = vpack.c.b16 %v5210, %v5208
        %v5433 = vpack.c.b16 %v5211, %v5209
        %v5434 = vpack.c.b16 %v5214, %v5212
        %v5435 = vpack.c.b16 %v5215, %v5213
        %v5436 = vpack.c.b16 %v5218, %v5216
        %v5437 = vpack.c.b16 %v5219, %v5217
        %v5438 = vpack.c.b16 %v5222, %v5220
        %v5439 = vpack.c.b16 %v5223, %v5221
        %v5440 = vpack.c.b16 %v5226, %v5224
        %v5441 = vpack.c.b16 %v5227, %v5225
        %v5442 = vpack.c.b16 %v5230, %v5228
        %v5443 = vpack.c.b16 %v5231, %v5229
        %v5444 = vpack.c.b16 %v5234, %v5232
        %v5445 = vpack.c.b16 %v5235, %v5233
        %v5446 = vpack.c.b16 %v5238, %v5236
        %v5447 = vpack.c.b16 %v5239, %v5237
        %v5448 = vpack.c.b16 %v5242, %v5240
        %v5449 = vpack.c.b16 %v5243, %v5241
        %v5450 = vpack.c.b16 %v5246, %v5244
        %v5451 = vpack.c.b16 %v5247, %v5245
        %v5452 = vpack.c.b16 %v5250, %v5248
        %v5453 = vpack.c.b16 %v5251, %v5249
        %v5454 = vpack.c.b16 %v5254, %v5252
        %v5455 = vpack.c.b16 %v5255, %v5253
        %v5456 = vpack.c.b16 %v5258, %v5256
        %v5457 = vpack.c.b16 %v5259, %v5257
        %v5458 = vpack.c.b16 %v5262, %v5260
        %v5459 = vpack.c.b16 %v5263, %v5261
        %v5460 = vpack.c.b16 %v5266, %v5264
        %v5461 = vpack.c.b16 %v5267, %v5265
        %v5462 = vpack.c.b16 %v5270, %v5268
        %v5463 = vpack.c.b16 %v5271, %v5269
        %v5464 = vpack.c.b16 %v5274, %v5272
        %v5465 = vpack.c.b16 %v5275, %v5273
        %v5466 = vpack.c.b16 %v5278, %v5276
        %v5467 = vpack.c.b16 %v5279, %v5277
        %v5468 = vpack.c.b16 %v5282, %v5280
        %v5469 = vpack.c.b16 %v5283, %v5281
        %v5470 = vpack.c.b16 %v5286, %v5284
        %v5471 = vpack.c.b16 %v5287, %v5285
        %v5472 = vpack.c.b16 %v5290, %v5288
        %v5473 = vpack.c.b16 %v5291, %v5289
        %v5474 = vpack.c.b16 %v5294, %v5292
        %v5475 = vpack.c.b16 %v5295, %v5293
        %v5476 = vpack.c.b16 %v5298, %v5296
        %v5477 = vpack.c.b16 %v5299, %v5297
        %v5478 = vpack.c.b16 %v5302, %v5300
        %v5479 = vpack.c.b16 %v5303, %v5301
        %v5480 = vpack.c.b16 %v5306, %v5304
        %v5481 = vpack.c.b16 %v5307, %v5305
        %v5482 = vpack.c.b16 %v5310, %v5308
        %v5483 = vpack.c.b16 %v5311, %v5309
        %v5484 = vpack.c.b16 %v5314, %v5312
        %v5485 = vpack.c.b16 %v5315, %v5313
        %v5486 = vpack.c.b16 %v5318, %v5316
        %v5487 = vpack.c.b16 %v5319, %v5317
        %v5488 = vpack.c.b16 %v5322, %v5320
        %v5489 = vpack.c.b16 %v5323, %v5321
        %v5490 = vpack.c.b16 %v5326, %v5324
        %v5491 = vpack.c.b16 %v5327, %v5325
        %v5492 = vpack.c.b16 %v5330, %v5328
        %v5493 = vpack.c.b16 %v5331, %v5329
        %v5494 = vpack.c.b16 %v5334, %v5332
        %v5495 = vpack.c.b16 %v5335, %v5333
        %v5496 = vpack.c.b16 %v5338, %v5336
        %v5497 = vpack.c.b16 %v5339, %v5337
        %v5498 = vpack.c.b16 %v5342, %v5340
        %v5499 = vpack.c.b16 %v5343, %v5341
        %v5500 = vpack.c.b16 %v5346, %v5344
        %v5501 = vpack.c.b16 %v5347, %v5345
        %v5502 = vpack.c.b16 %v5350, %v5348
        %v5503 = vpack.c.b16 %v5351, %v5349
        %v5504 = vpack.c.b16 %v5354, %v5352
        %v5505 = vpack.c.b16 %v5355, %v5353
        %v5506 = vpack.c.b16 %v5358, %v5356
        %v5507 = vpack.c.b16 %v5359, %v5357
        %v5508 = vpack.c.b16 %v5362, %v5360
        %v5509 = vpack.c.b16 %v5363, %v5361
        %v5510 = vpack.c.b16 %v5366, %v5364
        %v5511 = vpack.c.b16 %v5367, %v5365
        %v5512 = vpack.c.b16 %v5370, %v5368
        %v5513 = vpack.c.b16 %v5371, %v5369
        %v5514 = vpack.c.b16 %v5374, %v5372
        %v5515 = vpack.c.b16 %v5375, %v5373
        %v5516 = vpack.c.b16 %v5378, %v5376
        %v5517 = vpack.c.b16 %v5379, %v5377
        %v5518 = vpack.c.b16 %v5382, %v5380
        %v5519 = vpack.c.b16 %v5383, %v5381
        %v5520 = vpack.c.b16 %v5386, %v5384
        %v5521 = vpack.c.b16 %v5387, %v5385
        %v5522 = vpack.c.b16 %v5390, %v5388
        %v5523 = vpack.c.b16 %v5391, %v5389
        %v5524 = vpack.c.b16 %v5394, %v5392
        %v5525 = vpack.c.b16 %v5395, %v5393
        %v5526 = vpack.c.b16 %v5398, %v5396
        %v5527 = vpack.c.b16 %v5399, %v5397
        %5656 = vmatpush.bf16.msra.mxu0 %v5414
        %5657 = vmatpush.bf16.msra.mxu0 %v5412
        %5658 = vmatpush.bf16.msra.mxu0 %v5410
        %5659 = vmatpush.bf16.msra.mxu0 %v5408
        %5660 = vmatpush.bf16.msra.mxu0 %v5406
        %5661 = vmatpush.bf16.msra.mxu0 %v5404
        %5662 = vmatpush.bf16.msra.mxu0 %v5402
        %5663 = vmatpush.bf16.msra.mxu0 %v5400
        %5664 = vmatmul.bf16.gmra.mxu0 %v4880
        %v5665 = vpop.f32.mrf.mxu0
        %v5666 = vadd.f32 0.0, %v5665
        %v5667 = vpop.f32.mrf.mxu0
        %v5668 = vadd.f32 0.0, %v5667
        %5669 = vdwg.mxu0
        %5670 = vmatpush.bf16.msra.mxu0 %v5430
        %5671 = vmatpush.bf16.msra.mxu0 %v5428
        %5672 = vmatpush.bf16.msra.mxu0 %v5426
        %5673 = vmatpush.bf16.msra.mxu0 %v5424
        %5674 = vmatpush.bf16.msra.mxu0 %v5422
        %5675 = vmatpush.bf16.msra.mxu0 %v5420
        %5676 = vmatpush.bf16.msra.mxu0 %v5418
        %5677 = vmatpush.bf16.msra.mxu0 %v5416
        %5678 = vmatmul.bf16.gmra.mxu0 %v4881
        %v5679 = vpop.f32.mrf.mxu0
        %v5680 = vadd.f32 %v5666, %v5679
        %v5681 = vpop.f32.mrf.mxu0
        %v5682 = vadd.f32 %v5668, %v5681
        %5683 = vdwg.mxu0
        %5684 = vmatpush.bf16.msra.mxu0 %v5446
        %5685 = vmatpush.bf16.msra.mxu0 %v5444
        %5686 = vmatpush.bf16.msra.mxu0 %v5442
        %5687 = vmatpush.bf16.msra.mxu0 %v5440
        %5688 = vmatpush.bf16.msra.mxu0 %v5438
        %5689 = vmatpush.bf16.msra.mxu0 %v5436
        %5690 = vmatpush.bf16.msra.mxu0 %v5434
        %5691 = vmatpush.bf16.msra.mxu0 %v5432
        %5692 = vmatmul.bf16.gmra.mxu0 %v4882
        %v5693 = vpop.f32.mrf.mxu0
        %v5694 = vadd.f32 %v5680, %v5693
        %v5695 = vpop.f32.mrf.mxu0
        %v5696 = vadd.f32 %v5682, %v5695
        %5697 = vdwg.mxu0
        %5698 = vmatpush.bf16.msra.mxu0 %v5462
        %5699 = vmatpush.bf16.msra.mxu0 %v5460
        %5700 = vmatpush.bf16.msra.mxu0 %v5458
        %5701 = vmatpush.bf16.msra.mxu0 %v5456
        %5702 = vmatpush.bf16.msra.mxu0 %v5454
        %5703 = vmatpush.bf16.msra.mxu0 %v5452
        %5704 = vmatpush.bf16.msra.mxu0 %v5450
        %5705 = vmatpush.bf16.msra.mxu0 %v5448
        %5706 = vmatmul.bf16.gmra.mxu0 %v4883
        %v5707 = vpop.f32.mrf.mxu0
        %v5708 = vadd.f32 %v5694, %v5707
        %v5709 = vpop.f32.mrf.mxu0
        %v5710 = vadd.f32 %v5696, %v5709
        %5711 = vdwg.mxu0
        %5712 = vmatpush.bf16.msra.mxu0 %v5478
        %5713 = vmatpush.bf16.msra.mxu0 %v5476
        %5714 = vmatpush.bf16.msra.mxu0 %v5474
        %5715 = vmatpush.bf16.msra.mxu0 %v5472
        %5716 = vmatpush.bf16.msra.mxu0 %v5470
        %5717 = vmatpush.bf16.msra.mxu0 %v5468
        %5718 = vmatpush.bf16.msra.mxu0 %v5466
        %5719 = vmatpush.bf16.msra.mxu0 %v5464
        %5720 = vmatmul.bf16.gmra.mxu0 %v4884
        %v5721 = vpop.f32.mrf.mxu0
        %v5722 = vadd.f32 %v5708, %v5721
        %v5723 = vpop.f32.mrf.mxu0
        %v5724 = vadd.f32 %v5710, %v5723
        %5725 = vdwg.mxu0
        %5726 = vmatpush.bf16.msra.mxu0 %v5494
        %5727 = vmatpush.bf16.msra.mxu0 %v5492
        %5728 = vmatpush.bf16.msra.mxu0 %v5490
        %5729 = vmatpush.bf16.msra.mxu0 %v5488
        %5730 = vmatpush.bf16.msra.mxu0 %v5486
        %5731 = vmatpush.bf16.msra.mxu0 %v5484
        %5732 = vmatpush.bf16.msra.mxu0 %v5482
        %5733 = vmatpush.bf16.msra.mxu0 %v5480
        %5734 = vmatmul.bf16.gmra.mxu0 %v4885
        %v5735 = vpop.f32.mrf.mxu0
        %v5736 = vadd.f32 %v5722, %v5735
        %v5737 = vpop.f32.mrf.mxu0
        %v5738 = vadd.f32 %v5724, %v5737
        %5739 = vdwg.mxu0
        %5740 = vmatpush.bf16.msra.mxu0 %v5510
        %5741 = vmatpush.bf16.msra.mxu0 %v5508
        %5742 = vmatpush.bf16.msra.mxu0 %v5506
        %5743 = vmatpush.bf16.msra.mxu0 %v5504
        %5744 = vmatpush.bf16.msra.mxu0 %v5502
        %5745 = vmatpush.bf16.msra.mxu0 %v5500
        %5746 = vmatpush.bf16.msra.mxu0 %v5498
        %5747 = vmatpush.bf16.msra.mxu0 %v5496
        %5748 = vmatmul.bf16.gmra.mxu0 %v4886
        %v5749 = vpop.f32.mrf.mxu0
        %v5750 = vadd.f32 %v5736, %v5749
        %v5751 = vpop.f32.mrf.mxu0
        %v5752 = vadd.f32 %v5738, %v5751
        %5753 = vdwg.mxu0
        %5754 = vmatpush.bf16.msra.mxu0 %v5526
        %5755 = vmatpush.bf16.msra.mxu0 %v5524
        %5756 = vmatpush.bf16.msra.mxu0 %v5522
        %5757 = vmatpush.bf16.msra.mxu0 %v5520
        %5758 = vmatpush.bf16.msra.mxu0 %v5518
        %5759 = vmatpush.bf16.msra.mxu0 %v5516
        %5760 = vmatpush.bf16.msra.mxu0 %v5514
        %5761 = vmatpush.bf16.msra.mxu0 %v5512
        %5762 = vmatmul.bf16.gmra.mxu0 %v4887
        %v5763 = vpop.f32.mrf.mxu0
        %v5764 = vadd.f32 %v5750, %v5763
        %v5765 = vpop.f32.mrf.mxu0
        %v5766 = vadd.f32 %v5752, %v5765
        %5767 = vdwg.mxu0
        %5768 = vmatpush.bf16.msra.mxu0 %v5415
        %5769 = vmatpush.bf16.msra.mxu0 %v5413
        %5770 = vmatpush.bf16.msra.mxu0 %v5411
        %5771 = vmatpush.bf16.msra.mxu0 %v5409
        %5772 = vmatpush.bf16.msra.mxu0 %v5407
        %5773 = vmatpush.bf16.msra.mxu0 %v5405
        %5774 = vmatpush.bf16.msra.mxu0 %v5403
        %5775 = vmatpush.bf16.msra.mxu0 %v5401
        %5776 = vmatmul.bf16.gmra.mxu0 %v4880
        %v5777 = vpop.f32.mrf.mxu0
        %v5778 = vadd.f32 0.0, %v5777
        %v5779 = vpop.f32.mrf.mxu0
        %v5780 = vadd.f32 0.0, %v5779
        %5781 = vdwg.mxu0
        %5782 = vmatpush.bf16.msra.mxu0 %v5431
        %5783 = vmatpush.bf16.msra.mxu0 %v5429
        %5784 = vmatpush.bf16.msra.mxu0 %v5427
        %5785 = vmatpush.bf16.msra.mxu0 %v5425
        %5786 = vmatpush.bf16.msra.mxu0 %v5423
        %5787 = vmatpush.bf16.msra.mxu0 %v5421
        %5788 = vmatpush.bf16.msra.mxu0 %v5419
        %5789 = vmatpush.bf16.msra.mxu0 %v5417
        %5790 = vmatmul.bf16.gmra.mxu0 %v4881
        %v5791 = vpop.f32.mrf.mxu0
        %v5792 = vadd.f32 %v5778, %v5791
        %v5793 = vpop.f32.mrf.mxu0
        %v5794 = vadd.f32 %v5780, %v5793
        %5795 = vdwg.mxu0
        %5796 = vmatpush.bf16.msra.mxu0 %v5447
        %5797 = vmatpush.bf16.msra.mxu0 %v5445
        %5798 = vmatpush.bf16.msra.mxu0 %v5443
        %5799 = vmatpush.bf16.msra.mxu0 %v5441
        %5800 = vmatpush.bf16.msra.mxu0 %v5439
        %5801 = vmatpush.bf16.msra.mxu0 %v5437
        %5802 = vmatpush.bf16.msra.mxu0 %v5435
        %5803 = vmatpush.bf16.msra.mxu0 %v5433
        %5804 = vmatmul.bf16.gmra.mxu0 %v4882
        %v5805 = vpop.f32.mrf.mxu0
        %v5806 = vadd.f32 %v5792, %v5805
        %v5807 = vpop.f32.mrf.mxu0
        %v5808 = vadd.f32 %v5794, %v5807
        %5809 = vdwg.mxu0
        %5810 = vmatpush.bf16.msra.mxu0 %v5463
        %5811 = vmatpush.bf16.msra.mxu0 %v5461
        %5812 = vmatpush.bf16.msra.mxu0 %v5459
        %5813 = vmatpush.bf16.msra.mxu0 %v5457
        %5814 = vmatpush.bf16.msra.mxu0 %v5455
        %5815 = vmatpush.bf16.msra.mxu0 %v5453
        %5816 = vmatpush.bf16.msra.mxu0 %v5451
        %5817 = vmatpush.bf16.msra.mxu0 %v5449
        %5818 = vmatmul.bf16.gmra.mxu0 %v4883
        %v5819 = vpop.f32.mrf.mxu0
        %v5820 = vadd.f32 %v5806, %v5819
        %v5821 = vpop.f32.mrf.mxu0
        %v5822 = vadd.f32 %v5808, %v5821
        %5823 = vdwg.mxu0
        %5824 = vmatpush.bf16.msra.mxu0 %v5479
        %5825 = vmatpush.bf16.msra.mxu0 %v5477
        %5826 = vmatpush.bf16.msra.mxu0 %v5475
        %5827 = vmatpush.bf16.msra.mxu0 %v5473
        %5828 = vmatpush.bf16.msra.mxu0 %v5471
        %5829 = vmatpush.bf16.msra.mxu0 %v5469
        %5830 = vmatpush.bf16.msra.mxu0 %v5467
        %5831 = vmatpush.bf16.msra.mxu0 %v5465
        %5832 = vmatmul.bf16.gmra.mxu0 %v4884
        %v5833 = vpop.f32.mrf.mxu0
        %v5834 = vadd.f32 %v5820, %v5833
        %v5835 = vpop.f32.mrf.mxu0
        %v5836 = vadd.f32 %v5822, %v5835
        %5837 = vdwg.mxu0
        %5838 = vmatpush.bf16.msra.mxu0 %v5495
        %5839 = vmatpush.bf16.msra.mxu0 %v5493
        %5840 = vmatpush.bf16.msra.mxu0 %v5491
        %5841 = vmatpush.bf16.msra.mxu0 %v5489
        %5842 = vmatpush.bf16.msra.mxu0 %v5487
        %5843 = vmatpush.bf16.msra.mxu0 %v5485
        %5844 = vmatpush.bf16.msra.mxu0 %v5483
        %5845 = vmatpush.bf16.msra.mxu0 %v5481
        %5846 = vmatmul.bf16.gmra.mxu0 %v4885
        %v5847 = vpop.f32.mrf.mxu0
        %v5848 = vadd.f32 %v5834, %v5847
        %v5849 = vpop.f32.mrf.mxu0
        %v5850 = vadd.f32 %v5836, %v5849
        %5851 = vdwg.mxu0
        %5852 = vmatpush.bf16.msra.mxu0 %v5511
        %5853 = vmatpush.bf16.msra.mxu0 %v5509
        %5854 = vmatpush.bf16.msra.mxu0 %v5507
        %5855 = vmatpush.bf16.msra.mxu0 %v5505
        %5856 = vmatpush.bf16.msra.mxu0 %v5503
        %5857 = vmatpush.bf16.msra.mxu0 %v5501
        %5858 = vmatpush.bf16.msra.mxu0 %v5499
        %5859 = vmatpush.bf16.msra.mxu0 %v5497
        %5860 = vmatmul.bf16.gmra.mxu0 %v4886
        %v5861 = vpop.f32.mrf.mxu0
        %v5862 = vadd.f32 %v5848, %v5861
        %v5863 = vpop.f32.mrf.mxu0
        %v5864 = vadd.f32 %v5850, %v5863
        %5865 = vdwg.mxu0
        %5866 = vmatpush.bf16.msra.mxu0 %v5527
        %5867 = vmatpush.bf16.msra.mxu0 %v5525
        %5868 = vmatpush.bf16.msra.mxu0 %v5523
        %5869 = vmatpush.bf16.msra.mxu0 %v5521
        %5870 = vmatpush.bf16.msra.mxu0 %v5519
        %5871 = vmatpush.bf16.msra.mxu0 %v5517
        %5872 = vmatpush.bf16.msra.mxu0 %v5515
        %5873 = vmatpush.bf16.msra.mxu0 %v5513
        %5874 = vmatmul.bf16.gmra.mxu0 %v4887
        %v5875 = vpop.f32.mrf.mxu0
        %v5876 = vadd.f32 %v5862, %v5875
        %v5877 = vpop.f32.mrf.mxu0
        %v5878 = vadd.f32 %v5864, %v5877
        %5879 = vdwg.mxu0
        %v5880 = vadd.f32 %v2516, %v5764
        %v5881 = vadd.f32 %v2517, %v5876
        %v5882 = vadd.f32 %v2518, %v5766
        %v5883 = vadd.f32 %v2519, %v5878
        %5884 = vst [vmem:[%s398] sm:$0xff] %v5880
        %5885 = vst [vmem:[%s398 + $0x8] sm:$0xff] %v5881
        %5886 = vst [vmem:[%s398 + $0x10] sm:$0xff] %v5882
        %5887 = vst [vmem:[%s398 + $0x18] sm:$0xff] %v5883
        %s5888 = sand.u32 %s187, 1
        %s5889 = scalar_lea.sflag [#allocation4], %s5888
        %s5890 = sand.u32 %s187, 1
        %s5891 = smul.addr %s5890, 32
        %s5892 = scalar_lea.vmem [#allocation14], %s5891
        // Predicated region
        $region77: #{tpu_custom_call.1} parent=47 // pred_check
          %p5893 = pneg %p197
        $region78: #{tpu_custom_call.1} parent=47 // pred_check_branch
          %5895 = sbr.rel (%p5893) target = $region80
        $region79: #{tpu_custom_call.1} parent=47 // pred_region
          %s5896 = smul.u32 2, %s27
          %5898 = vsyncadd %s5889, 0
          %s5899 = smul.addr %s5896, 2
          %s5900 = smul.addr %s5899, 8
          %s5901 = scalar_lea.hbm %s7, %s5900
          %s5902 = sshll.u32 %s5892, 4
          %s5903 = int_to_ptr.vmem [resolvable:$true] %s5902
          %s5904 = sshll.u32 %s5901, 4
          %s5905 = int_to_ptr.hbm [resolvable:$true] %s5904
          %5910 = dma.vmem_to_hbm [thread:$0]  %s5903, 512, %s5905, %s5889, 256, 256, 16
        $region80: #{tpu_custom_call.1} parent=47 // pred_fallthru
          _
      $region48: #{tpu_custom_call.1} parent=5 // pred_fallthru
        _
      %p5911 = scmp.le.s32.totalorder 2, %s22
      // Predicated region
      $region81: #{tpu_custom_call.1} parent=5 // pred_check
        %p5912 = pneg %p5911
      $region82: #{tpu_custom_call.1} parent=5 // pred_check_branch
        %5914 = sbr.rel (%p5912) target = $region84
      $region83: #{tpu_custom_call.1} parent=5 // pred_region
        %s5915 = ssub.s32 %s22, 2
        // Predicated region
        $region85: #{tpu_custom_call.1} parent=83 // pred_check
          %p5916 = pneg %p203
        $region86: #{tpu_custom_call.1} parent=83 // pred_check_branch
          %5918 = sbr.rel (%p5916) target = $region88
        $region87: #{tpu_custom_call.1} parent=83 // pred_region
          %s5919 = sand.u32 %s188, 1
          %s5920 = scalar_lea.sflag [#allocation4], %s5919
          %s5921 = sand.u32 %s188, 1
          %s5922 = smul.addr %s5921, 32
          %s5923 = scalar_lea.vmem [#allocation14], %s5922
          %5925 = dma.done %s5920, 512
        $region88: #{tpu_custom_call.1} parent=83 // pred_fallthru
          _
      $region84: #{tpu_custom_call.1} parent=5 // pred_fallthru
        _
    $region6: #{tpu_custom_call.1} parent=1 // loop_footer
      %s26 = sadd.s32 1, %s22
    $region7: #{tpu_custom_call.1} parent=1 // loop_footer_branch
      %21 = sbr.rel target = $region3
    $region8: #{tpu_custom_call.1} parent=1 // loop_exit
      _
    %5926 = vsyncpa [#allocation3], 1
    %s5927 = scalar_lea.sflag [#allocation3], 1
    %5928 = vsyncpa %s5927, 1
    %5929 = vsyncpa [#allocation6], 1
    %5930 = vsyncpa [#allocation9], 1
    %5931 = vsyncpa [#allocation12], 1
    %5932 = vsyncpa [#allocation4], 1
    %s5933 = scalar_lea.sflag [#allocation4], 1
    %5934 = vsyncpa %s5933, 1

</llo_original>
